<compile_context>
chip_gen: v7x
topology: tpu7x:2x2x1
jax: 0.10.0
libtpu: 0.0.40
codegen_flags: <defaults>
</compile_context>

<pallas_src>
import functools

import jax
import jax.numpy as jnp
from jax.experimental import pallas as pl
from jax.experimental.pallas import tpu as pltpu

T2 = 784          # 28 * 28 flattened image (kept exact: 8-sublane / full-dim aligned)
HIDDEN = 400
Z_DIM = 20

HID_PAD = 512     # 400 -> 512 (4 * 128 lanes)
ML_W = 128        # fused mu||logvar head width (mu lanes [0,20), logvar lanes [64,84))
LV_OFF = 64       # lane offset of logvar inside the fused head
Z_PAD = 64        # z / eps lane width (lanes [20,64) are exact zeros)


def _round_up(n, m):
    return ((n + m - 1) // m) * m


def _vmem_budget_bytes():
    """~3/4 of this generation's physical VMEM; conservative (v7x-safe) fallback."""
    try:
        return (int(pltpu.get_tpu_info().vmem_capacity_bytes) * 3) // 4
    except Exception:
        return 48 << 20


def _pick_batch_tile(batch, vmem_budget):
    """Generation-aware batch tile.

    ~32 KiB/row of VMEM (double-buffered x/eps/recon/ml + f32 intermediates),
    ~8 MiB reserved for the resident weights + slack.  Cap 1024 on 64 MiB parts
    (v7x), 2048 on 128 MiB parts (v5e/v6e).  For B >= 512 force >= 2 grid steps
    (dual-TC sharding on v7x) while keeping per-step M >= 256 to fill the MXU.
    """
    per_row = 32 << 10
    resident = 8 << 20
    tb_vmem = max(256, ((vmem_budget - resident) // per_row) // 256 * 256)
    tb_cap = min(2048 if vmem_budget > (56 << 20) else 1024, tb_vmem)
    if batch <= tb_cap:
        if batch >= 512:
            return _round_up(-(-batch // 2), 8)     # 2 steps, each >= 256 rows
        return _round_up(max(batch, 1), 8)          # single step; no wasted rows
    steps = -(-batch // tb_cap)
    return max(256, _round_up(-(-batch // steps), 8))


def _vae_fwd_kernel(x_ref, eps_ref,
                    w1_ref, b1_ref, w2_ref, b2_ref,
                    w3_ref, b3_ref, w4_ref, b4_ref,
                    recon_ref, ml_ref):
    """One (TILE_B, .) batch tile of the full VAE forward. Weights stay VMEM-resident."""
    cdt = w1_ref.dtype  # MXU operand dtype (bf16 fast path, or f32 exact path)

    # ---- encode: fc1 + ReLU (K = 784 exactly, no pad) ----
    x = x_ref[...].astype(cdt)                                       # (TB, 784)
    h1 = jnp.dot(x, w1_ref[...], preferred_element_type=jnp.float32) + b1_ref[...]
    h1 = jnp.maximum(h1, 0.0)                                        # (TB, 512) f32

    # ---- fused mu / logvar head: one (512, 128) matmul ----
    ml = jnp.dot(h1.astype(cdt), w2_ref[...],
                 preferred_element_type=jnp.float32) + b2_ref[...]   # (TB, 128)
    mu_h = ml[:, :LV_OFF]          # lanes [0,20) real mu, [20,64) exact zeros
    lv_h = ml[:, LV_OFF:]          # lanes [0,20) real logvar, rest exact zeros

    # ---- reparameterize (padded lanes: 0 + 0 * exp(0) = 0) ----
    z = mu_h + eps_ref[...] * jnp.exp(0.5 * lv_h)                    # (TB, 64) f32

    # ---- decode: fc3 + ReLU, fc4 + sigmoid (N = 784 exactly, no pad) ----
    h3 = jnp.dot(z.astype(cdt), w3_ref[...],
                 preferred_element_type=jnp.float32) + b3_ref[...]
    h3 = jnp.maximum(h3, 0.0)                                        # (TB, 512) f32
    logits = jnp.dot(h3.astype(cdt), w4_ref[...],
                     preferred_element_type=jnp.float32) + b4_ref[...]  # (TB, 784)

    recon_ref[...] = jax.nn.sigmoid(logits).astype(recon_ref.dtype)
    ml_ref[...] = ml


@functools.partial(jax.jit, static_argnames=("recon_dtype",))
def vae_forward(x_nchw, kparams, eps, recon_dtype=jnp.float32):
    """Run the VAE forward pass.

    x_nchw:      (B, 1, 28, 28) float32 (NCHW, like the PyTorch module's input)
    kparams:     padded/fused kernel params from prepare_kernel_params()
    eps:         (B, Z_DIM) float32 standard-normal noise for reparameterization
    recon_dtype: dtype of the reconstruction output (jnp.bfloat16 halves output
                 HBM traffic if the downstream loss tolerates it)
    """
    B = x_nchw.shape[0]
    w1, b1 = kparams["w1"], kparams["b1"]
    w2, b2 = kparams["w2"], kparams["b2"]
    w3, b3 = kparams["w3"], kparams["b3"]
    w4, b4 = kparams["w4"], kparams["b4"]

    # input dtype follows the compute dtype (bf16 path halves x's HBM bytes)
    io_dtype = jnp.bfloat16 if w1.dtype == jnp.bfloat16 else jnp.float32
    x_flat = x_nchw.reshape(B, T2).astype(io_dtype)                  # x.view(-1, T2)

    vmem_budget = _vmem_budget_bytes()
    tb = _pick_batch_tile(B, vmem_budget)
    b_pad = _round_up(B, tb)

    if b_pad != B:
        x_flat = jnp.pad(x_flat, ((0, b_pad - B), (0, 0)))
    eps_p = jnp.zeros((b_pad, Z_PAD), jnp.float32)
    eps_p = eps_p.at[:B, :Z_DIM].set(eps.astype(jnp.float32))

    def tiled(width):                       # batch-tiled activation / output
        return pl.BlockSpec((tb, width), lambda i: (i, 0))

    # weights/biases: whole array copied to VMEM once, resident for the full grid
    resident = pl.BlockSpec(memory_space=pltpu.MemorySpace.VMEM)

    # advisory cost estimate
    wbytes = sum(int(a.size) * a.dtype.itemsize for a in (w1, b1, w2, b2, w3, b3, w4, b4))
    flops = 2 * b_pad * (T2 * HID_PAD + HID_PAD * ML_W + Z_PAD * HID_PAD + HID_PAD * T2)
    transcendentals = b_pad * (Z_PAD + T2)               # exp + sigmoid
    bytes_accessed = int(
        wbytes
        + b_pad * T2 * x_flat.dtype.itemsize             # x in
        + eps_p.size * 4                                 # eps in
        + b_pad * T2 * jnp.dtype(recon_dtype).itemsize   # recon out
        + b_pad * ML_W * 4)                              # mu||logvar out

    recon_p, ml_p = pl.pallas_call(
        _vae_fwd_kernel,
        out_shape=(jax.ShapeDtypeStruct((b_pad, T2), recon_dtype),
                   jax.ShapeDtypeStruct((b_pad, ML_W), jnp.float32)),
        grid_spec=pltpu.PrefetchScalarGridSpec(
            num_scalar_prefetch=0,
            grid=(b_pad // tb,),
            in_specs=[
                tiled(T2),                  # x
                tiled(Z_PAD),               # eps
                resident, resident,         # w1, b1
                resident, resident,         # w2, b2
                resident, resident,         # w3, b3
                resident, resident,         # w4, b4
            ],
            out_specs=(tiled(T2), tiled(ML_W)),
        ),
        compiler_params=pltpu.CompilerParams(
            dimension_semantics=("parallel",),            # batch tiles are independent
            vmem_limit_bytes=int(vmem_budget),            # generation-aware cap
        ),
        cost_estimate=pl.CostEstimate(
            flops=flops, transcendentals=transcendentals, bytes_accessed=bytes_accessed),
    )(x_flat, eps_p, w1, b1, w2, b2, w3, b3, w4, b4)

    recon = recon_p if b_pad == B else recon_p[:B]
    mu = ml_p[:B, :Z_DIM]
    logvar = ml_p[:B, LV_OFF:LV_OFF + Z_DIM]
    return recon, mu, logvar


def init_params(key):
    """PyTorch nn.Linear-style init U(-1/sqrt(fan_in), +), stored as (in, out)."""

    def linear(k, fan_in, fan_out):
        kw, kb = jax.random.split(k)
        bound = 1.0 / jnp.sqrt(jnp.float32(fan_in))
        w = jax.random.uniform(kw, (fan_in, fan_out), jnp.float32, -bound, bound)
        b = jax.random.uniform(kb, (1, fan_out), jnp.float32, -bound, bound)
        return w, b

    k1, k21, k22, k3, k4 = jax.random.split(key, 5)
    w1, b1 = linear(k1, T2, HIDDEN)
    w21, b21 = linear(k21, HIDDEN, Z_DIM)
    w22, b22 = linear(k22, HIDDEN, Z_DIM)
    w3, b3 = linear(k3, Z_DIM, HIDDEN)
    w4, b4 = linear(k4, HIDDEN, T2)
    return {"w1": w1, "b1": b1, "w21": w21, "b21": b21, "w22": w22, "b22": b22,
            "w3": w3, "b3": b3, "w4": w4, "b4": b4}


def prepare_kernel_params(params, compute_dtype=jnp.bfloat16):
    """Pad hidden dim to 512, fuse mu/logvar into one 128-wide head, cast weights.

    Weights -> compute_dtype (bf16 fast path); biases stay f32 (added after the
    f32-accumulated matmuls).  All padding is exactly zero so padded lanes
    contribute nothing anywhere in the network.  fc1's K (784) and fc4's N (784)
    are kept exact -> no wrapper-side pad/slice of x / recon.
    """

    def embed(a, shape):
        out = jnp.zeros(shape, jnp.float32)
        return out.at[:a.shape[0], :a.shape[1]].set(a)

    w1 = embed(params["w1"], (T2, HID_PAD)).astype(compute_dtype)
    b1 = embed(params["b1"], (1, HID_PAD))

    w2 = jnp.zeros((HID_PAD, ML_W), jnp.float32)
    w2 = w2.at[:HIDDEN, :Z_DIM].set(params["w21"])
    w2 = w2.at[:HIDDEN, LV_OFF:LV_OFF + Z_DIM].set(params["w22"])
    w2 = w2.astype(compute_dtype)
    b2 = jnp.zeros((1, ML_W), jnp.float32)
    b2 = b2.at[:, :Z_DIM].set(params["b21"])
    b2 = b2.at[:, LV_OFF:LV_OFF + Z_DIM].set(params["b22"])

    w3 = embed(params["w3"], (Z_PAD, HID_PAD)).astype(compute_dtype)
    b3 = embed(params["b3"], (1, HID_PAD))
    w4 = embed(params["w4"], (HID_PAD, T2)).astype(compute_dtype)
    b4 = params["b4"].astype(jnp.float32)          # already (1, 784)

    return {"w1": w1, "b1": b1, "w2": w2, "b2": b2,
            "w3": w3, "b3": b3, "w4": w4, "b4": b4}


def _reference_forward(x_nchw, params, eps):
    """Pure-JAX reference (unpadded, original weights, HIGHEST precision matmuls)."""
    x = x_nchw.reshape(x_nchw.shape[0], T2).astype(jnp.float32)
    dot = lambda a, w: jnp.dot(a, w, precision=jax.lax.Precision.HIGHEST)
    h1 = jnp.maximum(dot(x, params["w1"]) + params["b1"], 0.0)
    mu = dot(h1, params["w21"]) + params["b21"]
    logvar = dot(h1, params["w22"]) + params["b22"]
    z = mu + eps * jnp.exp(0.5 * logvar)
    h3 = jnp.maximum(dot(z, params["w3"]) + params["b3"], 0.0)
    recon = jax.nn.sigmoid(dot(h3, params["w4"]) + params["b4"])
    return recon, mu, logvar


if __name__ == "__main__":
    key = jax.random.PRNGKey(0)
    k_params, k_x, k_eps = jax.random.split(key, 3)

    B = 8  # small demo batch
    params = init_params(k_params)
    x = jax.random.uniform(k_x, (B, 1, 28, 28), jnp.float32)        # NCHW "image" input
    # reparameterization noise (torch.randn_like(std)); passed in for determinism
    eps = jax.random.normal(k_eps, (B, Z_DIM), jnp.float32)

    r_ref, mu_ref, lv_ref = _reference_forward(x, params, eps)

    # --- 1) f32 exact path: strict check against the pure-JAX reference ---
    kparams_f32 = prepare_kernel_params(params, jnp.float32)
    recon, mu, logvar = vae_forward(x, kparams_f32, eps)
    jax.block_until_ready((recon, mu, logvar))
    assert recon.shape == (B, T2) and mu.shape == (B, Z_DIM) and logvar.shape == (B, Z_DIM)
    assert jnp.allclose(recon, r_ref, atol=1e-4, rtol=1e-4), "recon mismatch (f32)"
    assert jnp.allclose(mu, mu_ref, atol=1e-4, rtol=1e-4), "mu mismatch (f32)"
    assert jnp.allclose(logvar, lv_ref, atol=1e-4, rtol=1e-4), "logvar mismatch (f32)"

    # --- 2) bf16 MXU fast path (bf16 weights/x, f32 accumulation, bf16 recon) ---
    kparams_bf16 = prepare_kernel_params(params, jnp.bfloat16)
    recon_b, mu_b, lv_b = vae_forward(x, kparams_bf16, eps, recon_dtype=jnp.bfloat16)
    jax.block_until_ready((recon_b, mu_b, lv_b))
    assert jnp.allclose(recon_b.astype(jnp.float32), r_ref, atol=3e-2, rtol=3e-2), \
        "recon mismatch (bf16)"
    assert jnp.allclose(mu_b, mu_ref, atol=3e-2, rtol=3e-2), "mu mismatch (bf16)"
    assert jnp.allclose(lv_b, lv_ref, atol=3e-2, rtol=3e-2), "logvar mismatch (bf16)"

    print("KERNEL_OK")
</pallas_src>

<mosaic_0001>
module attributes {stable_mosaic.version = 11 : i64} {
  func.func @_vae_fwd_kernel(%arg0: i32, %arg1: memref<8x784xf32, #tpu.memory_space<vmem>>, %arg2: memref<8x64xf32, #tpu.memory_space<vmem>>, %arg3: memref<784x512xf32, #tpu.memory_space<vmem>>, %arg4: memref<1x512xf32, #tpu.memory_space<vmem>>, %arg5: memref<512x128xf32, #tpu.memory_space<vmem>>, %arg6: memref<1x128xf32, #tpu.memory_space<vmem>>, %arg7: memref<64x512xf32, #tpu.memory_space<vmem>>, %arg8: memref<1x512xf32, #tpu.memory_space<vmem>>, %arg9: memref<512x784xf32, #tpu.memory_space<vmem>>, %arg10: memref<1x784xf32, #tpu.memory_space<vmem>>, %arg11: memref<8x784xf32, #tpu.memory_space<vmem>>, %arg12: memref<8x128xf32, #tpu.memory_space<vmem>>) attributes {dimension_semantics = [#tpu.dimension_semantics<parallel>], iteration_bounds = array<i64: 1>, scalar_prefetch = 0 : i64, scratch_operands = 0 : i64, tpu.core_type = #tpu.core_type<tc>, window_params = [{transform_indices = @transform_0, window_bounds = array<i64: 8, 784>}, {transform_indices = @transform_1, window_bounds = array<i64: 8, 64>}, {pipeline_mode = #tpu.pipeline_mode<synchronous>, transform_indices = @transform_2, window_bounds = array<i64: 784, 512>}, {pipeline_mode = #tpu.pipeline_mode<synchronous>, transform_indices = @transform_3, window_bounds = array<i64: 1, 512>}, {pipeline_mode = #tpu.pipeline_mode<synchronous>, transform_indices = @transform_4, window_bounds = array<i64: 512, 128>}, {pipeline_mode = #tpu.pipeline_mode<synchronous>, transform_indices = @transform_5, window_bounds = array<i64: 1, 128>}, {pipeline_mode = #tpu.pipeline_mode<synchronous>, transform_indices = @transform_6, window_bounds = array<i64: 64, 512>}, {pipeline_mode = #tpu.pipeline_mode<synchronous>, transform_indices = @transform_7, window_bounds = array<i64: 1, 512>}, {pipeline_mode = #tpu.pipeline_mode<synchronous>, transform_indices = @transform_8, window_bounds = array<i64: 512, 784>}, {pipeline_mode = #tpu.pipeline_mode<synchronous>, transform_indices = @transform_9, window_bounds = array<i64: 1, 784>}, {transform_indices = @transform_10, window_bounds = array<i64: 8, 784>}, {transform_indices = @transform_11, window_bounds = array<i64: 8, 128>}]} {
    %c0 = arith.constant 0 : index
    %c0_0 = arith.constant 0 : index
    %0 = vector.load %arg1[%c0, %c0_0] : memref<8x784xf32, #tpu.memory_space<vmem>>, vector<8x784xf32>
    %c0_1 = arith.constant 0 : index
    %c0_2 = arith.constant 0 : index
    %1 = vector.load %arg3[%c0_1, %c0_2] : memref<784x512xf32, #tpu.memory_space<vmem>>, vector<784x512xf32>
    %cst = arith.constant dense<0.000000e+00> : vector<8x512xf32>
    %2 = tpu.matmul %0, %1, %cst {dimension_numbers = #tpu.dot_dimension_numbers<[1], [0], [0], [1], [0, 0, 1, 1], [], []>} : vector<8x784xf32>, vector<784x512xf32>, vector<8x512xf32> -> vector<8x512xf32>
    %c0_3 = arith.constant 0 : index
    %c0_4 = arith.constant 0 : index
    %3 = vector.load %arg4[%c0_3, %c0_4] : memref<1x512xf32, #tpu.memory_space<vmem>>, vector<1x512xf32>
    %4 = vector.broadcast %3 : vector<1x512xf32> to vector<8x512xf32>
    %5 = arith.addf %2, %4 : vector<8x512xf32>
    %cst_5 = arith.constant 0.000000e+00 : f32
    %6 = vector.broadcast %cst_5 : f32 to vector<8x512xf32>
    %7 = arith.maximumf %5, %6 : vector<8x512xf32>
    %c0_6 = arith.constant 0 : index
    %c0_7 = arith.constant 0 : index
    %8 = vector.load %arg5[%c0_6, %c0_7] : memref<512x128xf32, #tpu.memory_space<vmem>>, vector<512x128xf32>
    %cst_8 = arith.constant dense<0.000000e+00> : vector<8x128xf32>
    %9 = tpu.matmul %7, %8, %cst_8 {dimension_numbers = #tpu.dot_dimension_numbers<[1], [0], [0], [1], [0, 0, 1, 1], [], []>} : vector<8x512xf32>, vector<512x128xf32>, vector<8x128xf32> -> vector<8x128xf32>
    %c0_9 = arith.constant 0 : index
    %c0_10 = arith.constant 0 : index
    %10 = vector.load %arg6[%c0_9, %c0_10] : memref<1x128xf32, #tpu.memory_space<vmem>>, vector<1x128xf32>
    %11 = vector.broadcast %10 : vector<1x128xf32> to vector<8x128xf32>
    %12 = arith.addf %9, %11 : vector<8x128xf32>
    %13 = vector.extract_strided_slice %12 {offsets = [0, 0], sizes = [8, 64], strides = [1, 1]} : vector<8x128xf32> to vector<8x64xf32>
    %14 = vector.extract_strided_slice %12 {offsets = [0, 64], sizes = [8, 64], strides = [1, 1]} : vector<8x128xf32> to vector<8x64xf32>
    %c0_11 = arith.constant 0 : index
    %c0_12 = arith.constant 0 : index
    %15 = vector.load %arg2[%c0_11, %c0_12] : memref<8x64xf32, #tpu.memory_space<vmem>>, vector<8x64xf32>
    %cst_13 = arith.constant 5.000000e-01 : f32
    %16 = vector.broadcast %cst_13 : f32 to vector<8x64xf32>
    %17 = arith.mulf %16, %14 : vector<8x64xf32>
    %18 = math.exp %17 : vector<8x64xf32>
    %19 = arith.mulf %15, %18 : vector<8x64xf32>
    %20 = arith.addf %13, %19 : vector<8x64xf32>
    %c0_14 = arith.constant 0 : index
    %c0_15 = arith.constant 0 : index
    %21 = vector.load %arg7[%c0_14, %c0_15] : memref<64x512xf32, #tpu.memory_space<vmem>>, vector<64x512xf32>
    %cst_16 = arith.constant dense<0.000000e+00> : vector<8x512xf32>
    %22 = tpu.matmul %20, %21, %cst_16 {dimension_numbers = #tpu.dot_dimension_numbers<[1], [0], [0], [1], [0, 0, 1, 1], [], []>} : vector<8x64xf32>, vector<64x512xf32>, vector<8x512xf32> -> vector<8x512xf32>
    %c0_17 = arith.constant 0 : index
    %c0_18 = arith.constant 0 : index
    %23 = vector.load %arg8[%c0_17, %c0_18] : memref<1x512xf32, #tpu.memory_space<vmem>>, vector<1x512xf32>
    %24 = vector.broadcast %23 : vector<1x512xf32> to vector<8x512xf32>
    %25 = arith.addf %22, %24 : vector<8x512xf32>
    %cst_19 = arith.constant 0.000000e+00 : f32
    %26 = vector.broadcast %cst_19 : f32 to vector<8x512xf32>
    %27 = arith.maximumf %25, %26 : vector<8x512xf32>
    %c0_20 = arith.constant 0 : index
    %c0_21 = arith.constant 0 : index
    %28 = vector.load %arg9[%c0_20, %c0_21] : memref<512x784xf32, #tpu.memory_space<vmem>>, vector<512x784xf32>
    %cst_22 = arith.constant dense<0.000000e+00> : vector<8x784xf32>
    %29 = tpu.matmul %27, %28, %cst_22 {dimension_numbers = #tpu.dot_dimension_numbers<[1], [0], [0], [1], [0, 0, 1, 1], [], []>} : vector<8x512xf32>, vector<512x784xf32>, vector<8x784xf32> -> vector<8x784xf32>
    %c0_23 = arith.constant 0 : index
    %c0_24 = arith.constant 0 : index
    %30 = vector.load %arg10[%c0_23, %c0_24] : memref<1x784xf32, #tpu.memory_space<vmem>>, vector<1x784xf32>
    %31 = vector.broadcast %30 : vector<1x784xf32> to vector<8x784xf32>
    %32 = arith.addf %29, %31 : vector<8x784xf32>
    %33 = arith.negf %32 : vector<8x784xf32>
    %34 = math.exp %33 : vector<8x784xf32>
    %cst_25 = arith.constant 1.000000e+00 : f32
    %35 = vector.broadcast %cst_25 : f32 to vector<8x784xf32>
    %36 = arith.addf %35, %34 : vector<8x784xf32>
    %37 = arith.divf %35, %36 : vector<8x784xf32>
    %c0_26 = arith.constant 0 : index
    %c0_27 = arith.constant 0 : index
    %38 = vector.load %arg11[%c0_26, %c0_27] : memref<8x784xf32, #tpu.memory_space<vmem>>, vector<8x784xf32>
    tpu.vector_store %arg11[%c0_26, %c0_27], %37 {strides = array<i32>} : memref<8x784xf32, #tpu.memory_space<vmem>>, vector<8x784xf32>,
    %c0_28 = arith.constant 0 : index
    %c0_29 = arith.constant 0 : index
    %39 = vector.load %arg12[%c0_28, %c0_29] : memref<8x128xf32, #tpu.memory_space<vmem>>, vector<8x128xf32>
    tpu.vector_store %arg12[%c0_28, %c0_29], %12 {strides = array<i32>} : memref<8x128xf32, #tpu.memory_space<vmem>>, vector<8x128xf32>,
    return
  }
  func.func @transform_0(%arg0: i32) -> (i32, i32) {
    %c0_i32 = arith.constant 0 : i32
    %c0_i32_0 = arith.constant 0 : i32
    return %arg0, %c0_i32 : i32, i32
  }
  func.func @transform_1(%arg0: i32) -> (i32, i32) {
    %c0_i32 = arith.constant 0 : i32
    %c0_i32_0 = arith.constant 0 : i32
    return %arg0, %c0_i32 : i32, i32
  }
  func.func @transform_2(%arg0: i32) -> (i32, i32) {
    %c0_i32 = arith.constant 0 : i32
    %c0_i32_0 = arith.constant 0 : i32
    %c0_i32_1 = arith.constant 0 : i32
    return %c0_i32, %c0_i32_0 : i32, i32
  }
  func.func @transform_3(%arg0: i32) -> (i32, i32) {
    %c0_i32 = arith.constant 0 : i32
    %c0_i32_0 = arith.constant 0 : i32
    %c0_i32_1 = arith.constant 0 : i32
    return %c0_i32, %c0_i32_0 : i32, i32
  }
  func.func @transform_4(%arg0: i32) -> (i32, i32) {
    %c0_i32 = arith.constant 0 : i32
    %c0_i32_0 = arith.constant 0 : i32
    %c0_i32_1 = arith.constant 0 : i32
    return %c0_i32, %c0_i32_0 : i32, i32
  }
  func.func @transform_5(%arg0: i32) -> (i32, i32) {
    %c0_i32 = arith.constant 0 : i32
    %c0_i32_0 = arith.constant 0 : i32
    %c0_i32_1 = arith.constant 0 : i32
    return %c0_i32, %c0_i32_0 : i32, i32
  }
  func.func @transform_6(%arg0: i32) -> (i32, i32) {
    %c0_i32 = arith.constant 0 : i32
    %c0_i32_0 = arith.constant 0 : i32
    %c0_i32_1 = arith.constant 0 : i32
    return %c0_i32, %c0_i32_0 : i32, i32
  }
  func.func @transform_7(%arg0: i32) -> (i32, i32) {
    %c0_i32 = arith.constant 0 : i32
    %c0_i32_0 = arith.constant 0 : i32
    %c0_i32_1 = arith.constant 0 : i32
    return %c0_i32, %c0_i32_0 : i32, i32
  }
  func.func @transform_8(%arg0: i32) -> (i32, i32) {
    %c0_i32 = arith.constant 0 : i32
    %c0_i32_0 = arith.constant 0 : i32
    %c0_i32_1 = arith.constant 0 : i32
    return %c0_i32, %c0_i32_0 : i32, i32
  }
  func.func @transform_9(%arg0: i32) -> (i32, i32) {
    %c0_i32 = arith.constant 0 : i32
    %c0_i32_0 = arith.constant 0 : i32
    %c0_i32_1 = arith.constant 0 : i32
    return %c0_i32, %c0_i32_0 : i32, i32
  }
  func.func @transform_10(%arg0: i32) -> (i32, i32) {
    %c0_i32 = arith.constant 0 : i32
    %c0_i32_0 = arith.constant 0 : i32
    return %arg0, %c0_i32 : i32, i32
  }
  func.func @transform_11(%arg0: i32) -> (i32, i32) {
    %c0_i32 = arith.constant 0 : i32
    %c0_i32_0 = arith.constant 0 : i32
    return %arg0, %c0_i32 : i32, i32
  }
}

</mosaic_0001>

<llo_original>
// kernel: vae_forward.1
$region0: #{vae_forward.1}
  #allocation0 [shape = 'u32[]', space=smem, size = 0x4, offset = 0x4, fixed_abs, tag = 'smem constant byte address 0x4 - core index']
  #allocation1 [shape = 'u32[144,128]{1,0:T(1,128)}', space=vmem, size = 0x12000, scoped, tag = 'internal scratch']
  %s0 = inlined_call_operand.vmem [shape: f32[8,784], index: 0, kind: input, shape index: {}]
  %s1 = inlined_call_operand.vmem [shape: f32[8,64], index: 1, kind: input, shape index: {}]
  %s2 = inlined_call_operand.vmem [shape: f32[784,512], index: 2, kind: input, shape index: {}]
  %s3 = inlined_call_operand.vmem [shape: f32[1,512], index: 3, kind: input, shape index: {}]
  %s4 = inlined_call_operand.vmem [shape: f32[512,128], index: 4, kind: input, shape index: {}]
  %s5 = inlined_call_operand.vmem [shape: f32[1,128], index: 5, kind: input, shape index: {}]
  %s6 = inlined_call_operand.vmem [shape: f32[64,512], index: 6, kind: input, shape index: {}]
  %s7 = inlined_call_operand.vmem [shape: f32[1,512], index: 7, kind: input, shape index: {}]
  %s8 = inlined_call_operand.vmem [shape: f32[512,784], index: 8, kind: input, shape index: {}]
  %s9 = inlined_call_operand.vmem [shape: f32[1,784], index: 9, kind: input, shape index: {}]
  %s10 = inlined_call_operand.hbm [shape: f32[8,784], index: 10, kind: output, shape index: {0}]
  %s11 = inlined_call_operand.vmem [shape: f32[8,128], index: 11, kind: output, shape index: {1}]
  %12 = xla_tuple %s10, %s11
  %s13 = sld [smem:[#allocation0]]
  $region58: #{vae_forward.1} parent=0
    _
  %s15 = ssub.s32 1, %s13
  %s16 = scalar_select 0, %s15, %s13
  $region1: #{vae_forward.1} parent=0
    #allocation2 [shape = 'u8[28672]{0}', space=vmem, size = 0x7000, scoped, tag = 'output window, operand 0, single buffered']
    #allocation3 [shape = 's32[1]{0}', space=sflag, size = 0x4, scoped, tag = 'scoped memory for vae_forward.1']
    %17 = vsyncpa [#allocation3], 0
    // Predicated region
    $region2: #{vae_forward.1} parent=1 // pred_check
      _
    $region3: #{vae_forward.1} parent=1 // pred_check_branch
      %19 = sbr.rel (0) target = $region5
    $region4: #{vae_forward.1} parent=1 // pred_region
      _
    $region5: #{vae_forward.1} parent=1 // pred_fallthru
      _
    // Predicated region
    $region6: #{vae_forward.1} parent=1 // pred_check
      _
    $region7: #{vae_forward.1} parent=1 // pred_check_branch
      %21 = sbr.rel (0) target = $region9
    $region8: #{vae_forward.1} parent=1 // pred_region
      _
    $region9: #{vae_forward.1} parent=1 // pred_fallthru
      _
    // Predicated region
    $region10: #{vae_forward.1} parent=1 // pred_check
      _
    $region11: #{vae_forward.1} parent=1 // pred_check_branch
      %23 = sbr.rel (0) target = $region13
    $region12: #{vae_forward.1} parent=1 // pred_region
      _
    $region13: #{vae_forward.1} parent=1 // pred_fallthru
      _
    // Predicated region
    $region14: #{vae_forward.1} parent=1 // pred_check
      _
    $region15: #{vae_forward.1} parent=1 // pred_check_branch
      %25 = sbr.rel (0) target = $region17
    $region16: #{vae_forward.1} parent=1 // pred_region
      _
    $region17: #{vae_forward.1} parent=1 // pred_fallthru
      _
    // Predicated region
    $region18: #{vae_forward.1} parent=1 // pred_check
      _
    $region19: #{vae_forward.1} parent=1 // pred_check_branch
      %27 = sbr.rel (0) target = $region21
    $region20: #{vae_forward.1} parent=1 // pred_region
      _
    $region21: #{vae_forward.1} parent=1 // pred_fallthru
      _
    // Predicated region
    $region22: #{vae_forward.1} parent=1 // pred_check
      _
    $region23: #{vae_forward.1} parent=1 // pred_check_branch
      %29 = sbr.rel (0) target = $region25
    $region24: #{vae_forward.1} parent=1 // pred_region
      _
    $region25: #{vae_forward.1} parent=1 // pred_fallthru
      _
    // Predicated region
    $region26: #{vae_forward.1} parent=1 // pred_check
      _
    $region27: #{vae_forward.1} parent=1 // pred_check_branch
      %31 = sbr.rel (0) target = $region29
    $region28: #{vae_forward.1} parent=1 // pred_region
      _
    $region29: #{vae_forward.1} parent=1 // pred_fallthru
      _
    // Predicated region
    $region30: #{vae_forward.1} parent=1 // pred_check
      _
    $region31: #{vae_forward.1} parent=1 // pred_check_branch
      %33 = sbr.rel (0) target = $region33
    $region32: #{vae_forward.1} parent=1 // pred_region
      _
    $region33: #{vae_forward.1} parent=1 // pred_fallthru
      _
    // Predicated region
    $region34: #{vae_forward.1} parent=1 // pred_check
      _
    $region35: #{vae_forward.1} parent=1 // pred_check_branch
      %35 = sbr.rel (0) target = $region37
    $region36: #{vae_forward.1} parent=1 // pred_region
      _
    $region37: #{vae_forward.1} parent=1 // pred_fallthru
      _
    // Predicated region
    $region38: #{vae_forward.1} parent=1 // pred_check
      _
    $region39: #{vae_forward.1} parent=1 // pred_check_branch
      %37 = sbr.rel (0) target = $region41
    $region40: #{vae_forward.1} parent=1 // pred_region
      _
    $region41: #{vae_forward.1} parent=1 // pred_fallthru
      _
    %v38 = vld [vmem:[%s0] sm:$0xff]
    %v39 = vld [vmem:[%s0 + $0x8] sm:$0xff]
    %v40 = vld [vmem:[%s0 + $0x10] sm:$0xff]
    %v41 = vld [vmem:[%s0 + $0x18] sm:$0xff]
    %v42 = vld [vmem:[%s0 + $0x20] sm:$0xff]
    %v43 = vld [vmem:[%s0 + $0x28] sm:$0xff]
    %v44 = vld [vmem:[%s0 + $0x30] sm:$0xff]
    %v45 = vld [vmem:[%s2] sm:$0xff]
    %v46 = vld [vmem:[%s2 + $0x8] sm:$0xff]
    %v47 = vld [vmem:[%s2 + $0x10] sm:$0xff]
    %v48 = vld [vmem:[%s2 + $0x18] sm:$0xff]
    %v49 = vld [vmem:[%s2 + $0x20] sm:$0xff]
    %v50 = vld [vmem:[%s2 + $0x28] sm:$0xff]
    %v51 = vld [vmem:[%s2 + $0x30] sm:$0xff]
    %v52 = vld [vmem:[%s2 + $0x38] sm:$0xff]
    %v53 = vld [vmem:[%s2 + $0x40] sm:$0xff]
    %v54 = vld [vmem:[%s2 + $0x48] sm:$0xff]
    %v55 = vld [vmem:[%s2 + $0x50] sm:$0xff]
    %v56 = vld [vmem:[%s2 + $0x58] sm:$0xff]
    %v57 = vld [vmem:[%s2 + $0x60] sm:$0xff]
    %v58 = vld [vmem:[%s2 + $0x68] sm:$0xff]
    %v59 = vld [vmem:[%s2 + $0x70] sm:$0xff]
    %v60 = vld [vmem:[%s2 + $0x78] sm:$0xff]
    %v61 = vld [vmem:[%s2 + $0x80] sm:$0xff]
    %v62 = vld [vmem:[%s2 + $0x88] sm:$0xff]
    %v63 = vld [vmem:[%s2 + $0x90] sm:$0xff]
    %v64 = vld [vmem:[%s2 + $0x98] sm:$0xff]
    %v65 = vld [vmem:[%s2 + $0xa0] sm:$0xff]
    %v66 = vld [vmem:[%s2 + $0xa8] sm:$0xff]
    %v67 = vld [vmem:[%s2 + $0xb0] sm:$0xff]
    %v68 = vld [vmem:[%s2 + $0xb8] sm:$0xff]
    %v69 = vld [vmem:[%s2 + $0xc0] sm:$0xff]
    %v70 = vld [vmem:[%s2 + $0xc8] sm:$0xff]
    %v71 = vld [vmem:[%s2 + $0xd0] sm:$0xff]
    %v72 = vld [vmem:[%s2 + $0xd8] sm:$0xff]
    %v73 = vld [vmem:[%s2 + $0xe0] sm:$0xff]
    %v74 = vld [vmem:[%s2 + $0xe8] sm:$0xff]
    %v75 = vld [vmem:[%s2 + $0xf0] sm:$0xff]
    %v76 = vld [vmem:[%s2 + $0xf8] sm:$0xff]
    %v77 = vld [vmem:[%s2 + $0x100] sm:$0xff]
    %v78 = vld [vmem:[%s2 + $0x108] sm:$0xff]
    %v79 = vld [vmem:[%s2 + $0x110] sm:$0xff]
    %v80 = vld [vmem:[%s2 + $0x118] sm:$0xff]
    %v81 = vld [vmem:[%s2 + $0x120] sm:$0xff]
    %v82 = vld [vmem:[%s2 + $0x128] sm:$0xff]
    %v83 = vld [vmem:[%s2 + $0x130] sm:$0xff]
    %v84 = vld [vmem:[%s2 + $0x138] sm:$0xff]
    %v85 = vld [vmem:[%s2 + $0x140] sm:$0xff]
    %v86 = vld [vmem:[%s2 + $0x148] sm:$0xff]
    %v87 = vld [vmem:[%s2 + $0x150] sm:$0xff]
    %v88 = vld [vmem:[%s2 + $0x158] sm:$0xff]
    %v89 = vld [vmem:[%s2 + $0x160] sm:$0xff]
    %v90 = vld [vmem:[%s2 + $0x168] sm:$0xff]
    %v91 = vld [vmem:[%s2 + $0x170] sm:$0xff]
    %v92 = vld [vmem:[%s2 + $0x178] sm:$0xff]
    %v93 = vld [vmem:[%s2 + $0x180] sm:$0xff]
    %v94 = vld [vmem:[%s2 + $0x188] sm:$0xff]
    %v95 = vld [vmem:[%s2 + $0x190] sm:$0xff]
    %v96 = vld [vmem:[%s2 + $0x198] sm:$0xff]
    %v97 = vld [vmem:[%s2 + $0x1a0] sm:$0xff]
    %v98 = vld [vmem:[%s2 + $0x1a8] sm:$0xff]
    %v99 = vld [vmem:[%s2 + $0x1b0] sm:$0xff]
    %v100 = vld [vmem:[%s2 + $0x1b8] sm:$0xff]
    %v101 = vld [vmem:[%s2 + $0x1c0] sm:$0xff]
    %v102 = vld [vmem:[%s2 + $0x1c8] sm:$0xff]
    %v103 = vld [vmem:[%s2 + $0x1d0] sm:$0xff]
    %v104 = vld [vmem:[%s2 + $0x1d8] sm:$0xff]
    %v105 = vld [vmem:[%s2 + $0x1e0] sm:$0xff]
    %v106 = vld [vmem:[%s2 + $0x1e8] sm:$0xff]
    %v107 = vld [vmem:[%s2 + $0x1f0] sm:$0xff]
    %v108 = vld [vmem:[%s2 + $0x1f8] sm:$0xff]
    %v109 = vld [vmem:[%s2 + $0x200] sm:$0xff]
    %v110 = vld [vmem:[%s2 + $0x208] sm:$0xff]
    %v111 = vld [vmem:[%s2 + $0x210] sm:$0xff]
    %v112 = vld [vmem:[%s2 + $0x218] sm:$0xff]
    %v113 = vld [vmem:[%s2 + $0x220] sm:$0xff]
    %v114 = vld [vmem:[%s2 + $0x228] sm:$0xff]
    %v115 = vld [vmem:[%s2 + $0x230] sm:$0xff]
    %v116 = vld [vmem:[%s2 + $0x238] sm:$0xff]
    %v117 = vld [vmem:[%s2 + $0x240] sm:$0xff]
    %v118 = vld [vmem:[%s2 + $0x248] sm:$0xff]
    %v119 = vld [vmem:[%s2 + $0x250] sm:$0xff]
    %v120 = vld [vmem:[%s2 + $0x258] sm:$0xff]
    %v121 = vld [vmem:[%s2 + $0x260] sm:$0xff]
    %v122 = vld [vmem:[%s2 + $0x268] sm:$0xff]
    %v123 = vld [vmem:[%s2 + $0x270] sm:$0xff]
    %v124 = vld [vmem:[%s2 + $0x278] sm:$0xff]
    %v125 = vld [vmem:[%s2 + $0x280] sm:$0xff]
    %v126 = vld [vmem:[%s2 + $0x288] sm:$0xff]
    %v127 = vld [vmem:[%s2 + $0x290] sm:$0xff]
    %v128 = vld [vmem:[%s2 + $0x298] sm:$0xff]
    %v129 = vld [vmem:[%s2 + $0x2a0] sm:$0xff]
    %v130 = vld [vmem:[%s2 + $0x2a8] sm:$0xff]
    %v131 = vld [vmem:[%s2 + $0x2b0] sm:$0xff]
    %v132 = vld [vmem:[%s2 + $0x2b8] sm:$0xff]
    %v133 = vld [vmem:[%s2 + $0x2c0] sm:$0xff]
    %v134 = vld [vmem:[%s2 + $0x2c8] sm:$0xff]
    %v135 = vld [vmem:[%s2 + $0x2d0] sm:$0xff]
    %v136 = vld [vmem:[%s2 + $0x2d8] sm:$0xff]
    %v137 = vld [vmem:[%s2 + $0x2e0] sm:$0xff]
    %v138 = vld [vmem:[%s2 + $0x2e8] sm:$0xff]
    %v139 = vld [vmem:[%s2 + $0x2f0] sm:$0xff]
    %v140 = vld [vmem:[%s2 + $0x2f8] sm:$0xff]
    %v141 = vld [vmem:[%s2 + $0x300] sm:$0xff]
    %v142 = vld [vmem:[%s2 + $0x308] sm:$0xff]
    %v143 = vld [vmem:[%s2 + $0x310] sm:$0xff]
    %v144 = vld [vmem:[%s2 + $0x318] sm:$0xff]
    %v145 = vld [vmem:[%s2 + $0x320] sm:$0xff]
    %v146 = vld [vmem:[%s2 + $0x328] sm:$0xff]
    %v147 = vld [vmem:[%s2 + $0x330] sm:$0xff]
    %v148 = vld [vmem:[%s2 + $0x338] sm:$0xff]
    %v149 = vld [vmem:[%s2 + $0x340] sm:$0xff]
    %v150 = vld [vmem:[%s2 + $0x348] sm:$0xff]
    %v151 = vld [vmem:[%s2 + $0x350] sm:$0xff]
    %v152 = vld [vmem:[%s2 + $0x358] sm:$0xff]
    %v153 = vld [vmem:[%s2 + $0x360] sm:$0xff]
    %v154 = vld [vmem:[%s2 + $0x368] sm:$0xff]
    %v155 = vld [vmem:[%s2 + $0x370] sm:$0xff]
    %v156 = vld [vmem:[%s2 + $0x378] sm:$0xff]
    %v157 = vld [vmem:[%s2 + $0x380] sm:$0xff]
    %v158 = vld [vmem:[%s2 + $0x388] sm:$0xff]
    %v159 = vld [vmem:[%s2 + $0x390] sm:$0xff]
    %v160 = vld [vmem:[%s2 + $0x398] sm:$0xff]
    %v161 = vld [vmem:[%s2 + $0x3a0] sm:$0xff]
    %v162 = vld [vmem:[%s2 + $0x3a8] sm:$0xff]
    %v163 = vld [vmem:[%s2 + $0x3b0] sm:$0xff]
    %v164 = vld [vmem:[%s2 + $0x3b8] sm:$0xff]
    %v165 = vld [vmem:[%s2 + $0x3c0] sm:$0xff]
    %v166 = vld [vmem:[%s2 + $0x3c8] sm:$0xff]
    %v167 = vld [vmem:[%s2 + $0x3d0] sm:$0xff]
    %v168 = vld [vmem:[%s2 + $0x3d8] sm:$0xff]
    %v169 = vld [vmem:[%s2 + $0x3e0] sm:$0xff]
    %v170 = vld [vmem:[%s2 + $0x3e8] sm:$0xff]
    %v171 = vld [vmem:[%s2 + $0x3f0] sm:$0xff]
    %v172 = vld [vmem:[%s2 + $0x3f8] sm:$0xff]
    %v173 = vld [vmem:[%s2 + $0x400] sm:$0xff]
    %v174 = vld [vmem:[%s2 + $0x408] sm:$0xff]
    %v175 = vld [vmem:[%s2 + $0x410] sm:$0xff]
    %v176 = vld [vmem:[%s2 + $0x418] sm:$0xff]
    %v177 = vld [vmem:[%s2 + $0x420] sm:$0xff]
    %v178 = vld [vmem:[%s2 + $0x428] sm:$0xff]
    %v179 = vld [vmem:[%s2 + $0x430] sm:$0xff]
    %v180 = vld [vmem:[%s2 + $0x438] sm:$0xff]
    %v181 = vld [vmem:[%s2 + $0x440] sm:$0xff]
    %v182 = vld [vmem:[%s2 + $0x448] sm:$0xff]
    %v183 = vld [vmem:[%s2 + $0x450] sm:$0xff]
    %v184 = vld [vmem:[%s2 + $0x458] sm:$0xff]
    %v185 = vld [vmem:[%s2 + $0x460] sm:$0xff]
    %v186 = vld [vmem:[%s2 + $0x468] sm:$0xff]
    %v187 = vld [vmem:[%s2 + $0x470] sm:$0xff]
    %v188 = vld [vmem:[%s2 + $0x478] sm:$0xff]
    %v189 = vld [vmem:[%s2 + $0x480] sm:$0xff]
    %v190 = vld [vmem:[%s2 + $0x488] sm:$0xff]
    %v191 = vld [vmem:[%s2 + $0x490] sm:$0xff]
    %v192 = vld [vmem:[%s2 + $0x498] sm:$0xff]
    %v193 = vld [vmem:[%s2 + $0x4a0] sm:$0xff]
    %v194 = vld [vmem:[%s2 + $0x4a8] sm:$0xff]
    %v195 = vld [vmem:[%s2 + $0x4b0] sm:$0xff]
    %v196 = vld [vmem:[%s2 + $0x4b8] sm:$0xff]
    %v197 = vld [vmem:[%s2 + $0x4c0] sm:$0xff]
    %v198 = vld [vmem:[%s2 + $0x4c8] sm:$0xff]
    %v199 = vld [vmem:[%s2 + $0x4d0] sm:$0xff]
    %v200 = vld [vmem:[%s2 + $0x4d8] sm:$0xff]
    %v201 = vld [vmem:[%s2 + $0x4e0] sm:$0xff]
    %v202 = vld [vmem:[%s2 + $0x4e8] sm:$0xff]
    %v203 = vld [vmem:[%s2 + $0x4f0] sm:$0xff]
    %v204 = vld [vmem:[%s2 + $0x4f8] sm:$0xff]
    %v205 = vld [vmem:[%s2 + $0x500] sm:$0xff]
    %v206 = vld [vmem:[%s2 + $0x508] sm:$0xff]
    %v207 = vld [vmem:[%s2 + $0x510] sm:$0xff]
    %v208 = vld [vmem:[%s2 + $0x518] sm:$0xff]
    %v209 = vld [vmem:[%s2 + $0x520] sm:$0xff]
    %v210 = vld [vmem:[%s2 + $0x528] sm:$0xff]
    %v211 = vld [vmem:[%s2 + $0x530] sm:$0xff]
    %v212 = vld [vmem:[%s2 + $0x538] sm:$0xff]
    %v213 = vld [vmem:[%s2 + $0x540] sm:$0xff]
    %v214 = vld [vmem:[%s2 + $0x548] sm:$0xff]
    %v215 = vld [vmem:[%s2 + $0x550] sm:$0xff]
    %v216 = vld [vmem:[%s2 + $0x558] sm:$0xff]
    %v217 = vld [vmem:[%s2 + $0x560] sm:$0xff]
    %v218 = vld [vmem:[%s2 + $0x568] sm:$0xff]
    %v219 = vld [vmem:[%s2 + $0x570] sm:$0xff]
    %v220 = vld [vmem:[%s2 + $0x578] sm:$0xff]
    %v221 = vld [vmem:[%s2 + $0x580] sm:$0xff]
    %v222 = vld [vmem:[%s2 + $0x588] sm:$0xff]
    %v223 = vld [vmem:[%s2 + $0x590] sm:$0xff]
    %v224 = vld [vmem:[%s2 + $0x598] sm:$0xff]
    %v225 = vld [vmem:[%s2 + $0x5a0] sm:$0xff]
    %v226 = vld [vmem:[%s2 + $0x5a8] sm:$0xff]
    %v227 = vld [vmem:[%s2 + $0x5b0] sm:$0xff]
    %v228 = vld [vmem:[%s2 + $0x5b8] sm:$0xff]
    %v229 = vld [vmem:[%s2 + $0x5c0] sm:$0xff]
    %v230 = vld [vmem:[%s2 + $0x5c8] sm:$0xff]
    %v231 = vld [vmem:[%s2 + $0x5d0] sm:$0xff]
    %v232 = vld [vmem:[%s2 + $0x5d8] sm:$0xff]
    %v233 = vld [vmem:[%s2 + $0x5e0] sm:$0xff]
    %v234 = vld [vmem:[%s2 + $0x5e8] sm:$0xff]
    %v235 = vld [vmem:[%s2 + $0x5f0] sm:$0xff]
    %v236 = vld [vmem:[%s2 + $0x5f8] sm:$0xff]
    %v237 = vld [vmem:[%s2 + $0x600] sm:$0xff]
    %v238 = vld [vmem:[%s2 + $0x608] sm:$0xff]
    %v239 = vld [vmem:[%s2 + $0x610] sm:$0xff]
    %v240 = vld [vmem:[%s2 + $0x618] sm:$0xff]
    %v241 = vld [vmem:[%s2 + $0x620] sm:$0xff]
    %v242 = vld [vmem:[%s2 + $0x628] sm:$0xff]
    %v243 = vld [vmem:[%s2 + $0x630] sm:$0xff]
    %v244 = vld [vmem:[%s2 + $0x638] sm:$0xff]
    %v245 = vld [vmem:[%s2 + $0x640] sm:$0xff]
    %v246 = vld [vmem:[%s2 + $0x648] sm:$0xff]
    %v247 = vld [vmem:[%s2 + $0x650] sm:$0xff]
    %v248 = vld [vmem:[%s2 + $0x658] sm:$0xff]
    %v249 = vld [vmem:[%s2 + $0x660] sm:$0xff]
    %v250 = vld [vmem:[%s2 + $0x668] sm:$0xff]
    %v251 = vld [vmem:[%s2 + $0x670] sm:$0xff]
    %v252 = vld [vmem:[%s2 + $0x678] sm:$0xff]
    %v253 = vld [vmem:[%s2 + $0x680] sm:$0xff]
    %v254 = vld [vmem:[%s2 + $0x688] sm:$0xff]
    %v255 = vld [vmem:[%s2 + $0x690] sm:$0xff]
    %v256 = vld [vmem:[%s2 + $0x698] sm:$0xff]
    %v257 = vld [vmem:[%s2 + $0x6a0] sm:$0xff]
    %v258 = vld [vmem:[%s2 + $0x6a8] sm:$0xff]
    %v259 = vld [vmem:[%s2 + $0x6b0] sm:$0xff]
    %v260 = vld [vmem:[%s2 + $0x6b8] sm:$0xff]
    %v261 = vld [vmem:[%s2 + $0x6c0] sm:$0xff]
    %v262 = vld [vmem:[%s2 + $0x6c8] sm:$0xff]
    %v263 = vld [vmem:[%s2 + $0x6d0] sm:$0xff]
    %v264 = vld [vmem:[%s2 + $0x6d8] sm:$0xff]
    %v265 = vld [vmem:[%s2 + $0x6e0] sm:$0xff]
    %v266 = vld [vmem:[%s2 + $0x6e8] sm:$0xff]
    %v267 = vld [vmem:[%s2 + $0x6f0] sm:$0xff]
    %v268 = vld [vmem:[%s2 + $0x6f8] sm:$0xff]
    %v269 = vld [vmem:[%s2 + $0x700] sm:$0xff]
    %v270 = vld [vmem:[%s2 + $0x708] sm:$0xff]
    %v271 = vld [vmem:[%s2 + $0x710] sm:$0xff]
    %v272 = vld [vmem:[%s2 + $0x718] sm:$0xff]
    %v273 = vld [vmem:[%s2 + $0x720] sm:$0xff]
    %v274 = vld [vmem:[%s2 + $0x728] sm:$0xff]
    %v275 = vld [vmem:[%s2 + $0x730] sm:$0xff]
    %v276 = vld [vmem:[%s2 + $0x738] sm:$0xff]
    %v277 = vld [vmem:[%s2 + $0x740] sm:$0xff]
    %v278 = vld [vmem:[%s2 + $0x748] sm:$0xff]
    %v279 = vld [vmem:[%s2 + $0x750] sm:$0xff]
    %v280 = vld [vmem:[%s2 + $0x758] sm:$0xff]
    %v281 = vld [vmem:[%s2 + $0x760] sm:$0xff]
    %v282 = vld [vmem:[%s2 + $0x768] sm:$0xff]
    %v283 = vld [vmem:[%s2 + $0x770] sm:$0xff]
    %v284 = vld [vmem:[%s2 + $0x778] sm:$0xff]
    %v285 = vld [vmem:[%s2 + $0x780] sm:$0xff]
    %v286 = vld [vmem:[%s2 + $0x788] sm:$0xff]
    %v287 = vld [vmem:[%s2 + $0x790] sm:$0xff]
    %v288 = vld [vmem:[%s2 + $0x798] sm:$0xff]
    %v289 = vld [vmem:[%s2 + $0x7a0] sm:$0xff]
    %v290 = vld [vmem:[%s2 + $0x7a8] sm:$0xff]
    %v291 = vld [vmem:[%s2 + $0x7b0] sm:$0xff]
    %v292 = vld [vmem:[%s2 + $0x7b8] sm:$0xff]
    %v293 = vld [vmem:[%s2 + $0x7c0] sm:$0xff]
    %v294 = vld [vmem:[%s2 + $0x7c8] sm:$0xff]
    %v295 = vld [vmem:[%s2 + $0x7d0] sm:$0xff]
    %v296 = vld [vmem:[%s2 + $0x7d8] sm:$0xff]
    %v297 = vld [vmem:[%s2 + $0x7e0] sm:$0xff]
    %v298 = vld [vmem:[%s2 + $0x7e8] sm:$0xff]
    %v299 = vld [vmem:[%s2 + $0x7f0] sm:$0xff]
    %v300 = vld [vmem:[%s2 + $0x7f8] sm:$0xff]
    %v301 = vld [vmem:[%s2 + $0x800] sm:$0xff]
    %v302 = vld [vmem:[%s2 + $0x808] sm:$0xff]
    %v303 = vld [vmem:[%s2 + $0x810] sm:$0xff]
    %v304 = vld [vmem:[%s2 + $0x818] sm:$0xff]
    %v305 = vld [vmem:[%s2 + $0x820] sm:$0xff]
    %v306 = vld [vmem:[%s2 + $0x828] sm:$0xff]
    %v307 = vld [vmem:[%s2 + $0x830] sm:$0xff]
    %v308 = vld [vmem:[%s2 + $0x838] sm:$0xff]
    %v309 = vld [vmem:[%s2 + $0x840] sm:$0xff]
    %v310 = vld [vmem:[%s2 + $0x848] sm:$0xff]
    %v311 = vld [vmem:[%s2 + $0x850] sm:$0xff]
    %v312 = vld [vmem:[%s2 + $0x858] sm:$0xff]
    %v313 = vld [vmem:[%s2 + $0x860] sm:$0xff]
    %v314 = vld [vmem:[%s2 + $0x868] sm:$0xff]
    %v315 = vld [vmem:[%s2 + $0x870] sm:$0xff]
    %v316 = vld [vmem:[%s2 + $0x878] sm:$0xff]
    %v317 = vld [vmem:[%s2 + $0x880] sm:$0xff]
    %v318 = vld [vmem:[%s2 + $0x888] sm:$0xff]
    %v319 = vld [vmem:[%s2 + $0x890] sm:$0xff]
    %v320 = vld [vmem:[%s2 + $0x898] sm:$0xff]
    %v321 = vld [vmem:[%s2 + $0x8a0] sm:$0xff]
    %v322 = vld [vmem:[%s2 + $0x8a8] sm:$0xff]
    %v323 = vld [vmem:[%s2 + $0x8b0] sm:$0xff]
    %v324 = vld [vmem:[%s2 + $0x8b8] sm:$0xff]
    %v325 = vld [vmem:[%s2 + $0x8c0] sm:$0xff]
    %v326 = vld [vmem:[%s2 + $0x8c8] sm:$0xff]
    %v327 = vld [vmem:[%s2 + $0x8d0] sm:$0xff]
    %v328 = vld [vmem:[%s2 + $0x8d8] sm:$0xff]
    %v329 = vld [vmem:[%s2 + $0x8e0] sm:$0xff]
    %v330 = vld [vmem:[%s2 + $0x8e8] sm:$0xff]
    %v331 = vld [vmem:[%s2 + $0x8f0] sm:$0xff]
    %v332 = vld [vmem:[%s2 + $0x8f8] sm:$0xff]
    %v333 = vld [vmem:[%s2 + $0x900] sm:$0xff]
    %v334 = vld [vmem:[%s2 + $0x908] sm:$0xff]
    %v335 = vld [vmem:[%s2 + $0x910] sm:$0xff]
    %v336 = vld [vmem:[%s2 + $0x918] sm:$0xff]
    %v337 = vld [vmem:[%s2 + $0x920] sm:$0xff]
    %v338 = vld [vmem:[%s2 + $0x928] sm:$0xff]
    %v339 = vld [vmem:[%s2 + $0x930] sm:$0xff]
    %v340 = vld [vmem:[%s2 + $0x938] sm:$0xff]
    %v341 = vld [vmem:[%s2 + $0x940] sm:$0xff]
    %v342 = vld [vmem:[%s2 + $0x948] sm:$0xff]
    %v343 = vld [vmem:[%s2 + $0x950] sm:$0xff]
    %v344 = vld [vmem:[%s2 + $0x958] sm:$0xff]
    %v345 = vld [vmem:[%s2 + $0x960] sm:$0xff]
    %v346 = vld [vmem:[%s2 + $0x968] sm:$0xff]
    %v347 = vld [vmem:[%s2 + $0x970] sm:$0xff]
    %v348 = vld [vmem:[%s2 + $0x978] sm:$0xff]
    %v349 = vld [vmem:[%s2 + $0x980] sm:$0xff]
    %v350 = vld [vmem:[%s2 + $0x988] sm:$0xff]
    %v351 = vld [vmem:[%s2 + $0x990] sm:$0xff]
    %v352 = vld [vmem:[%s2 + $0x998] sm:$0xff]
    %v353 = vld [vmem:[%s2 + $0x9a0] sm:$0xff]
    %v354 = vld [vmem:[%s2 + $0x9a8] sm:$0xff]
    %v355 = vld [vmem:[%s2 + $0x9b0] sm:$0xff]
    %v356 = vld [vmem:[%s2 + $0x9b8] sm:$0xff]
    %v357 = vld [vmem:[%s2 + $0x9c0] sm:$0xff]
    %v358 = vld [vmem:[%s2 + $0x9c8] sm:$0xff]
    %v359 = vld [vmem:[%s2 + $0x9d0] sm:$0xff]
    %v360 = vld [vmem:[%s2 + $0x9d8] sm:$0xff]
    %v361 = vld [vmem:[%s2 + $0x9e0] sm:$0xff]
    %v362 = vld [vmem:[%s2 + $0x9e8] sm:$0xff]
    %v363 = vld [vmem:[%s2 + $0x9f0] sm:$0xff]
    %v364 = vld [vmem:[%s2 + $0x9f8] sm:$0xff]
    %v365 = vld [vmem:[%s2 + $0xa00] sm:$0xff]
    %v366 = vld [vmem:[%s2 + $0xa08] sm:$0xff]
    %v367 = vld [vmem:[%s2 + $0xa10] sm:$0xff]
    %v368 = vld [vmem:[%s2 + $0xa18] sm:$0xff]
    %v369 = vld [vmem:[%s2 + $0xa20] sm:$0xff]
    %v370 = vld [vmem:[%s2 + $0xa28] sm:$0xff]
    %v371 = vld [vmem:[%s2 + $0xa30] sm:$0xff]
    %v372 = vld [vmem:[%s2 + $0xa38] sm:$0xff]
    %v373 = vld [vmem:[%s2 + $0xa40] sm:$0xff]
    %v374 = vld [vmem:[%s2 + $0xa48] sm:$0xff]
    %v375 = vld [vmem:[%s2 + $0xa50] sm:$0xff]
    %v376 = vld [vmem:[%s2 + $0xa58] sm:$0xff]
    %v377 = vld [vmem:[%s2 + $0xa60] sm:$0xff]
    %v378 = vld [vmem:[%s2 + $0xa68] sm:$0xff]
    %v379 = vld [vmem:[%s2 + $0xa70] sm:$0xff]
    %v380 = vld [vmem:[%s2 + $0xa78] sm:$0xff]
    %v381 = vld [vmem:[%s2 + $0xa80] sm:$0xff]
    %v382 = vld [vmem:[%s2 + $0xa88] sm:$0xff]
    %v383 = vld [vmem:[%s2 + $0xa90] sm:$0xff]
    %v384 = vld [vmem:[%s2 + $0xa98] sm:$0xff]
    %v385 = vld [vmem:[%s2 + $0xaa0] sm:$0xff]
    %v386 = vld [vmem:[%s2 + $0xaa8] sm:$0xff]
    %v387 = vld [vmem:[%s2 + $0xab0] sm:$0xff]
    %v388 = vld [vmem:[%s2 + $0xab8] sm:$0xff]
    %v389 = vld [vmem:[%s2 + $0xac0] sm:$0xff]
    %v390 = vld [vmem:[%s2 + $0xac8] sm:$0xff]
    %v391 = vld [vmem:[%s2 + $0xad0] sm:$0xff]
    %v392 = vld [vmem:[%s2 + $0xad8] sm:$0xff]
    %v393 = vld [vmem:[%s2 + $0xae0] sm:$0xff]
    %v394 = vld [vmem:[%s2 + $0xae8] sm:$0xff]
    %v395 = vld [vmem:[%s2 + $0xaf0] sm:$0xff]
    %v396 = vld [vmem:[%s2 + $0xaf8] sm:$0xff]
    %v397 = vld [vmem:[%s2 + $0xb00] sm:$0xff]
    %v398 = vld [vmem:[%s2 + $0xb08] sm:$0xff]
    %v399 = vld [vmem:[%s2 + $0xb10] sm:$0xff]
    %v400 = vld [vmem:[%s2 + $0xb18] sm:$0xff]
    %v401 = vld [vmem:[%s2 + $0xb20] sm:$0xff]
    %v402 = vld [vmem:[%s2 + $0xb28] sm:$0xff]
    %v403 = vld [vmem:[%s2 + $0xb30] sm:$0xff]
    %v404 = vld [vmem:[%s2 + $0xb38] sm:$0xff]
    %v405 = vld [vmem:[%s2 + $0xb40] sm:$0xff]
    %v406 = vld [vmem:[%s2 + $0xb48] sm:$0xff]
    %v407 = vld [vmem:[%s2 + $0xb50] sm:$0xff]
    %v408 = vld [vmem:[%s2 + $0xb58] sm:$0xff]
    %v409 = vld [vmem:[%s2 + $0xb60] sm:$0xff]
    %v410 = vld [vmem:[%s2 + $0xb68] sm:$0xff]
    %v411 = vld [vmem:[%s2 + $0xb70] sm:$0xff]
    %v412 = vld [vmem:[%s2 + $0xb78] sm:$0xff]
    %v413 = vld [vmem:[%s2 + $0xb80] sm:$0xff]
    %v414 = vld [vmem:[%s2 + $0xb88] sm:$0xff]
    %v415 = vld [vmem:[%s2 + $0xb90] sm:$0xff]
    %v416 = vld [vmem:[%s2 + $0xb98] sm:$0xff]
    %v417 = vld [vmem:[%s2 + $0xba0] sm:$0xff]
    %v418 = vld [vmem:[%s2 + $0xba8] sm:$0xff]
    %v419 = vld [vmem:[%s2 + $0xbb0] sm:$0xff]
    %v420 = vld [vmem:[%s2 + $0xbb8] sm:$0xff]
    %v421 = vld [vmem:[%s2 + $0xbc0] sm:$0xff]
    %v422 = vld [vmem:[%s2 + $0xbc8] sm:$0xff]
    %v423 = vld [vmem:[%s2 + $0xbd0] sm:$0xff]
    %v424 = vld [vmem:[%s2 + $0xbd8] sm:$0xff]
    %v425 = vld [vmem:[%s2 + $0xbe0] sm:$0xff]
    %v426 = vld [vmem:[%s2 + $0xbe8] sm:$0xff]
    %v427 = vld [vmem:[%s2 + $0xbf0] sm:$0xff]
    %v428 = vld [vmem:[%s2 + $0xbf8] sm:$0xff]
    %v429 = vld [vmem:[%s2 + $0xc00] sm:$0xff]
    %v430 = vld [vmem:[%s2 + $0xc08] sm:$0xff]
    %v431 = vld [vmem:[%s2 + $0xc10] sm:$0xff]
    %v432 = vld [vmem:[%s2 + $0xc18] sm:$0xff]
    %v433 = vld [vmem:[%s2 + $0xc20] sm:$0xff]
    %v434 = vld [vmem:[%s2 + $0xc28] sm:$0xff]
    %v435 = vld [vmem:[%s2 + $0xc30] sm:$0xff]
    %v436 = vld [vmem:[%s2 + $0xc38] sm:$0xff]
    %v437 = vld [vmem:[%s3] sm:$0xf]
    %v439 = vlaneseq
    %v440 = vshrl.u32 %v439, 7
    %v441 = vsub.s32 0, %v440
    %v442 = vrot.slane %v437, %v441
    %v443 = vlaneseq
    %v444 = vshrl.u32 %v443, 7
    %v445 = vsub.s32 1, %v444
    %v446 = vrot.slane %v437, %v445
    %v447 = vlaneseq
    %v448 = vshrl.u32 %v447, 7
    %v449 = vsub.s32 2, %v448
    %v450 = vrot.slane %v437, %v449
    %v451 = vlaneseq
    %v452 = vshrl.u32 %v451, 7
    %v453 = vsub.s32 3, %v452
    %v454 = vrot.slane %v437, %v453
    %vm459 = vcmask 130048
    %v461 = vsel %vm459, %v44, 0
    %463 = vmatprep.subr.mxu0 %v46
    %464 = vmatpush1.msra.mxu0 %v45
    %465 = vmatprep.subr.mxu0 %v50
    %466 = vmatpush1.msra.mxu0 %v49
    %467 = vmatprep.subr.mxu0 %v54
    %468 = vmatpush1.msra.mxu0 %v53
    %469 = vmatprep.subr.mxu0 %v58
    %470 = vmatpush1.msra.mxu0 %v57
    %471 = vmatprep.subr.mxu0 %v62
    %472 = vmatpush1.msra.mxu0 %v61
    %473 = vmatprep.subr.mxu0 %v66
    %474 = vmatpush1.msra.mxu0 %v65
    %475 = vmatprep.subr.mxu0 %v70
    %476 = vmatpush1.msra.mxu0 %v69
    %477 = vmatprep.subr.mxu0 %v74
    %478 = vmatpush1.msra.mxu0 %v73
    %479 = vmatprep.subr.mxu0 %v78
    %480 = vmatpush1.msra.mxu0 %v77
    %481 = vmatprep.subr.mxu0 %v82
    %482 = vmatpush1.msra.mxu0 %v81
    %483 = vmatprep.subr.mxu0 %v86
    %484 = vmatpush1.msra.mxu0 %v85
    %485 = vmatprep.subr.mxu0 %v90
    %486 = vmatpush1.msra.mxu0 %v89
    %487 = vmatprep.subr.mxu0 %v94
    %488 = vmatpush1.msra.mxu0 %v93
    %489 = vmatprep.subr.mxu0 %v98
    %490 = vmatpush1.msra.mxu0 %v97
    %491 = vmatprep.subr.mxu0 %v102
    %492 = vmatpush1.msra.mxu0 %v101
    %493 = vmatprep.subr.mxu0 %v106
    %494 = vmatpush1.msra.mxu0 %v105
    %495 = vmatprep.subr.mxu0 %v110
    %496 = vmatpush1.msra.mxu0 %v109
    %497 = vmatprep.subr.mxu0 %v114
    %498 = vmatpush1.msra.mxu0 %v113
    %499 = vmatprep.subr.mxu0 %v118
    %500 = vmatpush1.msra.mxu0 %v117
    %501 = vmatprep.subr.mxu0 %v122
    %502 = vmatpush1.msra.mxu0 %v121
    %503 = vmatprep.subr.mxu0 %v126
    %504 = vmatpush1.msra.mxu0 %v125
    %505 = vmatprep.subr.mxu0 %v130
    %506 = vmatpush1.msra.mxu0 %v129
    %507 = vmatprep.subr.mxu0 %v134
    %508 = vmatpush1.msra.mxu0 %v133
    %509 = vmatprep.subr.mxu0 %v138
    %510 = vmatpush1.msra.mxu0 %v137
    %511 = vmatprep.subr.mxu0 %v142
    %512 = vmatpush1.msra.mxu0 %v141
    %513 = vmatprep.subr.mxu0 %v146
    %514 = vmatpush1.msra.mxu0 %v145
    %515 = vmatprep.subr.mxu0 %v150
    %516 = vmatpush1.msra.mxu0 %v149
    %517 = vmatprep.subr.mxu0 %v154
    %518 = vmatpush1.msra.mxu0 %v153
    %519 = vmatprep.subr.mxu0 %v158
    %520 = vmatpush1.msra.mxu0 %v157
    %521 = vmatprep.subr.mxu0 %v162
    %522 = vmatpush1.msra.mxu0 %v161
    %523 = vmatprep.subr.mxu0 %v166
    %524 = vmatpush1.msra.mxu0 %v165
    %525 = vmatprep.subr.mxu0 %v170
    %526 = vmatpush1.msra.mxu0 %v169
    %527 = vmatprep.mubr.f32.mxu0 %v39
    %528 = vmatmul.mubr.f32.gmra.mrb[0].mxu0 %v38
    %v529 = vpop.f32.mrb[0].mxu0
    %v530 = vadd.f32 %v442, %v529
    %v531 = vpop.f32.mrb[0].mxu0
    %v532 = vadd.f32 %v446, %v531
    %533 = vdwg.mxu0
    %534 = vmatprep.subr.mxu0 %v174
    %535 = vmatpush1.msra.mxu0 %v173
    %536 = vmatprep.subr.mxu0 %v178
    %537 = vmatpush1.msra.mxu0 %v177
    %538 = vmatprep.subr.mxu0 %v182
    %539 = vmatpush1.msra.mxu0 %v181
    %540 = vmatprep.subr.mxu0 %v186
    %541 = vmatpush1.msra.mxu0 %v185
    %542 = vmatprep.subr.mxu0 %v190
    %543 = vmatpush1.msra.mxu0 %v189
    %544 = vmatprep.subr.mxu0 %v194
    %545 = vmatpush1.msra.mxu0 %v193
    %546 = vmatprep.subr.mxu0 %v198
    %547 = vmatpush1.msra.mxu0 %v197
    %548 = vmatprep.subr.mxu0 %v202
    %549 = vmatpush1.msra.mxu0 %v201
    %550 = vmatprep.subr.mxu0 %v206
    %551 = vmatpush1.msra.mxu0 %v205
    %552 = vmatprep.subr.mxu0 %v210
    %553 = vmatpush1.msra.mxu0 %v209
    %554 = vmatprep.subr.mxu0 %v214
    %555 = vmatpush1.msra.mxu0 %v213
    %556 = vmatprep.subr.mxu0 %v218
    %557 = vmatpush1.msra.mxu0 %v217
    %558 = vmatprep.subr.mxu0 %v222
    %559 = vmatpush1.msra.mxu0 %v221
    %560 = vmatprep.subr.mxu0 %v226
    %561 = vmatpush1.msra.mxu0 %v225
    %562 = vmatprep.subr.mxu0 %v230
    %563 = vmatpush1.msra.mxu0 %v229
    %564 = vmatprep.subr.mxu0 %v234
    %565 = vmatpush1.msra.mxu0 %v233
    %566 = vmatprep.subr.mxu0 %v238
    %567 = vmatpush1.msra.mxu0 %v237
    %568 = vmatprep.subr.mxu0 %v242
    %569 = vmatpush1.msra.mxu0 %v241
    %570 = vmatprep.subr.mxu0 %v246
    %571 = vmatpush1.msra.mxu0 %v245
    %572 = vmatprep.subr.mxu0 %v250
    %573 = vmatpush1.msra.mxu0 %v249
    %574 = vmatprep.subr.mxu0 %v254
    %575 = vmatpush1.msra.mxu0 %v253
    %576 = vmatprep.subr.mxu0 %v258
    %577 = vmatpush1.msra.mxu0 %v257
    %578 = vmatprep.subr.mxu0 %v262
    %579 = vmatpush1.msra.mxu0 %v261
    %580 = vmatprep.subr.mxu0 %v266
    %581 = vmatpush1.msra.mxu0 %v265
    %582 = vmatprep.subr.mxu0 %v270
    %583 = vmatpush1.msra.mxu0 %v269
    %584 = vmatprep.subr.mxu0 %v274
    %585 = vmatpush1.msra.mxu0 %v273
    %586 = vmatprep.subr.mxu0 %v278
    %587 = vmatpush1.msra.mxu0 %v277
    %588 = vmatprep.subr.mxu0 %v282
    %589 = vmatpush1.msra.mxu0 %v281
    %590 = vmatprep.subr.mxu0 %v286
    %591 = vmatpush1.msra.mxu0 %v285
    %592 = vmatprep.subr.mxu0 %v290
    %593 = vmatpush1.msra.mxu0 %v289
    %594 = vmatprep.subr.mxu0 %v294
    %595 = vmatpush1.msra.mxu0 %v293
    %596 = vmatprep.subr.mxu0 %v298
    %597 = vmatpush1.msra.mxu0 %v297
    %598 = vmatprep.mubr.f32.mxu0 %v41
    %599 = vmatmul.mubr.f32.gmra.mrb[0].mxu0 %v40
    %v600 = vpop.f32.mrb[0].mxu0
    %v601 = vadd.f32 %v530, %v600
    %v602 = vpop.f32.mrb[0].mxu0
    %v603 = vadd.f32 %v532, %v602
    %604 = vdwg.mxu0
    %605 = vmatprep.subr.mxu0 %v302
    %606 = vmatpush1.msra.mxu0 %v301
    %607 = vmatprep.subr.mxu0 %v306
    %608 = vmatpush1.msra.mxu0 %v305
    %609 = vmatprep.subr.mxu0 %v310
    %610 = vmatpush1.msra.mxu0 %v309
    %611 = vmatprep.subr.mxu0 %v314
    %612 = vmatpush1.msra.mxu0 %v313
    %613 = vmatprep.subr.mxu0 %v318
    %614 = vmatpush1.msra.mxu0 %v317
    %615 = vmatprep.subr.mxu0 %v322
    %616 = vmatpush1.msra.mxu0 %v321
    %617 = vmatprep.subr.mxu0 %v326
    %618 = vmatpush1.msra.mxu0 %v325
    %619 = vmatprep.subr.mxu0 %v330
    %620 = vmatpush1.msra.mxu0 %v329
    %621 = vmatprep.subr.mxu0 %v334
    %622 = vmatpush1.msra.mxu0 %v333
    %623 = vmatprep.subr.mxu0 %v338
    %624 = vmatpush1.msra.mxu0 %v337
    %625 = vmatprep.subr.mxu0 %v342
    %626 = vmatpush1.msra.mxu0 %v341
    %627 = vmatprep.subr.mxu0 %v346
    %628 = vmatpush1.msra.mxu0 %v345
    %629 = vmatprep.subr.mxu0 %v350
    %630 = vmatpush1.msra.mxu0 %v349
    %631 = vmatprep.subr.mxu0 %v354
    %632 = vmatpush1.msra.mxu0 %v353
    %633 = vmatprep.subr.mxu0 %v358
    %634 = vmatpush1.msra.mxu0 %v357
    %635 = vmatprep.subr.mxu0 %v362
    %636 = vmatpush1.msra.mxu0 %v361
    %637 = vmatprep.subr.mxu0 %v366
    %638 = vmatpush1.msra.mxu0 %v365
    %639 = vmatprep.subr.mxu0 %v370
    %640 = vmatpush1.msra.mxu0 %v369
    %641 = vmatprep.subr.mxu0 %v374
    %642 = vmatpush1.msra.mxu0 %v373
    %643 = vmatprep.subr.mxu0 %v378
    %644 = vmatpush1.msra.mxu0 %v377
    %645 = vmatprep.subr.mxu0 %v382
    %646 = vmatpush1.msra.mxu0 %v381
    %647 = vmatprep.subr.mxu0 %v386
    %648 = vmatpush1.msra.mxu0 %v385
    %649 = vmatprep.subr.mxu0 %v390
    %650 = vmatpush1.msra.mxu0 %v389
    %651 = vmatprep.subr.mxu0 %v394
    %652 = vmatpush1.msra.mxu0 %v393
    %653 = vmatprep.subr.mxu0 %v398
    %654 = vmatpush1.msra.mxu0 %v397
    %655 = vmatprep.subr.mxu0 %v402
    %656 = vmatpush1.msra.mxu0 %v401
    %657 = vmatprep.subr.mxu0 %v406
    %658 = vmatpush1.msra.mxu0 %v405
    %659 = vmatprep.subr.mxu0 %v410
    %660 = vmatpush1.msra.mxu0 %v409
    %661 = vmatprep.subr.mxu0 %v414
    %662 = vmatpush1.msra.mxu0 %v413
    %663 = vmatprep.subr.mxu0 %v418
    %664 = vmatpush1.msra.mxu0 %v417
    %665 = vmatprep.subr.mxu0 %v422
    %666 = vmatpush1.msra.mxu0 %v421
    %667 = vmatprep.subr.mxu0 %v426
    %668 = vmatpush1.msra.mxu0 %v425
    %669 = vmatprep.mubr.f32.mxu0 %v43
    %670 = vmatmul.mubr.f32.gmra.mrb[0].mxu0 %v42
    %v671 = vpop.f32.mrb[0].mxu0
    %v672 = vadd.f32 %v601, %v671
    %v673 = vpop.f32.mrb[0].mxu0
    %v674 = vadd.f32 %v603, %v673
    %675 = vdwg.mxu0
    %676 = vmatprep.subr.mxu0 %v430
    %677 = vmatpush1.msra.mxu0 %v429
    %678 = vmatprep.subr.mxu0 %v434
    %679 = vmatpush1.msra.mxu0 %v433
    %680 = vmatprep.subr.mxu0 0.0
    %681 = vmatpush1.msra.mxu0 0.0
    %682 = vmatprep.subr.mxu0 0.0
    %683 = vmatpush1.msra.mxu0 0.0
    %684 = vmatprep.subr.mxu0 0.0
    %685 = vmatpush1.msra.mxu0 0.0
    %686 = vmatprep.subr.mxu0 0.0
    %687 = vmatpush1.msra.mxu0 0.0
    %688 = vmatprep.subr.mxu0 0.0
    %689 = vmatpush1.msra.mxu0 0.0
    %690 = vmatprep.subr.mxu0 0.0
    %691 = vmatpush1.msra.mxu0 0.0
    %692 = vmatprep.subr.mxu0 0.0
    %693 = vmatpush1.msra.mxu0 0.0
    %694 = vmatprep.subr.mxu0 0.0
    %695 = vmatpush1.msra.mxu0 0.0
    %696 = vmatprep.subr.mxu0 0.0
    %697 = vmatpush1.msra.mxu0 0.0
    %698 = vmatprep.subr.mxu0 0.0
    %699 = vmatpush1.msra.mxu0 0.0
    %700 = vmatprep.subr.mxu0 0.0
    %701 = vmatpush1.msra.mxu0 0.0
    %702 = vmatprep.subr.mxu0 0.0
    %703 = vmatpush1.msra.mxu0 0.0
    %704 = vmatprep.subr.mxu0 0.0
    %705 = vmatpush1.msra.mxu0 0.0
    %706 = vmatprep.subr.mxu0 0.0
    %707 = vmatpush1.msra.mxu0 0.0
    %708 = vmatprep.subr.mxu0 0.0
    %709 = vmatpush1.msra.mxu0 0.0
    %710 = vmatprep.subr.mxu0 0.0
    %711 = vmatpush1.msra.mxu0 0.0
    %712 = vmatprep.subr.mxu0 0.0
    %713 = vmatpush1.msra.mxu0 0.0
    %714 = vmatprep.subr.mxu0 0.0
    %715 = vmatpush1.msra.mxu0 0.0
    %716 = vmatprep.subr.mxu0 0.0
    %717 = vmatpush1.msra.mxu0 0.0
    %718 = vmatprep.subr.mxu0 0.0
    %719 = vmatpush1.msra.mxu0 0.0
    %720 = vmatprep.subr.mxu0 0.0
    %721 = vmatpush1.msra.mxu0 0.0
    %722 = vmatprep.subr.mxu0 0.0
    %723 = vmatpush1.msra.mxu0 0.0
    %724 = vmatprep.subr.mxu0 0.0
    %725 = vmatpush1.msra.mxu0 0.0
    %726 = vmatprep.subr.mxu0 0.0
    %727 = vmatpush1.msra.mxu0 0.0
    %728 = vmatprep.subr.mxu0 0.0
    %729 = vmatpush1.msra.mxu0 0.0
    %730 = vmatprep.subr.mxu0 0.0
    %731 = vmatpush1.msra.mxu0 0.0
    %732 = vmatprep.subr.mxu0 0.0
    %733 = vmatpush1.msra.mxu0 0.0
    %734 = vmatprep.subr.mxu0 0.0
    %735 = vmatpush1.msra.mxu0 0.0
    %736 = vmatprep.subr.mxu0 0.0
    %737 = vmatpush1.msra.mxu0 0.0
    %738 = vmatprep.subr.mxu0 0.0
    %739 = vmatpush1.msra.mxu0 0.0
    %740 = vmatprep.mubr.f32.mxu0 0.0
    %741 = vmatmul.mubr.f32.gmra.mrb[0].mxu0 %v461
    %v742 = vpop.f32.mrb[0].mxu0
    %v743 = vadd.f32 %v672, %v742
    %v744 = vpop.f32.mrb[0].mxu0
    %v745 = vadd.f32 %v674, %v744
    %746 = vdwg.mxu0
    %747 = vmatprep.subr.mxu0 %v48
    %748 = vmatpush1.msra.mxu0 %v47
    %749 = vmatprep.subr.mxu0 %v52
    %750 = vmatpush1.msra.mxu0 %v51
    %751 = vmatprep.subr.mxu0 %v56
    %752 = vmatpush1.msra.mxu0 %v55
    %753 = vmatprep.subr.mxu0 %v60
    %754 = vmatpush1.msra.mxu0 %v59
    %755 = vmatprep.subr.mxu0 %v64
    %756 = vmatpush1.msra.mxu0 %v63
    %757 = vmatprep.subr.mxu0 %v68
    %758 = vmatpush1.msra.mxu0 %v67
    %759 = vmatprep.subr.mxu0 %v72
    %760 = vmatpush1.msra.mxu0 %v71
    %761 = vmatprep.subr.mxu0 %v76
    %762 = vmatpush1.msra.mxu0 %v75
    %763 = vmatprep.subr.mxu0 %v80
    %764 = vmatpush1.msra.mxu0 %v79
    %765 = vmatprep.subr.mxu0 %v84
    %766 = vmatpush1.msra.mxu0 %v83
    %767 = vmatprep.subr.mxu0 %v88
    %768 = vmatpush1.msra.mxu0 %v87
    %769 = vmatprep.subr.mxu0 %v92
    %770 = vmatpush1.msra.mxu0 %v91
    %771 = vmatprep.subr.mxu0 %v96
    %772 = vmatpush1.msra.mxu0 %v95
    %773 = vmatprep.subr.mxu0 %v100
    %774 = vmatpush1.msra.mxu0 %v99
    %775 = vmatprep.subr.mxu0 %v104
    %776 = vmatpush1.msra.mxu0 %v103
    %777 = vmatprep.subr.mxu0 %v108
    %778 = vmatpush1.msra.mxu0 %v107
    %779 = vmatprep.subr.mxu0 %v112
    %780 = vmatpush1.msra.mxu0 %v111
    %781 = vmatprep.subr.mxu0 %v116
    %782 = vmatpush1.msra.mxu0 %v115
    %783 = vmatprep.subr.mxu0 %v120
    %784 = vmatpush1.msra.mxu0 %v119
    %785 = vmatprep.subr.mxu0 %v124
    %786 = vmatpush1.msra.mxu0 %v123
    %787 = vmatprep.subr.mxu0 %v128
    %788 = vmatpush1.msra.mxu0 %v127
    %789 = vmatprep.subr.mxu0 %v132
    %790 = vmatpush1.msra.mxu0 %v131
    %791 = vmatprep.subr.mxu0 %v136
    %792 = vmatpush1.msra.mxu0 %v135
    %793 = vmatprep.subr.mxu0 %v140
    %794 = vmatpush1.msra.mxu0 %v139
    %795 = vmatprep.subr.mxu0 %v144
    %796 = vmatpush1.msra.mxu0 %v143
    %797 = vmatprep.subr.mxu0 %v148
    %798 = vmatpush1.msra.mxu0 %v147
    %799 = vmatprep.subr.mxu0 %v152
    %800 = vmatpush1.msra.mxu0 %v151
    %801 = vmatprep.subr.mxu0 %v156
    %802 = vmatpush1.msra.mxu0 %v155
    %803 = vmatprep.subr.mxu0 %v160
    %804 = vmatpush1.msra.mxu0 %v159
    %805 = vmatprep.subr.mxu0 %v164
    %806 = vmatpush1.msra.mxu0 %v163
    %807 = vmatprep.subr.mxu0 %v168
    %808 = vmatpush1.msra.mxu0 %v167
    %809 = vmatprep.subr.mxu0 %v172
    %810 = vmatpush1.msra.mxu0 %v171
    %811 = vmatprep.mubr.f32.mxu0 %v39
    %812 = vmatmul.mubr.f32.gmra.mrb[0].mxu0 %v38
    %v813 = vpop.f32.mrb[0].mxu0
    %v814 = vadd.f32 %v450, %v813
    %v815 = vpop.f32.mrb[0].mxu0
    %v816 = vadd.f32 %v454, %v815
    %817 = vdwg.mxu0
    %818 = vmatprep.subr.mxu0 %v176
    %819 = vmatpush1.msra.mxu0 %v175
    %820 = vmatprep.subr.mxu0 %v180
    %821 = vmatpush1.msra.mxu0 %v179
    %822 = vmatprep.subr.mxu0 %v184
    %823 = vmatpush1.msra.mxu0 %v183
    %824 = vmatprep.subr.mxu0 %v188
    %825 = vmatpush1.msra.mxu0 %v187
    %826 = vmatprep.subr.mxu0 %v192
    %827 = vmatpush1.msra.mxu0 %v191
    %828 = vmatprep.subr.mxu0 %v196
    %829 = vmatpush1.msra.mxu0 %v195
    %830 = vmatprep.subr.mxu0 %v200
    %831 = vmatpush1.msra.mxu0 %v199
    %832 = vmatprep.subr.mxu0 %v204
    %833 = vmatpush1.msra.mxu0 %v203
    %834 = vmatprep.subr.mxu0 %v208
    %835 = vmatpush1.msra.mxu0 %v207
    %836 = vmatprep.subr.mxu0 %v212
    %837 = vmatpush1.msra.mxu0 %v211
    %838 = vmatprep.subr.mxu0 %v216
    %839 = vmatpush1.msra.mxu0 %v215
    %840 = vmatprep.subr.mxu0 %v220
    %841 = vmatpush1.msra.mxu0 %v219
    %842 = vmatprep.subr.mxu0 %v224
    %843 = vmatpush1.msra.mxu0 %v223
    %844 = vmatprep.subr.mxu0 %v228
    %845 = vmatpush1.msra.mxu0 %v227
    %846 = vmatprep.subr.mxu0 %v232
    %847 = vmatpush1.msra.mxu0 %v231
    %848 = vmatprep.subr.mxu0 %v236
    %849 = vmatpush1.msra.mxu0 %v235
    %850 = vmatprep.subr.mxu0 %v240
    %851 = vmatpush1.msra.mxu0 %v239
    %852 = vmatprep.subr.mxu0 %v244
    %853 = vmatpush1.msra.mxu0 %v243
    %854 = vmatprep.subr.mxu0 %v248
    %855 = vmatpush1.msra.mxu0 %v247
    %856 = vmatprep.subr.mxu0 %v252
    %857 = vmatpush1.msra.mxu0 %v251
    %858 = vmatprep.subr.mxu0 %v256
    %859 = vmatpush1.msra.mxu0 %v255
    %860 = vmatprep.subr.mxu0 %v260
    %861 = vmatpush1.msra.mxu0 %v259
    %862 = vmatprep.subr.mxu0 %v264
    %863 = vmatpush1.msra.mxu0 %v263
    %864 = vmatprep.subr.mxu0 %v268
    %865 = vmatpush1.msra.mxu0 %v267
    %866 = vmatprep.subr.mxu0 %v272
    %867 = vmatpush1.msra.mxu0 %v271
    %868 = vmatprep.subr.mxu0 %v276
    %869 = vmatpush1.msra.mxu0 %v275
    %870 = vmatprep.subr.mxu0 %v280
    %871 = vmatpush1.msra.mxu0 %v279
    %872 = vmatprep.subr.mxu0 %v284
    %873 = vmatpush1.msra.mxu0 %v283
    %874 = vmatprep.subr.mxu0 %v288
    %875 = vmatpush1.msra.mxu0 %v287
    %876 = vmatprep.subr.mxu0 %v292
    %877 = vmatpush1.msra.mxu0 %v291
    %878 = vmatprep.subr.mxu0 %v296
    %879 = vmatpush1.msra.mxu0 %v295
    %880 = vmatprep.subr.mxu0 %v300
    %881 = vmatpush1.msra.mxu0 %v299
    %882 = vmatprep.mubr.f32.mxu0 %v41
    %883 = vmatmul.mubr.f32.gmra.mrb[0].mxu0 %v40
    %v884 = vpop.f32.mrb[0].mxu0
    %v885 = vadd.f32 %v814, %v884
    %v886 = vpop.f32.mrb[0].mxu0
    %v887 = vadd.f32 %v816, %v886
    %888 = vdwg.mxu0
    %889 = vmatprep.subr.mxu0 %v304
    %890 = vmatpush1.msra.mxu0 %v303
    %891 = vmatprep.subr.mxu0 %v308
    %892 = vmatpush1.msra.mxu0 %v307
    %893 = vmatprep.subr.mxu0 %v312
    %894 = vmatpush1.msra.mxu0 %v311
    %895 = vmatprep.subr.mxu0 %v316
    %896 = vmatpush1.msra.mxu0 %v315
    %897 = vmatprep.subr.mxu0 %v320
    %898 = vmatpush1.msra.mxu0 %v319
    %899 = vmatprep.subr.mxu0 %v324
    %900 = vmatpush1.msra.mxu0 %v323
    %901 = vmatprep.subr.mxu0 %v328
    %902 = vmatpush1.msra.mxu0 %v327
    %903 = vmatprep.subr.mxu0 %v332
    %904 = vmatpush1.msra.mxu0 %v331
    %905 = vmatprep.subr.mxu0 %v336
    %906 = vmatpush1.msra.mxu0 %v335
    %907 = vmatprep.subr.mxu0 %v340
    %908 = vmatpush1.msra.mxu0 %v339
    %909 = vmatprep.subr.mxu0 %v344
    %910 = vmatpush1.msra.mxu0 %v343
    %911 = vmatprep.subr.mxu0 %v348
    %912 = vmatpush1.msra.mxu0 %v347
    %913 = vmatprep.subr.mxu0 %v352
    %914 = vmatpush1.msra.mxu0 %v351
    %915 = vmatprep.subr.mxu0 %v356
    %916 = vmatpush1.msra.mxu0 %v355
    %917 = vmatprep.subr.mxu0 %v360
    %918 = vmatpush1.msra.mxu0 %v359
    %919 = vmatprep.subr.mxu0 %v364
    %920 = vmatpush1.msra.mxu0 %v363
    %921 = vmatprep.subr.mxu0 %v368
    %922 = vmatpush1.msra.mxu0 %v367
    %923 = vmatprep.subr.mxu0 %v372
    %924 = vmatpush1.msra.mxu0 %v371
    %925 = vmatprep.subr.mxu0 %v376
    %926 = vmatpush1.msra.mxu0 %v375
    %927 = vmatprep.subr.mxu0 %v380
    %928 = vmatpush1.msra.mxu0 %v379
    %929 = vmatprep.subr.mxu0 %v384
    %930 = vmatpush1.msra.mxu0 %v383
    %931 = vmatprep.subr.mxu0 %v388
    %932 = vmatpush1.msra.mxu0 %v387
    %933 = vmatprep.subr.mxu0 %v392
    %934 = vmatpush1.msra.mxu0 %v391
    %935 = vmatprep.subr.mxu0 %v396
    %936 = vmatpush1.msra.mxu0 %v395
    %937 = vmatprep.subr.mxu0 %v400
    %938 = vmatpush1.msra.mxu0 %v399
    %939 = vmatprep.subr.mxu0 %v404
    %940 = vmatpush1.msra.mxu0 %v403
    %941 = vmatprep.subr.mxu0 %v408
    %942 = vmatpush1.msra.mxu0 %v407
    %943 = vmatprep.subr.mxu0 %v412
    %944 = vmatpush1.msra.mxu0 %v411
    %945 = vmatprep.subr.mxu0 %v416
    %946 = vmatpush1.msra.mxu0 %v415
    %947 = vmatprep.subr.mxu0 %v420
    %948 = vmatpush1.msra.mxu0 %v419
    %949 = vmatprep.subr.mxu0 %v424
    %950 = vmatpush1.msra.mxu0 %v423
    %951 = vmatprep.subr.mxu0 %v428
    %952 = vmatpush1.msra.mxu0 %v427
    %953 = vmatprep.mubr.f32.mxu0 %v43
    %954 = vmatmul.mubr.f32.gmra.mrb[0].mxu0 %v42
    %v955 = vpop.f32.mrb[0].mxu0
    %v956 = vadd.f32 %v885, %v955
    %v957 = vpop.f32.mrb[0].mxu0
    %v958 = vadd.f32 %v887, %v957
    %959 = vdwg.mxu0
    %960 = vmatprep.subr.mxu0 %v432
    %961 = vmatpush1.msra.mxu0 %v431
    %962 = vmatprep.subr.mxu0 %v436
    %963 = vmatpush1.msra.mxu0 %v435
    %964 = vmatprep.subr.mxu0 0.0
    %965 = vmatpush1.msra.mxu0 0.0
    %966 = vmatprep.subr.mxu0 0.0
    %967 = vmatpush1.msra.mxu0 0.0
    %968 = vmatprep.subr.mxu0 0.0
    %969 = vmatpush1.msra.mxu0 0.0
    %970 = vmatprep.subr.mxu0 0.0
    %971 = vmatpush1.msra.mxu0 0.0
    %972 = vmatprep.subr.mxu0 0.0
    %973 = vmatpush1.msra.mxu0 0.0
    %974 = vmatprep.subr.mxu0 0.0
    %975 = vmatpush1.msra.mxu0 0.0
    %976 = vmatprep.subr.mxu0 0.0
    %977 = vmatpush1.msra.mxu0 0.0
    %978 = vmatprep.subr.mxu0 0.0
    %979 = vmatpush1.msra.mxu0 0.0
    %980 = vmatprep.subr.mxu0 0.0
    %981 = vmatpush1.msra.mxu0 0.0
    %982 = vmatprep.subr.mxu0 0.0
    %983 = vmatpush1.msra.mxu0 0.0
    %984 = vmatprep.subr.mxu0 0.0
    %985 = vmatpush1.msra.mxu0 0.0
    %986 = vmatprep.subr.mxu0 0.0
    %987 = vmatpush1.msra.mxu0 0.0
    %988 = vmatprep.subr.mxu0 0.0
    %989 = vmatpush1.msra.mxu0 0.0
    %990 = vmatprep.subr.mxu0 0.0
    %991 = vmatpush1.msra.mxu0 0.0
    %992 = vmatprep.subr.mxu0 0.0
    %993 = vmatpush1.msra.mxu0 0.0
    %994 = vmatprep.subr.mxu0 0.0
    %995 = vmatpush1.msra.mxu0 0.0
    %996 = vmatprep.subr.mxu0 0.0
    %997 = vmatpush1.msra.mxu0 0.0
    %998 = vmatprep.subr.mxu0 0.0
    %999 = vmatpush1.msra.mxu0 0.0
    %1000 = vmatprep.subr.mxu0 0.0
    %1001 = vmatpush1.msra.mxu0 0.0
    %1002 = vmatprep.subr.mxu0 0.0
    %1003 = vmatpush1.msra.mxu0 0.0
    %1004 = vmatprep.subr.mxu0 0.0
    %1005 = vmatpush1.msra.mxu0 0.0
    %1006 = vmatprep.subr.mxu0 0.0
    %1007 = vmatpush1.msra.mxu0 0.0
    %1008 = vmatprep.subr.mxu0 0.0
    %1009 = vmatpush1.msra.mxu0 0.0
    %1010 = vmatprep.subr.mxu0 0.0
    %1011 = vmatpush1.msra.mxu0 0.0
    %1012 = vmatprep.subr.mxu0 0.0
    %1013 = vmatpush1.msra.mxu0 0.0
    %1014 = vmatprep.subr.mxu0 0.0
    %1015 = vmatpush1.msra.mxu0 0.0
    %1016 = vmatprep.subr.mxu0 0.0
    %1017 = vmatpush1.msra.mxu0 0.0
    %1018 = vmatprep.subr.mxu0 0.0
    %1019 = vmatpush1.msra.mxu0 0.0
    %1020 = vmatprep.subr.mxu0 0.0
    %1021 = vmatpush1.msra.mxu0 0.0
    %1022 = vmatprep.subr.mxu0 0.0
    %1023 = vmatpush1.msra.mxu0 0.0
    %1024 = vmatprep.mubr.f32.mxu0 0.0
    %1025 = vmatmul.mubr.f32.gmra.mrb[0].mxu0 %v461
    %v1026 = vpop.f32.mrb[0].mxu0
    %v1027 = vadd.f32 %v956, %v1026
    %v1028 = vpop.f32.mrb[0].mxu0
    %v1029 = vadd.f32 %v958, %v1028
    %1030 = vdwg.mxu0
    %v1031 = vmax.f32 %v743, 0.0
    %v1032 = vmax.f32 %v745, 0.0
    %v1033 = vmax.f32 %v1027, 0.0
    %v1034 = vmax.f32 %v1029, 0.0
    %v1035 = vld [vmem:[%s4] sm:$0xff]
    %v1036 = vld [vmem:[%s4 + $0x8] sm:$0xff]
    %v1037 = vld [vmem:[%s4 + $0x10] sm:$0xff]
    %v1038 = vld [vmem:[%s4 + $0x18] sm:$0xff]
    %v1039 = vld [vmem:[%s4 + $0x20] sm:$0xff]
    %v1040 = vld [vmem:[%s4 + $0x28] sm:$0xff]
    %v1041 = vld [vmem:[%s4 + $0x30] sm:$0xff]
    %v1042 = vld [vmem:[%s4 + $0x38] sm:$0xff]
    %v1043 = vld [vmem:[%s4 + $0x40] sm:$0xff]
    %v1044 = vld [vmem:[%s4 + $0x48] sm:$0xff]
    %v1045 = vld [vmem:[%s4 + $0x50] sm:$0xff]
    %v1046 = vld [vmem:[%s4 + $0x58] sm:$0xff]
    %v1047 = vld [vmem:[%s4 + $0x60] sm:$0xff]
    %v1048 = vld [vmem:[%s4 + $0x68] sm:$0xff]
    %v1049 = vld [vmem:[%s4 + $0x70] sm:$0xff]
    %v1050 = vld [vmem:[%s4 + $0x78] sm:$0xff]
    %v1051 = vld [vmem:[%s4 + $0x80] sm:$0xff]
    %v1052 = vld [vmem:[%s4 + $0x88] sm:$0xff]
    %v1053 = vld [vmem:[%s4 + $0x90] sm:$0xff]
    %v1054 = vld [vmem:[%s4 + $0x98] sm:$0xff]
    %v1055 = vld [vmem:[%s4 + $0xa0] sm:$0xff]
    %v1056 = vld [vmem:[%s4 + $0xa8] sm:$0xff]
    %v1057 = vld [vmem:[%s4 + $0xb0] sm:$0xff]
    %v1058 = vld [vmem:[%s4 + $0xb8] sm:$0xff]
    %v1059 = vld [vmem:[%s4 + $0xc0] sm:$0xff]
    %v1060 = vld [vmem:[%s4 + $0xc8] sm:$0xff]
    %v1061 = vld [vmem:[%s4 + $0xd0] sm:$0xff]
    %v1062 = vld [vmem:[%s4 + $0xd8] sm:$0xff]
    %v1063 = vld [vmem:[%s4 + $0xe0] sm:$0xff]
    %v1064 = vld [vmem:[%s4 + $0xe8] sm:$0xff]
    %v1065 = vld [vmem:[%s4 + $0xf0] sm:$0xff]
    %v1066 = vld [vmem:[%s4 + $0xf8] sm:$0xff]
    %v1067 = vld [vmem:[%s4 + $0x100] sm:$0xff]
    %v1068 = vld [vmem:[%s4 + $0x108] sm:$0xff]
    %v1069 = vld [vmem:[%s4 + $0x110] sm:$0xff]
    %v1070 = vld [vmem:[%s4 + $0x118] sm:$0xff]
    %v1071 = vld [vmem:[%s4 + $0x120] sm:$0xff]
    %v1072 = vld [vmem:[%s4 + $0x128] sm:$0xff]
    %v1073 = vld [vmem:[%s4 + $0x130] sm:$0xff]
    %v1074 = vld [vmem:[%s4 + $0x138] sm:$0xff]
    %v1075 = vld [vmem:[%s4 + $0x140] sm:$0xff]
    %v1076 = vld [vmem:[%s4 + $0x148] sm:$0xff]
    %v1077 = vld [vmem:[%s4 + $0x150] sm:$0xff]
    %v1078 = vld [vmem:[%s4 + $0x158] sm:$0xff]
    %v1079 = vld [vmem:[%s4 + $0x160] sm:$0xff]
    %v1080 = vld [vmem:[%s4 + $0x168] sm:$0xff]
    %v1081 = vld [vmem:[%s4 + $0x170] sm:$0xff]
    %v1082 = vld [vmem:[%s4 + $0x178] sm:$0xff]
    %v1083 = vld [vmem:[%s4 + $0x180] sm:$0xff]
    %v1084 = vld [vmem:[%s4 + $0x188] sm:$0xff]
    %v1085 = vld [vmem:[%s4 + $0x190] sm:$0xff]
    %v1086 = vld [vmem:[%s4 + $0x198] sm:$0xff]
    %v1087 = vld [vmem:[%s4 + $0x1a0] sm:$0xff]
    %v1088 = vld [vmem:[%s4 + $0x1a8] sm:$0xff]
    %v1089 = vld [vmem:[%s4 + $0x1b0] sm:$0xff]
    %v1090 = vld [vmem:[%s4 + $0x1b8] sm:$0xff]
    %v1091 = vld [vmem:[%s4 + $0x1c0] sm:$0xff]
    %v1092 = vld [vmem:[%s4 + $0x1c8] sm:$0xff]
    %v1093 = vld [vmem:[%s4 + $0x1d0] sm:$0xff]
    %v1094 = vld [vmem:[%s4 + $0x1d8] sm:$0xff]
    %v1095 = vld [vmem:[%s4 + $0x1e0] sm:$0xff]
    %v1096 = vld [vmem:[%s4 + $0x1e8] sm:$0xff]
    %v1097 = vld [vmem:[%s4 + $0x1f0] sm:$0xff]
    %v1098 = vld [vmem:[%s4 + $0x1f8] sm:$0xff]
    %v1099 = vld [vmem:[%s5] sm:$0x1]
    %v1101 = vlaneseq
    %v1102 = vshrl.u32 %v1101, 7
    %v1103 = vsub.s32 0, %v1102
    %v1104 = vrot.slane %v1099, %v1103
    %1106 = vmatprep.subr.mxu0 0.0
    %1107 = vmatpush1.msra.mxu0 %v1035
    %1108 = vmatprep.subr.mxu0 0.0
    %1109 = vmatpush1.msra.mxu0 %v1036
    %1110 = vmatprep.subr.mxu0 0.0
    %1111 = vmatpush1.msra.mxu0 %v1037
    %1112 = vmatprep.subr.mxu0 0.0
    %1113 = vmatpush1.msra.mxu0 %v1038
    %1114 = vmatprep.subr.mxu0 0.0
    %1115 = vmatpush1.msra.mxu0 %v1039
    %1116 = vmatprep.subr.mxu0 0.0
    %1117 = vmatpush1.msra.mxu0 %v1040
    %1118 = vmatprep.subr.mxu0 0.0
    %1119 = vmatpush1.msra.mxu0 %v1041
    %1120 = vmatprep.subr.mxu0 0.0
    %1121 = vmatpush1.msra.mxu0 %v1042
    %1122 = vmatprep.subr.mxu0 0.0
    %1123 = vmatpush1.msra.mxu0 %v1043
    %1124 = vmatprep.subr.mxu0 0.0
    %1125 = vmatpush1.msra.mxu0 %v1044
    %1126 = vmatprep.subr.mxu0 0.0
    %1127 = vmatpush1.msra.mxu0 %v1045
    %1128 = vmatprep.subr.mxu0 0.0
    %1129 = vmatpush1.msra.mxu0 %v1046
    %1130 = vmatprep.subr.mxu0 0.0
    %1131 = vmatpush1.msra.mxu0 %v1047
    %1132 = vmatprep.subr.mxu0 0.0
    %1133 = vmatpush1.msra.mxu0 %v1048
    %1134 = vmatprep.subr.mxu0 0.0
    %1135 = vmatpush1.msra.mxu0 %v1049
    %1136 = vmatprep.subr.mxu0 0.0
    %1137 = vmatpush1.msra.mxu0 %v1050
    %1138 = vmatprep.subr.mxu0 0.0
    %1139 = vmatpush1.msra.mxu0 %v1051
    %1140 = vmatprep.subr.mxu0 0.0
    %1141 = vmatpush1.msra.mxu0 %v1052
    %1142 = vmatprep.subr.mxu0 0.0
    %1143 = vmatpush1.msra.mxu0 %v1053
    %1144 = vmatprep.subr.mxu0 0.0
    %1145 = vmatpush1.msra.mxu0 %v1054
    %1146 = vmatprep.subr.mxu0 0.0
    %1147 = vmatpush1.msra.mxu0 %v1055
    %1148 = vmatprep.subr.mxu0 0.0
    %1149 = vmatpush1.msra.mxu0 %v1056
    %1150 = vmatprep.subr.mxu0 0.0
    %1151 = vmatpush1.msra.mxu0 %v1057
    %1152 = vmatprep.subr.mxu0 0.0
    %1153 = vmatpush1.msra.mxu0 %v1058
    %1154 = vmatprep.subr.mxu0 0.0
    %1155 = vmatpush1.msra.mxu0 %v1059
    %1156 = vmatprep.subr.mxu0 0.0
    %1157 = vmatpush1.msra.mxu0 %v1060
    %1158 = vmatprep.subr.mxu0 0.0
    %1159 = vmatpush1.msra.mxu0 %v1061
    %1160 = vmatprep.subr.mxu0 0.0
    %1161 = vmatpush1.msra.mxu0 %v1062
    %1162 = vmatprep.subr.mxu0 0.0
    %1163 = vmatpush1.msra.mxu0 %v1063
    %1164 = vmatprep.subr.mxu0 0.0
    %1165 = vmatpush1.msra.mxu0 %v1064
    %1166 = vmatprep.subr.mxu0 0.0
    %1167 = vmatpush1.msra.mxu0 %v1065
    %1168 = vmatprep.subr.mxu0 0.0
    %1169 = vmatpush1.msra.mxu0 %v1066
    %1170 = vmatprep.mubr.f32.mxu0 %v1032
    %1171 = vmatmul.mubr.f32.gmra.mrb[0].mxu0 %v1031
    %v1172 = vpop.f32.mrb[0].mxu0
    %v1173 = vadd.f32 %v1104, %v1172
    %v1174 = vpop.f32.mrb[0].mxu0
    %1175 = vdwg.mxu0
    %1176 = vmatprep.subr.mxu0 0.0
    %1177 = vmatpush1.msra.mxu0 %v1067
    %1178 = vmatprep.subr.mxu0 0.0
    %1179 = vmatpush1.msra.mxu0 %v1068
    %1180 = vmatprep.subr.mxu0 0.0
    %1181 = vmatpush1.msra.mxu0 %v1069
    %1182 = vmatprep.subr.mxu0 0.0
    %1183 = vmatpush1.msra.mxu0 %v1070
    %1184 = vmatprep.subr.mxu0 0.0
    %1185 = vmatpush1.msra.mxu0 %v1071
    %1186 = vmatprep.subr.mxu0 0.0
    %1187 = vmatpush1.msra.mxu0 %v1072
    %1188 = vmatprep.subr.mxu0 0.0
    %1189 = vmatpush1.msra.mxu0 %v1073
    %1190 = vmatprep.subr.mxu0 0.0
    %1191 = vmatpush1.msra.mxu0 %v1074
    %1192 = vmatprep.subr.mxu0 0.0
    %1193 = vmatpush1.msra.mxu0 %v1075
    %1194 = vmatprep.subr.mxu0 0.0
    %1195 = vmatpush1.msra.mxu0 %v1076
    %1196 = vmatprep.subr.mxu0 0.0
    %1197 = vmatpush1.msra.mxu0 %v1077
    %1198 = vmatprep.subr.mxu0 0.0
    %1199 = vmatpush1.msra.mxu0 %v1078
    %1200 = vmatprep.subr.mxu0 0.0
    %1201 = vmatpush1.msra.mxu0 %v1079
    %1202 = vmatprep.subr.mxu0 0.0
    %1203 = vmatpush1.msra.mxu0 %v1080
    %1204 = vmatprep.subr.mxu0 0.0
    %1205 = vmatpush1.msra.mxu0 %v1081
    %1206 = vmatprep.subr.mxu0 0.0
    %1207 = vmatpush1.msra.mxu0 %v1082
    %1208 = vmatprep.subr.mxu0 0.0
    %1209 = vmatpush1.msra.mxu0 %v1083
    %1210 = vmatprep.subr.mxu0 0.0
    %1211 = vmatpush1.msra.mxu0 %v1084
    %1212 = vmatprep.subr.mxu0 0.0
    %1213 = vmatpush1.msra.mxu0 %v1085
    %1214 = vmatprep.subr.mxu0 0.0
    %1215 = vmatpush1.msra.mxu0 %v1086
    %1216 = vmatprep.subr.mxu0 0.0
    %1217 = vmatpush1.msra.mxu0 %v1087
    %1218 = vmatprep.subr.mxu0 0.0
    %1219 = vmatpush1.msra.mxu0 %v1088
    %1220 = vmatprep.subr.mxu0 0.0
    %1221 = vmatpush1.msra.mxu0 %v1089
    %1222 = vmatprep.subr.mxu0 0.0
    %1223 = vmatpush1.msra.mxu0 %v1090
    %1224 = vmatprep.subr.mxu0 0.0
    %1225 = vmatpush1.msra.mxu0 %v1091
    %1226 = vmatprep.subr.mxu0 0.0
    %1227 = vmatpush1.msra.mxu0 %v1092
    %1228 = vmatprep.subr.mxu0 0.0
    %1229 = vmatpush1.msra.mxu0 %v1093
    %1230 = vmatprep.subr.mxu0 0.0
    %1231 = vmatpush1.msra.mxu0 %v1094
    %1232 = vmatprep.subr.mxu0 0.0
    %1233 = vmatpush1.msra.mxu0 %v1095
    %1234 = vmatprep.subr.mxu0 0.0
    %1235 = vmatpush1.msra.mxu0 %v1096
    %1236 = vmatprep.subr.mxu0 0.0
    %1237 = vmatpush1.msra.mxu0 %v1097
    %1238 = vmatprep.subr.mxu0 0.0
    %1239 = vmatpush1.msra.mxu0 %v1098
    %1240 = vmatprep.mubr.f32.mxu0 %v1034
    %1241 = vmatmul.mubr.f32.gmra.mrb[0].mxu0 %v1033
    %v1242 = vpop.f32.mrb[0].mxu0
    %v1243 = vadd.f32 %v1173, %v1242
    %v1244 = vpop.f32.mrb[0].mxu0
    %1245 = vdwg.mxu0
    %v1246 = vld [vmem:[%s1] sm:$0xff]
    %v1247 = vmul.f32 %v1243, 0.5
    %v1248 = vmul.f32 %v1247, 1.442695
    %v1249 = vpow.pop %v1248
    %1251 = vrot.lane.b32.xlu0 %v1249, 64
    %v1252 = vpop.permute.xlu0 %1251
    %v1254 = vmul.f32 %v1246, %v1252
    %v1255 = vadd.f32 %v1243, %v1254
    %v1256 = vld [vmem:[%s6] sm:$0xff]
    %v1257 = vld [vmem:[%s6 + $0x8] sm:$0xff]
    %v1258 = vld [vmem:[%s6 + $0x10] sm:$0xff]
    %v1259 = vld [vmem:[%s6 + $0x18] sm:$0xff]
    %v1260 = vld [vmem:[%s6 + $0x20] sm:$0xff]
    %v1261 = vld [vmem:[%s6 + $0x28] sm:$0xff]
    %v1262 = vld [vmem:[%s6 + $0x30] sm:$0xff]
    %v1263 = vld [vmem:[%s6 + $0x38] sm:$0xff]
    %v1264 = vld [vmem:[%s6 + $0x40] sm:$0xff]
    %v1265 = vld [vmem:[%s6 + $0x48] sm:$0xff]
    %v1266 = vld [vmem:[%s6 + $0x50] sm:$0xff]
    %v1267 = vld [vmem:[%s6 + $0x58] sm:$0xff]
    %v1268 = vld [vmem:[%s6 + $0x60] sm:$0xff]
    %v1269 = vld [vmem:[%s6 + $0x68] sm:$0xff]
    %v1270 = vld [vmem:[%s6 + $0x70] sm:$0xff]
    %v1271 = vld [vmem:[%s6 + $0x78] sm:$0xff]
    %v1272 = vld [vmem:[%s6 + $0x80] sm:$0xff]
    %v1273 = vld [vmem:[%s6 + $0x88] sm:$0xff]
    %v1274 = vld [vmem:[%s6 + $0x90] sm:$0xff]
    %v1275 = vld [vmem:[%s6 + $0x98] sm:$0xff]
    %v1276 = vld [vmem:[%s6 + $0xa0] sm:$0xff]
    %v1277 = vld [vmem:[%s6 + $0xa8] sm:$0xff]
    %v1278 = vld [vmem:[%s6 + $0xb0] sm:$0xff]
    %v1279 = vld [vmem:[%s6 + $0xb8] sm:$0xff]
    %v1280 = vld [vmem:[%s6 + $0xc0] sm:$0xff]
    %v1281 = vld [vmem:[%s6 + $0xc8] sm:$0xff]
    %v1282 = vld [vmem:[%s6 + $0xd0] sm:$0xff]
    %v1283 = vld [vmem:[%s6 + $0xd8] sm:$0xff]
    %v1284 = vld [vmem:[%s6 + $0xe0] sm:$0xff]
    %v1285 = vld [vmem:[%s6 + $0xe8] sm:$0xff]
    %v1286 = vld [vmem:[%s6 + $0xf0] sm:$0xff]
    %v1287 = vld [vmem:[%s6 + $0xf8] sm:$0xff]
    %v1288 = vld [vmem:[%s7] sm:$0xf]
    %v1290 = vlaneseq
    %v1291 = vshrl.u32 %v1290, 7
    %v1292 = vsub.s32 0, %v1291
    %v1293 = vrot.slane %v1288, %v1292
    %v1294 = vlaneseq
    %v1295 = vshrl.u32 %v1294, 7
    %v1296 = vsub.s32 1, %v1295
    %v1297 = vrot.slane %v1288, %v1296
    %v1298 = vlaneseq
    %v1299 = vshrl.u32 %v1298, 7
    %v1300 = vsub.s32 2, %v1299
    %v1301 = vrot.slane %v1288, %v1300
    %v1302 = vlaneseq
    %v1303 = vshrl.u32 %v1302, 7
    %v1304 = vsub.s32 3, %v1303
    %v1305 = vrot.slane %v1288, %v1304
    %vm1310 = vcmask 523264
    %v1312 = vsel %vm1310, %v1255, 0
    %1314 = vmatprep.subr.mxu0 %v1257
    %1315 = vmatpush1.msra.mxu0 %v1256
    %1316 = vmatprep.subr.mxu0 %v1261
    %1317 = vmatpush1.msra.mxu0 %v1260
    %1318 = vmatprep.subr.mxu0 %v1265
    %1319 = vmatpush1.msra.mxu0 %v1264
    %1320 = vmatprep.subr.mxu0 %v1269
    %1321 = vmatpush1.msra.mxu0 %v1268
    %1322 = vmatprep.subr.mxu0 %v1273
    %1323 = vmatpush1.msra.mxu0 %v1272
    %1324 = vmatprep.subr.mxu0 %v1277
    %1325 = vmatpush1.msra.mxu0 %v1276
    %1326 = vmatprep.subr.mxu0 %v1281
    %1327 = vmatpush1.msra.mxu0 %v1280
    %1328 = vmatprep.subr.mxu0 %v1285
    %1329 = vmatpush1.msra.mxu0 %v1284
    %1330 = vmatprep.subr.mxu0 0.0
    %1331 = vmatpush1.msra.mxu0 0.0
    %1332 = vmatprep.subr.mxu0 0.0
    %1333 = vmatpush1.msra.mxu0 0.0
    %1334 = vmatprep.subr.mxu0 0.0
    %1335 = vmatpush1.msra.mxu0 0.0
    %1336 = vmatprep.subr.mxu0 0.0
    %1337 = vmatpush1.msra.mxu0 0.0
    %1338 = vmatprep.subr.mxu0 0.0
    %1339 = vmatpush1.msra.mxu0 0.0
    %1340 = vmatprep.subr.mxu0 0.0
    %1341 = vmatpush1.msra.mxu0 0.0
    %1342 = vmatprep.subr.mxu0 0.0
    %1343 = vmatpush1.msra.mxu0 0.0
    %1344 = vmatprep.subr.mxu0 0.0
    %1345 = vmatpush1.msra.mxu0 0.0
    %1346 = vmatprep.subr.mxu0 0.0
    %1347 = vmatpush1.msra.mxu0 0.0
    %1348 = vmatprep.subr.mxu0 0.0
    %1349 = vmatpush1.msra.mxu0 0.0
    %1350 = vmatprep.subr.mxu0 0.0
    %1351 = vmatpush1.msra.mxu0 0.0
    %1352 = vmatprep.subr.mxu0 0.0
    %1353 = vmatpush1.msra.mxu0 0.0
    %1354 = vmatprep.subr.mxu0 0.0
    %1355 = vmatpush1.msra.mxu0 0.0
    %1356 = vmatprep.subr.mxu0 0.0
    %1357 = vmatpush1.msra.mxu0 0.0
    %1358 = vmatprep.subr.mxu0 0.0
    %1359 = vmatpush1.msra.mxu0 0.0
    %1360 = vmatprep.subr.mxu0 0.0
    %1361 = vmatpush1.msra.mxu0 0.0
    %1362 = vmatprep.subr.mxu0 0.0
    %1363 = vmatpush1.msra.mxu0 0.0
    %1364 = vmatprep.subr.mxu0 0.0
    %1365 = vmatpush1.msra.mxu0 0.0
    %1366 = vmatprep.subr.mxu0 0.0
    %1367 = vmatpush1.msra.mxu0 0.0
    %1368 = vmatprep.subr.mxu0 0.0
    %1369 = vmatpush1.msra.mxu0 0.0
    %1370 = vmatprep.subr.mxu0 0.0
    %1371 = vmatpush1.msra.mxu0 0.0
    %1372 = vmatprep.subr.mxu0 0.0
    %1373 = vmatpush1.msra.mxu0 0.0
    %1374 = vmatprep.subr.mxu0 0.0
    %1375 = vmatpush1.msra.mxu0 0.0
    %1376 = vmatprep.subr.mxu0 0.0
    %1377 = vmatpush1.msra.mxu0 0.0
    %1378 = vmatprep.mubr.f32.mxu0 0.0
    %1379 = vmatmul.mubr.f32.gmra.mrb[0].mxu0 %v1312
    %v1380 = vpop.f32.mrb[0].mxu0
    %v1381 = vadd.f32 %v1293, %v1380
    %v1382 = vpop.f32.mrb[0].mxu0
    %v1383 = vadd.f32 %v1297, %v1382
    %1384 = vdwg.mxu0
    %1385 = vmatprep.subr.mxu0 %v1259
    %1386 = vmatpush1.msra.mxu0 %v1258
    %1387 = vmatprep.subr.mxu0 %v1263
    %1388 = vmatpush1.msra.mxu0 %v1262
    %1389 = vmatprep.subr.mxu0 %v1267
    %1390 = vmatpush1.msra.mxu0 %v1266
    %1391 = vmatprep.subr.mxu0 %v1271
    %1392 = vmatpush1.msra.mxu0 %v1270
    %1393 = vmatprep.subr.mxu0 %v1275
    %1394 = vmatpush1.msra.mxu0 %v1274
    %1395 = vmatprep.subr.mxu0 %v1279
    %1396 = vmatpush1.msra.mxu0 %v1278
    %1397 = vmatprep.subr.mxu0 %v1283
    %1398 = vmatpush1.msra.mxu0 %v1282
    %1399 = vmatprep.subr.mxu0 %v1287
    %1400 = vmatpush1.msra.mxu0 %v1286
    %1401 = vmatprep.subr.mxu0 0.0
    %1402 = vmatpush1.msra.mxu0 0.0
    %1403 = vmatprep.subr.mxu0 0.0
    %1404 = vmatpush1.msra.mxu0 0.0
    %1405 = vmatprep.subr.mxu0 0.0
    %1406 = vmatpush1.msra.mxu0 0.0
    %1407 = vmatprep.subr.mxu0 0.0
    %1408 = vmatpush1.msra.mxu0 0.0
    %1409 = vmatprep.subr.mxu0 0.0
    %1410 = vmatpush1.msra.mxu0 0.0
    %1411 = vmatprep.subr.mxu0 0.0
    %1412 = vmatpush1.msra.mxu0 0.0
    %1413 = vmatprep.subr.mxu0 0.0
    %1414 = vmatpush1.msra.mxu0 0.0
    %1415 = vmatprep.subr.mxu0 0.0
    %1416 = vmatpush1.msra.mxu0 0.0
    %1417 = vmatprep.subr.mxu0 0.0
    %1418 = vmatpush1.msra.mxu0 0.0
    %1419 = vmatprep.subr.mxu0 0.0
    %1420 = vmatpush1.msra.mxu0 0.0
    %1421 = vmatprep.subr.mxu0 0.0
    %1422 = vmatpush1.msra.mxu0 0.0
    %1423 = vmatprep.subr.mxu0 0.0
    %1424 = vmatpush1.msra.mxu0 0.0
    %1425 = vmatprep.subr.mxu0 0.0
    %1426 = vmatpush1.msra.mxu0 0.0
    %1427 = vmatprep.subr.mxu0 0.0
    %1428 = vmatpush1.msra.mxu0 0.0
    %1429 = vmatprep.subr.mxu0 0.0
    %1430 = vmatpush1.msra.mxu0 0.0
    %1431 = vmatprep.subr.mxu0 0.0
    %1432 = vmatpush1.msra.mxu0 0.0
    %1433 = vmatprep.subr.mxu0 0.0
    %1434 = vmatpush1.msra.mxu0 0.0
    %1435 = vmatprep.subr.mxu0 0.0
    %1436 = vmatpush1.msra.mxu0 0.0
    %1437 = vmatprep.subr.mxu0 0.0
    %1438 = vmatpush1.msra.mxu0 0.0
    %1439 = vmatprep.subr.mxu0 0.0
    %1440 = vmatpush1.msra.mxu0 0.0
    %1441 = vmatprep.subr.mxu0 0.0
    %1442 = vmatpush1.msra.mxu0 0.0
    %1443 = vmatprep.subr.mxu0 0.0
    %1444 = vmatpush1.msra.mxu0 0.0
    %1445 = vmatprep.subr.mxu0 0.0
    %1446 = vmatpush1.msra.mxu0 0.0
    %1447 = vmatprep.subr.mxu0 0.0
    %1448 = vmatpush1.msra.mxu0 0.0
    %1449 = vmatprep.mubr.f32.mxu0 0.0
    %1450 = vmatmul.mubr.f32.gmra.mrb[0].mxu0 %v1312
    %v1451 = vpop.f32.mrb[0].mxu0
    %v1452 = vadd.f32 %v1301, %v1451
    %v1453 = vpop.f32.mrb[0].mxu0
    %v1454 = vadd.f32 %v1305, %v1453
    %1455 = vdwg.mxu0
    %v1456 = vmax.f32 %v1381, 0.0
    %v1457 = vmax.f32 %v1383, 0.0
    %v1458 = vmax.f32 %v1452, 0.0
    %v1459 = vmax.f32 %v1454, 0.0
    %v1460 = vld [vmem:[%s8] sm:$0xff]
    %v1461 = vld [vmem:[%s8 + $0x8] sm:$0xff]
    %v1462 = vld [vmem:[%s8 + $0x10] sm:$0xff]
    %v1463 = vld [vmem:[%s8 + $0x18] sm:$0xff]
    %v1464 = vld [vmem:[%s8 + $0x20] sm:$0xff]
    %v1465 = vld [vmem:[%s8 + $0x28] sm:$0xff]
    %v1466 = vld [vmem:[%s8 + $0x30] sm:$0xff]
    %v1467 = vld [vmem:[%s8 + $0x38] sm:$0xff]
    %v1468 = vld [vmem:[%s8 + $0x40] sm:$0xff]
    %v1469 = vld [vmem:[%s8 + $0x48] sm:$0xff]
    %v1470 = vld [vmem:[%s8 + $0x50] sm:$0xff]
    %v1471 = vld [vmem:[%s8 + $0x58] sm:$0xff]
    %v1472 = vld [vmem:[%s8 + $0x60] sm:$0xff]
    %v1473 = vld [vmem:[%s8 + $0x68] sm:$0xff]
    %v1474 = vld [vmem:[%s8 + $0x70] sm:$0xff]
    %v1475 = vld [vmem:[%s8 + $0x78] sm:$0xff]
    %v1476 = vld [vmem:[%s8 + $0x80] sm:$0xff]
    %v1477 = vld [vmem:[%s8 + $0x88] sm:$0xff]
    %v1478 = vld [vmem:[%s8 + $0x90] sm:$0xff]
    %v1479 = vld [vmem:[%s8 + $0x98] sm:$0xff]
    %v1480 = vld [vmem:[%s8 + $0xa0] sm:$0xff]
    %v1481 = vld [vmem:[%s8 + $0xa8] sm:$0xff]
    %v1482 = vld [vmem:[%s8 + $0xb0] sm:$0xff]
    %v1483 = vld [vmem:[%s8 + $0xb8] sm:$0xff]
    %v1484 = vld [vmem:[%s8 + $0xc0] sm:$0xff]
    %v1485 = vld [vmem:[%s8 + $0xc8] sm:$0xff]
    %v1486 = vld [vmem:[%s8 + $0xd0] sm:$0xff]
    %v1487 = vld [vmem:[%s8 + $0xd8] sm:$0xff]
    %v1488 = vld [vmem:[%s8 + $0xe0] sm:$0xff]
    %v1489 = vld [vmem:[%s8 + $0xe8] sm:$0xff]
    %v1490 = vld [vmem:[%s8 + $0xf0] sm:$0xff]
    %v1491 = vld [vmem:[%s8 + $0xf8] sm:$0xff]
    %v1492 = vld [vmem:[%s8 + $0x100] sm:$0xff]
    %v1493 = vld [vmem:[%s8 + $0x108] sm:$0xff]
    %v1494 = vld [vmem:[%s8 + $0x110] sm:$0xff]
    %v1495 = vld [vmem:[%s8 + $0x118] sm:$0xff]
    %v1496 = vld [vmem:[%s8 + $0x120] sm:$0xff]
    %v1497 = vld [vmem:[%s8 + $0x128] sm:$0xff]
    %v1498 = vld [vmem:[%s8 + $0x130] sm:$0xff]
    %v1499 = vld [vmem:[%s8 + $0x138] sm:$0xff]
    %v1500 = vld [vmem:[%s8 + $0x140] sm:$0xff]
    %v1501 = vld [vmem:[%s8 + $0x148] sm:$0xff]
    %v1502 = vld [vmem:[%s8 + $0x150] sm:$0xff]
    %v1503 = vld [vmem:[%s8 + $0x158] sm:$0xff]
    %v1504 = vld [vmem:[%s8 + $0x160] sm:$0xff]
    %v1505 = vld [vmem:[%s8 + $0x168] sm:$0xff]
    %v1506 = vld [vmem:[%s8 + $0x170] sm:$0xff]
    %v1507 = vld [vmem:[%s8 + $0x178] sm:$0xff]
    %v1508 = vld [vmem:[%s8 + $0x180] sm:$0xff]
    %v1509 = vld [vmem:[%s8 + $0x188] sm:$0xff]
    %v1510 = vld [vmem:[%s8 + $0x190] sm:$0xff]
    %v1511 = vld [vmem:[%s8 + $0x198] sm:$0xff]
    %v1512 = vld [vmem:[%s8 + $0x1a0] sm:$0xff]
    %v1513 = vld [vmem:[%s8 + $0x1a8] sm:$0xff]
    %v1514 = vld [vmem:[%s8 + $0x1b0] sm:$0xff]
    %v1515 = vld [vmem:[%s8 + $0x1b8] sm:$0xff]
    %v1516 = vld [vmem:[%s8 + $0x1c0] sm:$0xff]
    %v1517 = vld [vmem:[%s8 + $0x1c8] sm:$0xff]
    %v1518 = vld [vmem:[%s8 + $0x1d0] sm:$0xff]
    %v1519 = vld [vmem:[%s8 + $0x1d8] sm:$0xff]
    %v1520 = vld [vmem:[%s8 + $0x1e0] sm:$0xff]
    %v1521 = vld [vmem:[%s8 + $0x1e8] sm:$0xff]
    %v1522 = vld [vmem:[%s8 + $0x1f0] sm:$0xff]
    %v1523 = vld [vmem:[%s8 + $0x1f8] sm:$0xff]
    %v1524 = vld [vmem:[%s8 + $0x200] sm:$0xff]
    %v1525 = vld [vmem:[%s8 + $0x208] sm:$0xff]
    %v1526 = vld [vmem:[%s8 + $0x210] sm:$0xff]
    %v1527 = vld [vmem:[%s8 + $0x218] sm:$0xff]
    %v1528 = vld [vmem:[%s8 + $0x220] sm:$0xff]
    %v1529 = vld [vmem:[%s8 + $0x228] sm:$0xff]
    %v1530 = vld [vmem:[%s8 + $0x230] sm:$0xff]
    %v1531 = vld [vmem:[%s8 + $0x238] sm:$0xff]
    %v1532 = vld [vmem:[%s8 + $0x240] sm:$0xff]
    %v1533 = vld [vmem:[%s8 + $0x248] sm:$0xff]
    %v1534 = vld [vmem:[%s8 + $0x250] sm:$0xff]
    %v1535 = vld [vmem:[%s8 + $0x258] sm:$0xff]
    %v1536 = vld [vmem:[%s8 + $0x260] sm:$0xff]
    %v1537 = vld [vmem:[%s8 + $0x268] sm:$0xff]
    %v1538 = vld [vmem:[%s8 + $0x270] sm:$0xff]
    %v1539 = vld [vmem:[%s8 + $0x278] sm:$0xff]
    %v1540 = vld [vmem:[%s8 + $0x280] sm:$0xff]
    %v1541 = vld [vmem:[%s8 + $0x288] sm:$0xff]
    %v1542 = vld [vmem:[%s8 + $0x290] sm:$0xff]
    %v1543 = vld [vmem:[%s8 + $0x298] sm:$0xff]
    %v1544 = vld [vmem:[%s8 + $0x2a0] sm:$0xff]
    %v1545 = vld [vmem:[%s8 + $0x2a8] sm:$0xff]
    %v1546 = vld [vmem:[%s8 + $0x2b0] sm:$0xff]
    %v1547 = vld [vmem:[%s8 + $0x2b8] sm:$0xff]
    %v1548 = vld [vmem:[%s8 + $0x2c0] sm:$0xff]
    %v1549 = vld [vmem:[%s8 + $0x2c8] sm:$0xff]
    %v1550 = vld [vmem:[%s8 + $0x2d0] sm:$0xff]
    %v1551 = vld [vmem:[%s8 + $0x2d8] sm:$0xff]
    %v1552 = vld [vmem:[%s8 + $0x2e0] sm:$0xff]
    %v1553 = vld [vmem:[%s8 + $0x2e8] sm:$0xff]
    %v1554 = vld [vmem:[%s8 + $0x2f0] sm:$0xff]
    %v1555 = vld [vmem:[%s8 + $0x2f8] sm:$0xff]
    %v1556 = vld [vmem:[%s8 + $0x300] sm:$0xff]
    %v1557 = vld [vmem:[%s8 + $0x308] sm:$0xff]
    %v1558 = vld [vmem:[%s8 + $0x310] sm:$0xff]
    %v1559 = vld [vmem:[%s8 + $0x318] sm:$0xff]
    %v1560 = vld [vmem:[%s8 + $0x320] sm:$0xff]
    %v1561 = vld [vmem:[%s8 + $0x328] sm:$0xff]
    %v1562 = vld [vmem:[%s8 + $0x330] sm:$0xff]
    %v1563 = vld [vmem:[%s8 + $0x338] sm:$0xff]
    %v1564 = vld [vmem:[%s8 + $0x340] sm:$0xff]
    %v1565 = vld [vmem:[%s8 + $0x348] sm:$0xff]
    %v1566 = vld [vmem:[%s8 + $0x350] sm:$0xff]
    %v1567 = vld [vmem:[%s8 + $0x358] sm:$0xff]
    %v1568 = vld [vmem:[%s8 + $0x360] sm:$0xff]
    %v1569 = vld [vmem:[%s8 + $0x368] sm:$0xff]
    %v1570 = vld [vmem:[%s8 + $0x370] sm:$0xff]
    %v1571 = vld [vmem:[%s8 + $0x378] sm:$0xff]
    %v1572 = vld [vmem:[%s8 + $0x380] sm:$0xff]
    %v1573 = vld [vmem:[%s8 + $0x388] sm:$0xff]
    %v1574 = vld [vmem:[%s8 + $0x390] sm:$0xff]
    %v1575 = vld [vmem:[%s8 + $0x398] sm:$0xff]
    %v1576 = vld [vmem:[%s8 + $0x3a0] sm:$0xff]
    %v1577 = vld [vmem:[%s8 + $0x3a8] sm:$0xff]
    %v1578 = vld [vmem:[%s8 + $0x3b0] sm:$0xff]
    %v1579 = vld [vmem:[%s8 + $0x3b8] sm:$0xff]
    %v1580 = vld [vmem:[%s8 + $0x3c0] sm:$0xff]
    %v1581 = vld [vmem:[%s8 + $0x3c8] sm:$0xff]
    %v1582 = vld [vmem:[%s8 + $0x3d0] sm:$0xff]
    %v1583 = vld [vmem:[%s8 + $0x3d8] sm:$0xff]
    %v1584 = vld [vmem:[%s8 + $0x3e0] sm:$0xff]
    %v1585 = vld [vmem:[%s8 + $0x3e8] sm:$0xff]
    %v1586 = vld [vmem:[%s8 + $0x3f0] sm:$0xff]
    %v1587 = vld [vmem:[%s8 + $0x3f8] sm:$0xff]
    %v1588 = vld [vmem:[%s8 + $0x400] sm:$0xff]
    %v1589 = vld [vmem:[%s8 + $0x408] sm:$0xff]
    %v1590 = vld [vmem:[%s8 + $0x410] sm:$0xff]
    %v1591 = vld [vmem:[%s8 + $0x418] sm:$0xff]
    %v1592 = vld [vmem:[%s8 + $0x420] sm:$0xff]
    %v1593 = vld [vmem:[%s8 + $0x428] sm:$0xff]
    %v1594 = vld [vmem:[%s8 + $0x430] sm:$0xff]
    %v1595 = vld [vmem:[%s8 + $0x438] sm:$0xff]
    %v1596 = vld [vmem:[%s8 + $0x440] sm:$0xff]
    %v1597 = vld [vmem:[%s8 + $0x448] sm:$0xff]
    %v1598 = vld [vmem:[%s8 + $0x450] sm:$0xff]
    %v1599 = vld [vmem:[%s8 + $0x458] sm:$0xff]
    %v1600 = vld [vmem:[%s8 + $0x460] sm:$0xff]
    %v1601 = vld [vmem:[%s8 + $0x468] sm:$0xff]
    %v1602 = vld [vmem:[%s8 + $0x470] sm:$0xff]
    %v1603 = vld [vmem:[%s8 + $0x478] sm:$0xff]
    %v1604 = vld [vmem:[%s8 + $0x480] sm:$0xff]
    %v1605 = vld [vmem:[%s8 + $0x488] sm:$0xff]
    %v1606 = vld [vmem:[%s8 + $0x490] sm:$0xff]
    %v1607 = vld [vmem:[%s8 + $0x498] sm:$0xff]
    %v1608 = vld [vmem:[%s8 + $0x4a0] sm:$0xff]
    %v1609 = vld [vmem:[%s8 + $0x4a8] sm:$0xff]
    %v1610 = vld [vmem:[%s8 + $0x4b0] sm:$0xff]
    %v1611 = vld [vmem:[%s8 + $0x4b8] sm:$0xff]
    %v1612 = vld [vmem:[%s8 + $0x4c0] sm:$0xff]
    %v1613 = vld [vmem:[%s8 + $0x4c8] sm:$0xff]
    %v1614 = vld [vmem:[%s8 + $0x4d0] sm:$0xff]
    %v1615 = vld [vmem:[%s8 + $0x4d8] sm:$0xff]
    %v1616 = vld [vmem:[%s8 + $0x4e0] sm:$0xff]
    %v1617 = vld [vmem:[%s8 + $0x4e8] sm:$0xff]
    %v1618 = vld [vmem:[%s8 + $0x4f0] sm:$0xff]
    %v1619 = vld [vmem:[%s8 + $0x4f8] sm:$0xff]
    %v1620 = vld [vmem:[%s8 + $0x500] sm:$0xff]
    %v1621 = vld [vmem:[%s8 + $0x508] sm:$0xff]
    %v1622 = vld [vmem:[%s8 + $0x510] sm:$0xff]
    %v1623 = vld [vmem:[%s8 + $0x518] sm:$0xff]
    %v1624 = vld [vmem:[%s8 + $0x520] sm:$0xff]
    %v1625 = vld [vmem:[%s8 + $0x528] sm:$0xff]
    %v1626 = vld [vmem:[%s8 + $0x530] sm:$0xff]
    %v1627 = vld [vmem:[%s8 + $0x538] sm:$0xff]
    %v1628 = vld [vmem:[%s8 + $0x540] sm:$0xff]
    %v1629 = vld [vmem:[%s8 + $0x548] sm:$0xff]
    %v1630 = vld [vmem:[%s8 + $0x550] sm:$0xff]
    %v1631 = vld [vmem:[%s8 + $0x558] sm:$0xff]
    %v1632 = vld [vmem:[%s8 + $0x560] sm:$0xff]
    %v1633 = vld [vmem:[%s8 + $0x568] sm:$0xff]
    %v1634 = vld [vmem:[%s8 + $0x570] sm:$0xff]
    %v1635 = vld [vmem:[%s8 + $0x578] sm:$0xff]
    %v1636 = vld [vmem:[%s8 + $0x580] sm:$0xff]
    %v1637 = vld [vmem:[%s8 + $0x588] sm:$0xff]
    %v1638 = vld [vmem:[%s8 + $0x590] sm:$0xff]
    %v1639 = vld [vmem:[%s8 + $0x598] sm:$0xff]
    %v1640 = vld [vmem:[%s8 + $0x5a0] sm:$0xff]
    %v1641 = vld [vmem:[%s8 + $0x5a8] sm:$0xff]
    %v1642 = vld [vmem:[%s8 + $0x5b0] sm:$0xff]
    %v1643 = vld [vmem:[%s8 + $0x5b8] sm:$0xff]
    %v1644 = vld [vmem:[%s8 + $0x5c0] sm:$0xff]
    %v1645 = vld [vmem:[%s8 + $0x5c8] sm:$0xff]
    %v1646 = vld [vmem:[%s8 + $0x5d0] sm:$0xff]
    %v1647 = vld [vmem:[%s8 + $0x5d8] sm:$0xff]
    %v1648 = vld [vmem:[%s8 + $0x5e0] sm:$0xff]
    %v1649 = vld [vmem:[%s8 + $0x5e8] sm:$0xff]
    %v1650 = vld [vmem:[%s8 + $0x5f0] sm:$0xff]
    %v1651 = vld [vmem:[%s8 + $0x5f8] sm:$0xff]
    %v1652 = vld [vmem:[%s8 + $0x600] sm:$0xff]
    %v1653 = vld [vmem:[%s8 + $0x608] sm:$0xff]
    %v1654 = vld [vmem:[%s8 + $0x610] sm:$0xff]
    %v1655 = vld [vmem:[%s8 + $0x618] sm:$0xff]
    %v1656 = vld [vmem:[%s8 + $0x620] sm:$0xff]
    %v1657 = vld [vmem:[%s8 + $0x628] sm:$0xff]
    %v1658 = vld [vmem:[%s8 + $0x630] sm:$0xff]
    %v1659 = vld [vmem:[%s8 + $0x638] sm:$0xff]
    %v1660 = vld [vmem:[%s8 + $0x640] sm:$0xff]
    %v1661 = vld [vmem:[%s8 + $0x648] sm:$0xff]
    %v1662 = vld [vmem:[%s8 + $0x650] sm:$0xff]
    %v1663 = vld [vmem:[%s8 + $0x658] sm:$0xff]
    %v1664 = vld [vmem:[%s8 + $0x660] sm:$0xff]
    %v1665 = vld [vmem:[%s8 + $0x668] sm:$0xff]
    %v1666 = vld [vmem:[%s8 + $0x670] sm:$0xff]
    %v1667 = vld [vmem:[%s8 + $0x678] sm:$0xff]
    %v1668 = vld [vmem:[%s8 + $0x680] sm:$0xff]
    %v1669 = vld [vmem:[%s8 + $0x688] sm:$0xff]
    %v1670 = vld [vmem:[%s8 + $0x690] sm:$0xff]
    %v1671 = vld [vmem:[%s8 + $0x698] sm:$0xff]
    %v1672 = vld [vmem:[%s8 + $0x6a0] sm:$0xff]
    %v1673 = vld [vmem:[%s8 + $0x6a8] sm:$0xff]
    %v1674 = vld [vmem:[%s8 + $0x6b0] sm:$0xff]
    %v1675 = vld [vmem:[%s8 + $0x6b8] sm:$0xff]
    %v1676 = vld [vmem:[%s8 + $0x6c0] sm:$0xff]
    %v1677 = vld [vmem:[%s8 + $0x6c8] sm:$0xff]
    %v1678 = vld [vmem:[%s8 + $0x6d0] sm:$0xff]
    %v1679 = vld [vmem:[%s8 + $0x6d8] sm:$0xff]
    %v1680 = vld [vmem:[%s8 + $0x6e0] sm:$0xff]
    %v1681 = vld [vmem:[%s8 + $0x6e8] sm:$0xff]
    %v1682 = vld [vmem:[%s8 + $0x6f0] sm:$0xff]
    %v1683 = vld [vmem:[%s8 + $0x6f8] sm:$0xff]
    %v1684 = vld [vmem:[%s8 + $0x700] sm:$0xff]
    %v1685 = vld [vmem:[%s8 + $0x708] sm:$0xff]
    %v1686 = vld [vmem:[%s8 + $0x710] sm:$0xff]
    %v1687 = vld [vmem:[%s8 + $0x718] sm:$0xff]
    %v1688 = vld [vmem:[%s8 + $0x720] sm:$0xff]
    %v1689 = vld [vmem:[%s8 + $0x728] sm:$0xff]
    %v1690 = vld [vmem:[%s8 + $0x730] sm:$0xff]
    %v1691 = vld [vmem:[%s8 + $0x738] sm:$0xff]
    %v1692 = vld [vmem:[%s8 + $0x740] sm:$0xff]
    %v1693 = vld [vmem:[%s8 + $0x748] sm:$0xff]
    %v1694 = vld [vmem:[%s8 + $0x750] sm:$0xff]
    %v1695 = vld [vmem:[%s8 + $0x758] sm:$0xff]
    %v1696 = vld [vmem:[%s8 + $0x760] sm:$0xff]
    %v1697 = vld [vmem:[%s8 + $0x768] sm:$0xff]
    %v1698 = vld [vmem:[%s8 + $0x770] sm:$0xff]
    %v1699 = vld [vmem:[%s8 + $0x778] sm:$0xff]
    %v1700 = vld [vmem:[%s8 + $0x780] sm:$0xff]
    %v1701 = vld [vmem:[%s8 + $0x788] sm:$0xff]
    %v1702 = vld [vmem:[%s8 + $0x790] sm:$0xff]
    %v1703 = vld [vmem:[%s8 + $0x798] sm:$0xff]
    %v1704 = vld [vmem:[%s8 + $0x7a0] sm:$0xff]
    %v1705 = vld [vmem:[%s8 + $0x7a8] sm:$0xff]
    %v1706 = vld [vmem:[%s8 + $0x7b0] sm:$0xff]
    %v1707 = vld [vmem:[%s8 + $0x7b8] sm:$0xff]
    %v1708 = vld [vmem:[%s8 + $0x7c0] sm:$0xff]
    %v1709 = vld [vmem:[%s8 + $0x7c8] sm:$0xff]
    %v1710 = vld [vmem:[%s8 + $0x7d0] sm:$0xff]
    %v1711 = vld [vmem:[%s8 + $0x7d8] sm:$0xff]
    %v1712 = vld [vmem:[%s8 + $0x7e0] sm:$0xff]
    %v1713 = vld [vmem:[%s8 + $0x7e8] sm:$0xff]
    %v1714 = vld [vmem:[%s8 + $0x7f0] sm:$0xff]
    %v1715 = vld [vmem:[%s8 + $0x7f8] sm:$0xff]
    %v1716 = vld [vmem:[%s8 + $0x800] sm:$0xff]
    %v1717 = vld [vmem:[%s8 + $0x808] sm:$0xff]
    %v1718 = vld [vmem:[%s8 + $0x810] sm:$0xff]
    %v1719 = vld [vmem:[%s8 + $0x818] sm:$0xff]
    %v1720 = vld [vmem:[%s8 + $0x820] sm:$0xff]
    %v1721 = vld [vmem:[%s8 + $0x828] sm:$0xff]
    %v1722 = vld [vmem:[%s8 + $0x830] sm:$0xff]
    %v1723 = vld [vmem:[%s8 + $0x838] sm:$0xff]
    %v1724 = vld [vmem:[%s8 + $0x840] sm:$0xff]
    %v1725 = vld [vmem:[%s8 + $0x848] sm:$0xff]
    %v1726 = vld [vmem:[%s8 + $0x850] sm:$0xff]
    %v1727 = vld [vmem:[%s8 + $0x858] sm:$0xff]
    %v1728 = vld [vmem:[%s8 + $0x860] sm:$0xff]
    %v1729 = vld [vmem:[%s8 + $0x868] sm:$0xff]
    %v1730 = vld [vmem:[%s8 + $0x870] sm:$0xff]
    %v1731 = vld [vmem:[%s8 + $0x878] sm:$0xff]
    %v1732 = vld [vmem:[%s8 + $0x880] sm:$0xff]
    %v1733 = vld [vmem:[%s8 + $0x888] sm:$0xff]
    %v1734 = vld [vmem:[%s8 + $0x890] sm:$0xff]
    %v1735 = vld [vmem:[%s8 + $0x898] sm:$0xff]
    %v1736 = vld [vmem:[%s8 + $0x8a0] sm:$0xff]
    %v1737 = vld [vmem:[%s8 + $0x8a8] sm:$0xff]
    %v1738 = vld [vmem:[%s8 + $0x8b0] sm:$0xff]
    %v1739 = vld [vmem:[%s8 + $0x8b8] sm:$0xff]
    %v1740 = vld [vmem:[%s8 + $0x8c0] sm:$0xff]
    %v1741 = vld [vmem:[%s8 + $0x8c8] sm:$0xff]
    %v1742 = vld [vmem:[%s8 + $0x8d0] sm:$0xff]
    %v1743 = vld [vmem:[%s8 + $0x8d8] sm:$0xff]
    %v1744 = vld [vmem:[%s8 + $0x8e0] sm:$0xff]
    %v1745 = vld [vmem:[%s8 + $0x8e8] sm:$0xff]
    %v1746 = vld [vmem:[%s8 + $0x8f0] sm:$0xff]
    %v1747 = vld [vmem:[%s8 + $0x8f8] sm:$0xff]
    %v1748 = vld [vmem:[%s8 + $0x900] sm:$0xff]
    %v1749 = vld [vmem:[%s8 + $0x908] sm:$0xff]
    %v1750 = vld [vmem:[%s8 + $0x910] sm:$0xff]
    %v1751 = vld [vmem:[%s8 + $0x918] sm:$0xff]
    %v1752 = vld [vmem:[%s8 + $0x920] sm:$0xff]
    %v1753 = vld [vmem:[%s8 + $0x928] sm:$0xff]
    %v1754 = vld [vmem:[%s8 + $0x930] sm:$0xff]
    %v1755 = vld [vmem:[%s8 + $0x938] sm:$0xff]
    %v1756 = vld [vmem:[%s8 + $0x940] sm:$0xff]
    %v1757 = vld [vmem:[%s8 + $0x948] sm:$0xff]
    %v1758 = vld [vmem:[%s8 + $0x950] sm:$0xff]
    %v1759 = vld [vmem:[%s8 + $0x958] sm:$0xff]
    %v1760 = vld [vmem:[%s8 + $0x960] sm:$0xff]
    %v1761 = vld [vmem:[%s8 + $0x968] sm:$0xff]
    %v1762 = vld [vmem:[%s8 + $0x970] sm:$0xff]
    %v1763 = vld [vmem:[%s8 + $0x978] sm:$0xff]
    %v1764 = vld [vmem:[%s8 + $0x980] sm:$0xff]
    %v1765 = vld [vmem:[%s8 + $0x988] sm:$0xff]
    %v1766 = vld [vmem:[%s8 + $0x990] sm:$0xff]
    %v1767 = vld [vmem:[%s8 + $0x998] sm:$0xff]
    %v1768 = vld [vmem:[%s8 + $0x9a0] sm:$0xff]
    %v1769 = vld [vmem:[%s8 + $0x9a8] sm:$0xff]
    %v1770 = vld [vmem:[%s8 + $0x9b0] sm:$0xff]
    %v1771 = vld [vmem:[%s8 + $0x9b8] sm:$0xff]
    %v1772 = vld [vmem:[%s8 + $0x9c0] sm:$0xff]
    %v1773 = vld [vmem:[%s8 + $0x9c8] sm:$0xff]
    %v1774 = vld [vmem:[%s8 + $0x9d0] sm:$0xff]
    %v1775 = vld [vmem:[%s8 + $0x9d8] sm:$0xff]
    %v1776 = vld [vmem:[%s8 + $0x9e0] sm:$0xff]
    %v1777 = vld [vmem:[%s8 + $0x9e8] sm:$0xff]
    %v1778 = vld [vmem:[%s8 + $0x9f0] sm:$0xff]
    %v1779 = vld [vmem:[%s8 + $0x9f8] sm:$0xff]
    %v1780 = vld [vmem:[%s8 + $0xa00] sm:$0xff]
    %v1781 = vld [vmem:[%s8 + $0xa08] sm:$0xff]
    %v1782 = vld [vmem:[%s8 + $0xa10] sm:$0xff]
    %v1783 = vld [vmem:[%s8 + $0xa18] sm:$0xff]
    %v1784 = vld [vmem:[%s8 + $0xa20] sm:$0xff]
    %v1785 = vld [vmem:[%s8 + $0xa28] sm:$0xff]
    %v1786 = vld [vmem:[%s8 + $0xa30] sm:$0xff]
    %v1787 = vld [vmem:[%s8 + $0xa38] sm:$0xff]
    %v1788 = vld [vmem:[%s8 + $0xa40] sm:$0xff]
    %v1789 = vld [vmem:[%s8 + $0xa48] sm:$0xff]
    %v1790 = vld [vmem:[%s8 + $0xa50] sm:$0xff]
    %v1791 = vld [vmem:[%s8 + $0xa58] sm:$0xff]
    %v1792 = vld [vmem:[%s8 + $0xa60] sm:$0xff]
    %v1793 = vld [vmem:[%s8 + $0xa68] sm:$0xff]
    %v1794 = vld [vmem:[%s8 + $0xa70] sm:$0xff]
    %v1795 = vld [vmem:[%s8 + $0xa78] sm:$0xff]
    %v1796 = vld [vmem:[%s8 + $0xa80] sm:$0xff]
    %v1797 = vld [vmem:[%s8 + $0xa88] sm:$0xff]
    %v1798 = vld [vmem:[%s8 + $0xa90] sm:$0xff]
    %v1799 = vld [vmem:[%s8 + $0xa98] sm:$0xff]
    %v1800 = vld [vmem:[%s8 + $0xaa0] sm:$0xff]
    %v1801 = vld [vmem:[%s8 + $0xaa8] sm:$0xff]
    %v1802 = vld [vmem:[%s8 + $0xab0] sm:$0xff]
    %v1803 = vld [vmem:[%s8 + $0xab8] sm:$0xff]
    %v1804 = vld [vmem:[%s8 + $0xac0] sm:$0xff]
    %v1805 = vld [vmem:[%s8 + $0xac8] sm:$0xff]
    %v1806 = vld [vmem:[%s8 + $0xad0] sm:$0xff]
    %v1807 = vld [vmem:[%s8 + $0xad8] sm:$0xff]
    %v1808 = vld [vmem:[%s8 + $0xae0] sm:$0xff]
    %v1809 = vld [vmem:[%s8 + $0xae8] sm:$0xff]
    %v1810 = vld [vmem:[%s8 + $0xaf0] sm:$0xff]
    %v1811 = vld [vmem:[%s8 + $0xaf8] sm:$0xff]
    %v1812 = vld [vmem:[%s8 + $0xb00] sm:$0xff]
    %v1813 = vld [vmem:[%s8 + $0xb08] sm:$0xff]
    %v1814 = vld [vmem:[%s8 + $0xb10] sm:$0xff]
    %v1815 = vld [vmem:[%s8 + $0xb18] sm:$0xff]
    %v1816 = vld [vmem:[%s8 + $0xb20] sm:$0xff]
    %v1817 = vld [vmem:[%s8 + $0xb28] sm:$0xff]
    %v1818 = vld [vmem:[%s8 + $0xb30] sm:$0xff]
    %v1819 = vld [vmem:[%s8 + $0xb38] sm:$0xff]
    %v1820 = vld [vmem:[%s8 + $0xb40] sm:$0xff]
    %v1821 = vld [vmem:[%s8 + $0xb48] sm:$0xff]
    %v1822 = vld [vmem:[%s8 + $0xb50] sm:$0xff]
    %v1823 = vld [vmem:[%s8 + $0xb58] sm:$0xff]
    %v1824 = vld [vmem:[%s8 + $0xb60] sm:$0xff]
    %v1825 = vld [vmem:[%s8 + $0xb68] sm:$0xff]
    %v1826 = vld [vmem:[%s8 + $0xb70] sm:$0xff]
    %v1827 = vld [vmem:[%s8 + $0xb78] sm:$0xff]
    %v1828 = vld [vmem:[%s8 + $0xb80] sm:$0xff]
    %v1829 = vld [vmem:[%s8 + $0xb88] sm:$0xff]
    %v1830 = vld [vmem:[%s8 + $0xb90] sm:$0xff]
    %v1831 = vld [vmem:[%s8 + $0xb98] sm:$0xff]
    %v1832 = vld [vmem:[%s8 + $0xba0] sm:$0xff]
    %v1833 = vld [vmem:[%s8 + $0xba8] sm:$0xff]
    %v1834 = vld [vmem:[%s8 + $0xbb0] sm:$0xff]
    %v1835 = vld [vmem:[%s8 + $0xbb8] sm:$0xff]
    %v1836 = vld [vmem:[%s8 + $0xbc0] sm:$0xff]
    %v1837 = vld [vmem:[%s8 + $0xbc8] sm:$0xff]
    %v1838 = vld [vmem:[%s8 + $0xbd0] sm:$0xff]
    %v1839 = vld [vmem:[%s8 + $0xbd8] sm:$0xff]
    %v1840 = vld [vmem:[%s8 + $0xbe0] sm:$0xff]
    %v1841 = vld [vmem:[%s8 + $0xbe8] sm:$0xff]
    %v1842 = vld [vmem:[%s8 + $0xbf0] sm:$0xff]
    %v1843 = vld [vmem:[%s8 + $0xbf8] sm:$0xff]
    %v1844 = vld [vmem:[%s8 + $0xc00] sm:$0xff]
    %v1845 = vld [vmem:[%s8 + $0xc08] sm:$0xff]
    %v1846 = vld [vmem:[%s8 + $0xc10] sm:$0xff]
    %v1847 = vld [vmem:[%s8 + $0xc18] sm:$0xff]
    %v1848 = vld [vmem:[%s8 + $0xc20] sm:$0xff]
    %v1849 = vld [vmem:[%s8 + $0xc28] sm:$0xff]
    %v1850 = vld [vmem:[%s8 + $0xc30] sm:$0xff]
    %v1851 = vld [vmem:[%s8 + $0xc38] sm:$0xff]
    %v1852 = vld [vmem:[%s8 + $0xc40] sm:$0xff]
    %v1853 = vld [vmem:[%s8 + $0xc48] sm:$0xff]
    %v1854 = vld [vmem:[%s8 + $0xc50] sm:$0xff]
    %v1855 = vld [vmem:[%s8 + $0xc58] sm:$0xff]
    %v1856 = vld [vmem:[%s8 + $0xc60] sm:$0xff]
    %v1857 = vld [vmem:[%s8 + $0xc68] sm:$0xff]
    %v1858 = vld [vmem:[%s8 + $0xc70] sm:$0xff]
    %v1859 = vld [vmem:[%s8 + $0xc78] sm:$0xff]
    %v1860 = vld [vmem:[%s8 + $0xc80] sm:$0xff]
    %v1861 = vld [vmem:[%s8 + $0xc88] sm:$0xff]
    %v1862 = vld [vmem:[%s8 + $0xc90] sm:$0xff]
    %v1863 = vld [vmem:[%s8 + $0xc98] sm:$0xff]
    %v1864 = vld [vmem:[%s8 + $0xca0] sm:$0xff]
    %v1865 = vld [vmem:[%s8 + $0xca8] sm:$0xff]
    %v1866 = vld [vmem:[%s8 + $0xcb0] sm:$0xff]
    %v1867 = vld [vmem:[%s8 + $0xcb8] sm:$0xff]
    %v1868 = vld [vmem:[%s8 + $0xcc0] sm:$0xff]
    %v1869 = vld [vmem:[%s8 + $0xcc8] sm:$0xff]
    %v1870 = vld [vmem:[%s8 + $0xcd0] sm:$0xff]
    %v1871 = vld [vmem:[%s8 + $0xcd8] sm:$0xff]
    %v1872 = vld [vmem:[%s8 + $0xce0] sm:$0xff]
    %v1873 = vld [vmem:[%s8 + $0xce8] sm:$0xff]
    %v1874 = vld [vmem:[%s8 + $0xcf0] sm:$0xff]
    %v1875 = vld [vmem:[%s8 + $0xcf8] sm:$0xff]
    %v1876 = vld [vmem:[%s8 + $0xd00] sm:$0xff]
    %v1877 = vld [vmem:[%s8 + $0xd08] sm:$0xff]
    %v1878 = vld [vmem:[%s8 + $0xd10] sm:$0xff]
    %v1879 = vld [vmem:[%s8 + $0xd18] sm:$0xff]
    %v1880 = vld [vmem:[%s8 + $0xd20] sm:$0xff]
    %v1881 = vld [vmem:[%s8 + $0xd28] sm:$0xff]
    %v1882 = vld [vmem:[%s8 + $0xd30] sm:$0xff]
    %v1883 = vld [vmem:[%s8 + $0xd38] sm:$0xff]
    %v1884 = vld [vmem:[%s8 + $0xd40] sm:$0xff]
    %v1885 = vld [vmem:[%s8 + $0xd48] sm:$0xff]
    %v1886 = vld [vmem:[%s8 + $0xd50] sm:$0xff]
    %v1887 = vld [vmem:[%s8 + $0xd58] sm:$0xff]
    %v1888 = vld [vmem:[%s8 + $0xd60] sm:$0xff]
    %v1889 = vld [vmem:[%s8 + $0xd68] sm:$0xff]
    %v1890 = vld [vmem:[%s8 + $0xd70] sm:$0xff]
    %v1891 = vld [vmem:[%s8 + $0xd78] sm:$0xff]
    %v1892 = vld [vmem:[%s8 + $0xd80] sm:$0xff]
    %v1893 = vld [vmem:[%s8 + $0xd88] sm:$0xff]
    %v1894 = vld [vmem:[%s8 + $0xd90] sm:$0xff]
    %v1895 = vld [vmem:[%s8 + $0xd98] sm:$0xff]
    %v1896 = vld [vmem:[%s8 + $0xda0] sm:$0xff]
    %v1897 = vld [vmem:[%s8 + $0xda8] sm:$0xff]
    %v1898 = vld [vmem:[%s8 + $0xdb0] sm:$0xff]
    %v1899 = vld [vmem:[%s8 + $0xdb8] sm:$0xff]
    %v1900 = vld [vmem:[%s8 + $0xdc0] sm:$0xff]
    %v1901 = vld [vmem:[%s8 + $0xdc8] sm:$0xff]
    %v1902 = vld [vmem:[%s8 + $0xdd0] sm:$0xff]
    %v1903 = vld [vmem:[%s8 + $0xdd8] sm:$0xff]
    %v1904 = vld [vmem:[%s8 + $0xde0] sm:$0xff]
    %v1905 = vld [vmem:[%s8 + $0xde8] sm:$0xff]
    %v1906 = vld [vmem:[%s8 + $0xdf0] sm:$0xff]
    %v1907 = vld [vmem:[%s8 + $0xdf8] sm:$0xff]
    %v1908 = vld [vmem:[%s9] sm:$0x7f]
    %v1910 = vlaneseq
    %v1911 = vshrl.u32 %v1910, 7
    %v1912 = vsub.s32 0, %v1911
    %v1913 = vrot.slane %v1908, %v1912
    %v1914 = vlaneseq
    %v1915 = vshrl.u32 %v1914, 7
    %v1916 = vsub.s32 1, %v1915
    %v1917 = vrot.slane %v1908, %v1916
    %v1918 = vlaneseq
    %v1919 = vshrl.u32 %v1918, 7
    %v1920 = vsub.s32 2, %v1919
    %v1921 = vrot.slane %v1908, %v1920
    %v1922 = vlaneseq
    %v1923 = vshrl.u32 %v1922, 7
    %v1924 = vsub.s32 3, %v1923
    %v1925 = vrot.slane %v1908, %v1924
    %v1926 = vlaneseq
    %v1927 = vshrl.u32 %v1926, 7
    %v1928 = vsub.s32 4, %v1927
    %v1929 = vrot.slane %v1908, %v1928
    %v1930 = vlaneseq
    %v1931 = vshrl.u32 %v1930, 7
    %v1932 = vsub.s32 5, %v1931
    %v1933 = vrot.slane %v1908, %v1932
    %v1934 = vlaneseq
    %v1935 = vshrl.u32 %v1934, 7
    %v1936 = vsub.s32 6, %v1935
    %v1937 = vrot.slane %v1908, %v1936
    %1945 = vmatprep.subr.mxu0 %v1461
    %1946 = vmatpush1.msra.mxu0 %v1460
    %1947 = vmatprep.subr.mxu0 %v1468
    %1948 = vmatpush1.msra.mxu0 %v1467
    %1949 = vmatprep.subr.mxu0 %v1475
    %1950 = vmatpush1.msra.mxu0 %v1474
    %1951 = vmatprep.subr.mxu0 %v1482
    %1952 = vmatpush1.msra.mxu0 %v1481
    %1953 = vmatprep.subr.mxu0 %v1489
    %1954 = vmatpush1.msra.mxu0 %v1488
    %1955 = vmatprep.subr.mxu0 %v1496
    %1956 = vmatpush1.msra.mxu0 %v1495
    %1957 = vmatprep.subr.mxu0 %v1503
    %1958 = vmatpush1.msra.mxu0 %v1502
    %1959 = vmatprep.subr.mxu0 %v1510
    %1960 = vmatpush1.msra.mxu0 %v1509
    %1961 = vmatprep.subr.mxu0 %v1517
    %1962 = vmatpush1.msra.mxu0 %v1516
    %1963 = vmatprep.subr.mxu0 %v1524
    %1964 = vmatpush1.msra.mxu0 %v1523
    %1965 = vmatprep.subr.mxu0 %v1531
    %1966 = vmatpush1.msra.mxu0 %v1530
    %1967 = vmatprep.subr.mxu0 %v1538
    %1968 = vmatpush1.msra.mxu0 %v1537
    %1969 = vmatprep.subr.mxu0 %v1545
    %1970 = vmatpush1.msra.mxu0 %v1544
    %1971 = vmatprep.subr.mxu0 %v1552
    %1972 = vmatpush1.msra.mxu0 %v1551
    %1973 = vmatprep.subr.mxu0 %v1559
    %1974 = vmatpush1.msra.mxu0 %v1558
    %1975 = vmatprep.subr.mxu0 %v1566
    %1976 = vmatpush1.msra.mxu0 %v1565
    %1977 = vmatprep.subr.mxu0 %v1573
    %1978 = vmatpush1.msra.mxu0 %v1572
    %1979 = vmatprep.subr.mxu0 %v1580
    %1980 = vmatpush1.msra.mxu0 %v1579
    %1981 = vmatprep.subr.mxu0 %v1587
    %1982 = vmatpush1.msra.mxu0 %v1586
    %1983 = vmatprep.subr.mxu0 %v1594
    %1984 = vmatpush1.msra.mxu0 %v1593
    %1985 = vmatprep.subr.mxu0 %v1601
    %1986 = vmatpush1.msra.mxu0 %v1600
    %1987 = vmatprep.subr.mxu0 %v1608
    %1988 = vmatpush1.msra.mxu0 %v1607
    %1989 = vmatprep.subr.mxu0 %v1615
    %1990 = vmatpush1.msra.mxu0 %v1614
    %1991 = vmatprep.subr.mxu0 %v1622
    %1992 = vmatpush1.msra.mxu0 %v1621
    %1993 = vmatprep.subr.mxu0 %v1629
    %1994 = vmatpush1.msra.mxu0 %v1628
    %1995 = vmatprep.subr.mxu0 %v1636
    %1996 = vmatpush1.msra.mxu0 %v1635
    %1997 = vmatprep.subr.mxu0 %v1643
    %1998 = vmatpush1.msra.mxu0 %v1642
    %1999 = vmatprep.subr.mxu0 %v1650
    %2000 = vmatpush1.msra.mxu0 %v1649
    %2001 = vmatprep.subr.mxu0 %v1657
    %2002 = vmatpush1.msra.mxu0 %v1656
    %2003 = vmatprep.subr.mxu0 %v1664
    %2004 = vmatpush1.msra.mxu0 %v1663
    %2005 = vmatprep.subr.mxu0 %v1671
    %2006 = vmatpush1.msra.mxu0 %v1670
    %2007 = vmatprep.subr.mxu0 %v1678
    %2008 = vmatpush1.msra.mxu0 %v1677
    %2009 = vmatprep.mubr.f32.mxu0 %v1457
    %2010 = vmatmul.mubr.f32.gmra.mrb[0].mxu0 %v1456
    %v2011 = vpop.f32.mrb[0].mxu0
    %v2012 = vadd.f32 %v1913, %v2011
    %v2013 = vpop.f32.mrb[0].mxu0
    %v2014 = vadd.f32 %v1917, %v2013
    %2015 = vdwg.mxu0
    %2016 = vmatprep.subr.mxu0 %v1685
    %2017 = vmatpush1.msra.mxu0 %v1684
    %2018 = vmatprep.subr.mxu0 %v1692
    %2019 = vmatpush1.msra.mxu0 %v1691
    %2020 = vmatprep.subr.mxu0 %v1699
    %2021 = vmatpush1.msra.mxu0 %v1698
    %2022 = vmatprep.subr.mxu0 %v1706
    %2023 = vmatpush1.msra.mxu0 %v1705
    %2024 = vmatprep.subr.mxu0 %v1713
    %2025 = vmatpush1.msra.mxu0 %v1712
    %2026 = vmatprep.subr.mxu0 %v1720
    %2027 = vmatpush1.msra.mxu0 %v1719
    %2028 = vmatprep.subr.mxu0 %v1727
    %2029 = vmatpush1.msra.mxu0 %v1726
    %2030 = vmatprep.subr.mxu0 %v1734
    %2031 = vmatpush1.msra.mxu0 %v1733
    %2032 = vmatprep.subr.mxu0 %v1741
    %2033 = vmatpush1.msra.mxu0 %v1740
    %2034 = vmatprep.subr.mxu0 %v1748
    %2035 = vmatpush1.msra.mxu0 %v1747
    %2036 = vmatprep.subr.mxu0 %v1755
    %2037 = vmatpush1.msra.mxu0 %v1754
    %2038 = vmatprep.subr.mxu0 %v1762
    %2039 = vmatpush1.msra.mxu0 %v1761
    %2040 = vmatprep.subr.mxu0 %v1769
    %2041 = vmatpush1.msra.mxu0 %v1768
    %2042 = vmatprep.subr.mxu0 %v1776
    %2043 = vmatpush1.msra.mxu0 %v1775
    %2044 = vmatprep.subr.mxu0 %v1783
    %2045 = vmatpush1.msra.mxu0 %v1782
    %2046 = vmatprep.subr.mxu0 %v1790
    %2047 = vmatpush1.msra.mxu0 %v1789
    %2048 = vmatprep.subr.mxu0 %v1797
    %2049 = vmatpush1.msra.mxu0 %v1796
    %2050 = vmatprep.subr.mxu0 %v1804
    %2051 = vmatpush1.msra.mxu0 %v1803
    %2052 = vmatprep.subr.mxu0 %v1811
    %2053 = vmatpush1.msra.mxu0 %v1810
    %2054 = vmatprep.subr.mxu0 %v1818
    %2055 = vmatpush1.msra.mxu0 %v1817
    %2056 = vmatprep.subr.mxu0 %v1825
    %2057 = vmatpush1.msra.mxu0 %v1824
    %2058 = vmatprep.subr.mxu0 %v1832
    %2059 = vmatpush1.msra.mxu0 %v1831
    %2060 = vmatprep.subr.mxu0 %v1839
    %2061 = vmatpush1.msra.mxu0 %v1838
    %2062 = vmatprep.subr.mxu0 %v1846
    %2063 = vmatpush1.msra.mxu0 %v1845
    %2064 = vmatprep.subr.mxu0 %v1853
    %2065 = vmatpush1.msra.mxu0 %v1852
    %2066 = vmatprep.subr.mxu0 %v1860
    %2067 = vmatpush1.msra.mxu0 %v1859
    %2068 = vmatprep.subr.mxu0 %v1867
    %2069 = vmatpush1.msra.mxu0 %v1866
    %2070 = vmatprep.subr.mxu0 %v1874
    %2071 = vmatpush1.msra.mxu0 %v1873
    %2072 = vmatprep.subr.mxu0 %v1881
    %2073 = vmatpush1.msra.mxu0 %v1880
    %2074 = vmatprep.subr.mxu0 %v1888
    %2075 = vmatpush1.msra.mxu0 %v1887
    %2076 = vmatprep.subr.mxu0 %v1895
    %2077 = vmatpush1.msra.mxu0 %v1894
    %2078 = vmatprep.subr.mxu0 %v1902
    %2079 = vmatpush1.msra.mxu0 %v1901
    %2080 = vmatprep.mubr.f32.mxu0 %v1459
    %2081 = vmatmul.mubr.f32.gmra.mrb[0].mxu0 %v1458
    %v2082 = vpop.f32.mrb[0].mxu0
    %v2083 = vadd.f32 %v2012, %v2082
    %v2084 = vpop.f32.mrb[0].mxu0
    %v2085 = vadd.f32 %v2014, %v2084
    %2086 = vdwg.mxu0
    %2087 = vmatprep.subr.mxu0 %v1463
    %2088 = vmatpush1.msra.mxu0 %v1462
    %2089 = vmatprep.subr.mxu0 %v1470
    %2090 = vmatpush1.msra.mxu0 %v1469
    %2091 = vmatprep.subr.mxu0 %v1477
    %2092 = vmatpush1.msra.mxu0 %v1476
    %2093 = vmatprep.subr.mxu0 %v1484
    %2094 = vmatpush1.msra.mxu0 %v1483
    %2095 = vmatprep.subr.mxu0 %v1491
    %2096 = vmatpush1.msra.mxu0 %v1490
    %2097 = vmatprep.subr.mxu0 %v1498
    %2098 = vmatpush1.msra.mxu0 %v1497
    %2099 = vmatprep.subr.mxu0 %v1505
    %2100 = vmatpush1.msra.mxu0 %v1504
    %2101 = vmatprep.subr.mxu0 %v1512
    %2102 = vmatpush1.msra.mxu0 %v1511
    %2103 = vmatprep.subr.mxu0 %v1519
    %2104 = vmatpush1.msra.mxu0 %v1518
    %2105 = vmatprep.subr.mxu0 %v1526
    %2106 = vmatpush1.msra.mxu0 %v1525
    %2107 = vmatprep.subr.mxu0 %v1533
    %2108 = vmatpush1.msra.mxu0 %v1532
    %2109 = vmatprep.subr.mxu0 %v1540
    %2110 = vmatpush1.msra.mxu0 %v1539
    %2111 = vmatprep.subr.mxu0 %v1547
    %2112 = vmatpush1.msra.mxu0 %v1546
    %2113 = vmatprep.subr.mxu0 %v1554
    %2114 = vmatpush1.msra.mxu0 %v1553
    %2115 = vmatprep.subr.mxu0 %v1561
    %2116 = vmatpush1.msra.mxu0 %v1560
    %2117 = vmatprep.subr.mxu0 %v1568
    %2118 = vmatpush1.msra.mxu0 %v1567
    %2119 = vmatprep.subr.mxu0 %v1575
    %2120 = vmatpush1.msra.mxu0 %v1574
    %2121 = vmatprep.subr.mxu0 %v1582
    %2122 = vmatpush1.msra.mxu0 %v1581
    %2123 = vmatprep.subr.mxu0 %v1589
    %2124 = vmatpush1.msra.mxu0 %v1588
    %2125 = vmatprep.subr.mxu0 %v1596
    %2126 = vmatpush1.msra.mxu0 %v1595
    %2127 = vmatprep.subr.mxu0 %v1603
    %2128 = vmatpush1.msra.mxu0 %v1602
    %2129 = vmatprep.subr.mxu0 %v1610
    %2130 = vmatpush1.msra.mxu0 %v1609
    %2131 = vmatprep.subr.mxu0 %v1617
    %2132 = vmatpush1.msra.mxu0 %v1616
    %2133 = vmatprep.subr.mxu0 %v1624
    %2134 = vmatpush1.msra.mxu0 %v1623
    %2135 = vmatprep.subr.mxu0 %v1631
    %2136 = vmatpush1.msra.mxu0 %v1630
    %2137 = vmatprep.subr.mxu0 %v1638
    %2138 = vmatpush1.msra.mxu0 %v1637
    %2139 = vmatprep.subr.mxu0 %v1645
    %2140 = vmatpush1.msra.mxu0 %v1644
    %2141 = vmatprep.subr.mxu0 %v1652
    %2142 = vmatpush1.msra.mxu0 %v1651
    %2143 = vmatprep.subr.mxu0 %v1659
    %2144 = vmatpush1.msra.mxu0 %v1658
    %2145 = vmatprep.subr.mxu0 %v1666
    %2146 = vmatpush1.msra.mxu0 %v1665
    %2147 = vmatprep.subr.mxu0 %v1673
    %2148 = vmatpush1.msra.mxu0 %v1672
    %2149 = vmatprep.subr.mxu0 %v1680
    %2150 = vmatpush1.msra.mxu0 %v1679
    %2151 = vmatprep.mubr.f32.mxu0 %v1457
    %2152 = vmatmul.mubr.f32.gmra.mrb[0].mxu0 %v1456
    %v2153 = vpop.f32.mrb[0].mxu0
    %v2154 = vadd.f32 %v1921, %v2153
    %v2155 = vpop.f32.mrb[0].mxu0
    %v2156 = vadd.f32 %v1925, %v2155
    %2157 = vdwg.mxu0
    %2158 = vmatprep.subr.mxu0 %v1687
    %2159 = vmatpush1.msra.mxu0 %v1686
    %2160 = vmatprep.subr.mxu0 %v1694
    %2161 = vmatpush1.msra.mxu0 %v1693
    %2162 = vmatprep.subr.mxu0 %v1701
    %2163 = vmatpush1.msra.mxu0 %v1700
    %2164 = vmatprep.subr.mxu0 %v1708
    %2165 = vmatpush1.msra.mxu0 %v1707
    %2166 = vmatprep.subr.mxu0 %v1715
    %2167 = vmatpush1.msra.mxu0 %v1714
    %2168 = vmatprep.subr.mxu0 %v1722
    %2169 = vmatpush1.msra.mxu0 %v1721
    %2170 = vmatprep.subr.mxu0 %v1729
    %2171 = vmatpush1.msra.mxu0 %v1728
    %2172 = vmatprep.subr.mxu0 %v1736
    %2173 = vmatpush1.msra.mxu0 %v1735
    %2174 = vmatprep.subr.mxu0 %v1743
    %2175 = vmatpush1.msra.mxu0 %v1742
    %2176 = vmatprep.subr.mxu0 %v1750
    %2177 = vmatpush1.msra.mxu0 %v1749
    %2178 = vmatprep.subr.mxu0 %v1757
    %2179 = vmatpush1.msra.mxu0 %v1756
    %2180 = vmatprep.subr.mxu0 %v1764
    %2181 = vmatpush1.msra.mxu0 %v1763
    %2182 = vmatprep.subr.mxu0 %v1771
    %2183 = vmatpush1.msra.mxu0 %v1770
    %2184 = vmatprep.subr.mxu0 %v1778
    %2185 = vmatpush1.msra.mxu0 %v1777
    %2186 = vmatprep.subr.mxu0 %v1785
    %2187 = vmatpush1.msra.mxu0 %v1784
    %2188 = vmatprep.subr.mxu0 %v1792
    %2189 = vmatpush1.msra.mxu0 %v1791
    %2190 = vmatprep.subr.mxu0 %v1799
    %2191 = vmatpush1.msra.mxu0 %v1798
    %2192 = vmatprep.subr.mxu0 %v1806
    %2193 = vmatpush1.msra.mxu0 %v1805
    %2194 = vmatprep.subr.mxu0 %v1813
    %2195 = vmatpush1.msra.mxu0 %v1812
    %2196 = vmatprep.subr.mxu0 %v1820
    %2197 = vmatpush1.msra.mxu0 %v1819
    %2198 = vmatprep.subr.mxu0 %v1827
    %2199 = vmatpush1.msra.mxu0 %v1826
    %2200 = vmatprep.subr.mxu0 %v1834
    %2201 = vmatpush1.msra.mxu0 %v1833
    %2202 = vmatprep.subr.mxu0 %v1841
    %2203 = vmatpush1.msra.mxu0 %v1840
    %2204 = vmatprep.subr.mxu0 %v1848
    %2205 = vmatpush1.msra.mxu0 %v1847
    %2206 = vmatprep.subr.mxu0 %v1855
    %2207 = vmatpush1.msra.mxu0 %v1854
    %2208 = vmatprep.subr.mxu0 %v1862
    %2209 = vmatpush1.msra.mxu0 %v1861
    %2210 = vmatprep.subr.mxu0 %v1869
    %2211 = vmatpush1.msra.mxu0 %v1868
    %2212 = vmatprep.subr.mxu0 %v1876
    %2213 = vmatpush1.msra.mxu0 %v1875
    %2214 = vmatprep.subr.mxu0 %v1883
    %2215 = vmatpush1.msra.mxu0 %v1882
    %2216 = vmatprep.subr.mxu0 %v1890
    %2217 = vmatpush1.msra.mxu0 %v1889
    %2218 = vmatprep.subr.mxu0 %v1897
    %2219 = vmatpush1.msra.mxu0 %v1896
    %2220 = vmatprep.subr.mxu0 %v1904
    %2221 = vmatpush1.msra.mxu0 %v1903
    %2222 = vmatprep.mubr.f32.mxu0 %v1459
    %2223 = vmatmul.mubr.f32.gmra.mrb[0].mxu0 %v1458
    %v2224 = vpop.f32.mrb[0].mxu0
    %v2225 = vadd.f32 %v2154, %v2224
    %v2226 = vpop.f32.mrb[0].mxu0
    %v2227 = vadd.f32 %v2156, %v2226
    %2228 = vdwg.mxu0
    %2229 = vmatprep.subr.mxu0 %v1465
    %2230 = vmatpush1.msra.mxu0 %v1464
    %2231 = vmatprep.subr.mxu0 %v1472
    %2232 = vmatpush1.msra.mxu0 %v1471
    %2233 = vmatprep.subr.mxu0 %v1479
    %2234 = vmatpush1.msra.mxu0 %v1478
    %2235 = vmatprep.subr.mxu0 %v1486
    %2236 = vmatpush1.msra.mxu0 %v1485
    %2237 = vmatprep.subr.mxu0 %v1493
    %2238 = vmatpush1.msra.mxu0 %v1492
    %2239 = vmatprep.subr.mxu0 %v1500
    %2240 = vmatpush1.msra.mxu0 %v1499
    %2241 = vmatprep.subr.mxu0 %v1507
    %2242 = vmatpush1.msra.mxu0 %v1506
    %2243 = vmatprep.subr.mxu0 %v1514
    %2244 = vmatpush1.msra.mxu0 %v1513
    %2245 = vmatprep.subr.mxu0 %v1521
    %2246 = vmatpush1.msra.mxu0 %v1520
    %2247 = vmatprep.subr.mxu0 %v1528
    %2248 = vmatpush1.msra.mxu0 %v1527
    %2249 = vmatprep.subr.mxu0 %v1535
    %2250 = vmatpush1.msra.mxu0 %v1534
    %2251 = vmatprep.subr.mxu0 %v1542
    %2252 = vmatpush1.msra.mxu0 %v1541
    %2253 = vmatprep.subr.mxu0 %v1549
    %2254 = vmatpush1.msra.mxu0 %v1548
    %2255 = vmatprep.subr.mxu0 %v1556
    %2256 = vmatpush1.msra.mxu0 %v1555
    %2257 = vmatprep.subr.mxu0 %v1563
    %2258 = vmatpush1.msra.mxu0 %v1562
    %2259 = vmatprep.subr.mxu0 %v1570
    %2260 = vmatpush1.msra.mxu0 %v1569
    %2261 = vmatprep.subr.mxu0 %v1577
    %2262 = vmatpush1.msra.mxu0 %v1576
    %2263 = vmatprep.subr.mxu0 %v1584
    %2264 = vmatpush1.msra.mxu0 %v1583
    %2265 = vmatprep.subr.mxu0 %v1591
    %2266 = vmatpush1.msra.mxu0 %v1590
    %2267 = vmatprep.subr.mxu0 %v1598
    %2268 = vmatpush1.msra.mxu0 %v1597
    %2269 = vmatprep.subr.mxu0 %v1605
    %2270 = vmatpush1.msra.mxu0 %v1604
    %2271 = vmatprep.subr.mxu0 %v1612
    %2272 = vmatpush1.msra.mxu0 %v1611
    %2273 = vmatprep.subr.mxu0 %v1619
    %2274 = vmatpush1.msra.mxu0 %v1618
    %2275 = vmatprep.subr.mxu0 %v1626
    %2276 = vmatpush1.msra.mxu0 %v1625
    %2277 = vmatprep.subr.mxu0 %v1633
    %2278 = vmatpush1.msra.mxu0 %v1632
    %2279 = vmatprep.subr.mxu0 %v1640
    %2280 = vmatpush1.msra.mxu0 %v1639
    %2281 = vmatprep.subr.mxu0 %v1647
    %2282 = vmatpush1.msra.mxu0 %v1646
    %2283 = vmatprep.subr.mxu0 %v1654
    %2284 = vmatpush1.msra.mxu0 %v1653
    %2285 = vmatprep.subr.mxu0 %v1661
    %2286 = vmatpush1.msra.mxu0 %v1660
    %2287 = vmatprep.subr.mxu0 %v1668
    %2288 = vmatpush1.msra.mxu0 %v1667
    %2289 = vmatprep.subr.mxu0 %v1675
    %2290 = vmatpush1.msra.mxu0 %v1674
    %2291 = vmatprep.subr.mxu0 %v1682
    %2292 = vmatpush1.msra.mxu0 %v1681
    %2293 = vmatprep.mubr.f32.mxu0 %v1457
    %2294 = vmatmul.mubr.f32.gmra.mrb[0].mxu0 %v1456
    %v2295 = vpop.f32.mrb[0].mxu0
    %v2296 = vadd.f32 %v1929, %v2295
    %v2297 = vpop.f32.mrb[0].mxu0
    %v2298 = vadd.f32 %v1933, %v2297
    %2299 = vdwg.mxu0
    %2300 = vmatprep.subr.mxu0 %v1689
    %2301 = vmatpush1.msra.mxu0 %v1688
    %2302 = vmatprep.subr.mxu0 %v1696
    %2303 = vmatpush1.msra.mxu0 %v1695
    %2304 = vmatprep.subr.mxu0 %v1703
    %2305 = vmatpush1.msra.mxu0 %v1702
    %2306 = vmatprep.subr.mxu0 %v1710
    %2307 = vmatpush1.msra.mxu0 %v1709
    %2308 = vmatprep.subr.mxu0 %v1717
    %2309 = vmatpush1.msra.mxu0 %v1716
    %2310 = vmatprep.subr.mxu0 %v1724
    %2311 = vmatpush1.msra.mxu0 %v1723
    %2312 = vmatprep.subr.mxu0 %v1731
    %2313 = vmatpush1.msra.mxu0 %v1730
    %2314 = vmatprep.subr.mxu0 %v1738
    %2315 = vmatpush1.msra.mxu0 %v1737
    %2316 = vmatprep.subr.mxu0 %v1745
    %2317 = vmatpush1.msra.mxu0 %v1744
    %2318 = vmatprep.subr.mxu0 %v1752
    %2319 = vmatpush1.msra.mxu0 %v1751
    %2320 = vmatprep.subr.mxu0 %v1759
    %2321 = vmatpush1.msra.mxu0 %v1758
    %2322 = vmatprep.subr.mxu0 %v1766
    %2323 = vmatpush1.msra.mxu0 %v1765
    %2324 = vmatprep.subr.mxu0 %v1773
    %2325 = vmatpush1.msra.mxu0 %v1772
    %2326 = vmatprep.subr.mxu0 %v1780
    %2327 = vmatpush1.msra.mxu0 %v1779
    %2328 = vmatprep.subr.mxu0 %v1787
    %2329 = vmatpush1.msra.mxu0 %v1786
    %2330 = vmatprep.subr.mxu0 %v1794
    %2331 = vmatpush1.msra.mxu0 %v1793
    %2332 = vmatprep.subr.mxu0 %v1801
    %2333 = vmatpush1.msra.mxu0 %v1800
    %2334 = vmatprep.subr.mxu0 %v1808
    %2335 = vmatpush1.msra.mxu0 %v1807
    %2336 = vmatprep.subr.mxu0 %v1815
    %2337 = vmatpush1.msra.mxu0 %v1814
    %2338 = vmatprep.subr.mxu0 %v1822
    %2339 = vmatpush1.msra.mxu0 %v1821
    %2340 = vmatprep.subr.mxu0 %v1829
    %2341 = vmatpush1.msra.mxu0 %v1828
    %2342 = vmatprep.subr.mxu0 %v1836
    %2343 = vmatpush1.msra.mxu0 %v1835
    %2344 = vmatprep.subr.mxu0 %v1843
    %2345 = vmatpush1.msra.mxu0 %v1842
    %2346 = vmatprep.subr.mxu0 %v1850
    %2347 = vmatpush1.msra.mxu0 %v1849
    %2348 = vmatprep.subr.mxu0 %v1857
    %2349 = vmatpush1.msra.mxu0 %v1856
    %2350 = vmatprep.subr.mxu0 %v1864
    %2351 = vmatpush1.msra.mxu0 %v1863
    %2352 = vmatprep.subr.mxu0 %v1871
    %2353 = vmatpush1.msra.mxu0 %v1870
    %2354 = vmatprep.subr.mxu0 %v1878
    %2355 = vmatpush1.msra.mxu0 %v1877
    %2356 = vmatprep.subr.mxu0 %v1885
    %2357 = vmatpush1.msra.mxu0 %v1884
    %2358 = vmatprep.subr.mxu0 %v1892
    %2359 = vmatpush1.msra.mxu0 %v1891
    %2360 = vmatprep.subr.mxu0 %v1899
    %2361 = vmatpush1.msra.mxu0 %v1898
    %2362 = vmatprep.subr.mxu0 %v1906
    %2363 = vmatpush1.msra.mxu0 %v1905
    %2364 = vmatprep.mubr.f32.mxu0 %v1459
    %2365 = vmatmul.mubr.f32.gmra.mrb[0].mxu0 %v1458
    %v2366 = vpop.f32.mrb[0].mxu0
    %v2367 = vadd.f32 %v2296, %v2366
    %v2368 = vpop.f32.mrb[0].mxu0
    %v2369 = vadd.f32 %v2298, %v2368
    %2370 = vdwg.mxu0
    %2371 = vmatprep.subr.mxu0 0.0
    %2372 = vmatpush1.msra.mxu0 %v1466
    %2373 = vmatprep.subr.mxu0 0.0
    %2374 = vmatpush1.msra.mxu0 %v1473
    %2375 = vmatprep.subr.mxu0 0.0
    %2376 = vmatpush1.msra.mxu0 %v1480
    %2377 = vmatprep.subr.mxu0 0.0
    %2378 = vmatpush1.msra.mxu0 %v1487
    %2379 = vmatprep.subr.mxu0 0.0
    %2380 = vmatpush1.msra.mxu0 %v1494
    %2381 = vmatprep.subr.mxu0 0.0
    %2382 = vmatpush1.msra.mxu0 %v1501
    %2383 = vmatprep.subr.mxu0 0.0
    %2384 = vmatpush1.msra.mxu0 %v1508
    %2385 = vmatprep.subr.mxu0 0.0
    %2386 = vmatpush1.msra.mxu0 %v1515
    %2387 = vmatprep.subr.mxu0 0.0
    %2388 = vmatpush1.msra.mxu0 %v1522
    %2389 = vmatprep.subr.mxu0 0.0
    %2390 = vmatpush1.msra.mxu0 %v1529
    %2391 = vmatprep.subr.mxu0 0.0
    %2392 = vmatpush1.msra.mxu0 %v1536
    %2393 = vmatprep.subr.mxu0 0.0
    %2394 = vmatpush1.msra.mxu0 %v1543
    %2395 = vmatprep.subr.mxu0 0.0
    %2396 = vmatpush1.msra.mxu0 %v1550
    %2397 = vmatprep.subr.mxu0 0.0
    %2398 = vmatpush1.msra.mxu0 %v1557
    %2399 = vmatprep.subr.mxu0 0.0
    %2400 = vmatpush1.msra.mxu0 %v1564
    %2401 = vmatprep.subr.mxu0 0.0
    %2402 = vmatpush1.msra.mxu0 %v1571
    %2403 = vmatprep.subr.mxu0 0.0
    %2404 = vmatpush1.msra.mxu0 %v1578
    %2405 = vmatprep.subr.mxu0 0.0
    %2406 = vmatpush1.msra.mxu0 %v1585
    %2407 = vmatprep.subr.mxu0 0.0
    %2408 = vmatpush1.msra.mxu0 %v1592
    %2409 = vmatprep.subr.mxu0 0.0
    %2410 = vmatpush1.msra.mxu0 %v1599
    %2411 = vmatprep.subr.mxu0 0.0
    %2412 = vmatpush1.msra.mxu0 %v1606
    %2413 = vmatprep.subr.mxu0 0.0
    %2414 = vmatpush1.msra.mxu0 %v1613
    %2415 = vmatprep.subr.mxu0 0.0
    %2416 = vmatpush1.msra.mxu0 %v1620
    %2417 = vmatprep.subr.mxu0 0.0
    %2418 = vmatpush1.msra.mxu0 %v1627
    %2419 = vmatprep.subr.mxu0 0.0
    %2420 = vmatpush1.msra.mxu0 %v1634
    %2421 = vmatprep.subr.mxu0 0.0
    %2422 = vmatpush1.msra.mxu0 %v1641
    %2423 = vmatprep.subr.mxu0 0.0
    %2424 = vmatpush1.msra.mxu0 %v1648
    %2425 = vmatprep.subr.mxu0 0.0
    %2426 = vmatpush1.msra.mxu0 %v1655
    %2427 = vmatprep.subr.mxu0 0.0
    %2428 = vmatpush1.msra.mxu0 %v1662
    %2429 = vmatprep.subr.mxu0 0.0
    %2430 = vmatpush1.msra.mxu0 %v1669
    %2431 = vmatprep.subr.mxu0 0.0
    %2432 = vmatpush1.msra.mxu0 %v1676
    %2433 = vmatprep.subr.mxu0 0.0
    %2434 = vmatpush1.msra.mxu0 %v1683
    %2435 = vmatprep.mubr.f32.mxu0 %v1457
    %2436 = vmatmul.mubr.f32.gmra.mrb[0].mxu0 %v1456
    %v2437 = vpop.f32.mrb[0].mxu0
    %v2438 = vadd.f32 %v1937, %v2437
    %v2439 = vpop.f32.mrb[0].mxu0
    %2440 = vdwg.mxu0
    %2441 = vmatprep.subr.mxu0 0.0
    %2442 = vmatpush1.msra.mxu0 %v1690
    %2443 = vmatprep.subr.mxu0 0.0
    %2444 = vmatpush1.msra.mxu0 %v1697
    %2445 = vmatprep.subr.mxu0 0.0
    %2446 = vmatpush1.msra.mxu0 %v1704
    %2447 = vmatprep.subr.mxu0 0.0
    %2448 = vmatpush1.msra.mxu0 %v1711
    %2449 = vmatprep.subr.mxu0 0.0
    %2450 = vmatpush1.msra.mxu0 %v1718
    %2451 = vmatprep.subr.mxu0 0.0
    %2452 = vmatpush1.msra.mxu0 %v1725
    %2453 = vmatprep.subr.mxu0 0.0
    %2454 = vmatpush1.msra.mxu0 %v1732
    %2455 = vmatprep.subr.mxu0 0.0
    %2456 = vmatpush1.msra.mxu0 %v1739
    %2457 = vmatprep.subr.mxu0 0.0
    %2458 = vmatpush1.msra.mxu0 %v1746
    %2459 = vmatprep.subr.mxu0 0.0
    %2460 = vmatpush1.msra.mxu0 %v1753
    %2461 = vmatprep.subr.mxu0 0.0
    %2462 = vmatpush1.msra.mxu0 %v1760
    %2463 = vmatprep.subr.mxu0 0.0
    %2464 = vmatpush1.msra.mxu0 %v1767
    %2465 = vmatprep.subr.mxu0 0.0
    %2466 = vmatpush1.msra.mxu0 %v1774
    %2467 = vmatprep.subr.mxu0 0.0
    %2468 = vmatpush1.msra.mxu0 %v1781
    %2469 = vmatprep.subr.mxu0 0.0
    %2470 = vmatpush1.msra.mxu0 %v1788
    %2471 = vmatprep.subr.mxu0 0.0
    %2472 = vmatpush1.msra.mxu0 %v1795
    %2473 = vmatprep.subr.mxu0 0.0
    %2474 = vmatpush1.msra.mxu0 %v1802
    %2475 = vmatprep.subr.mxu0 0.0
    %2476 = vmatpush1.msra.mxu0 %v1809
    %2477 = vmatprep.subr.mxu0 0.0
    %2478 = vmatpush1.msra.mxu0 %v1816
    %2479 = vmatprep.subr.mxu0 0.0
    %2480 = vmatpush1.msra.mxu0 %v1823
    %2481 = vmatprep.subr.mxu0 0.0
    %2482 = vmatpush1.msra.mxu0 %v1830
    %2483 = vmatprep.subr.mxu0 0.0
    %2484 = vmatpush1.msra.mxu0 %v1837
    %2485 = vmatprep.subr.mxu0 0.0
    %2486 = vmatpush1.msra.mxu0 %v1844
    %2487 = vmatprep.subr.mxu0 0.0
    %2488 = vmatpush1.msra.mxu0 %v1851
    %2489 = vmatprep.subr.mxu0 0.0
    %2490 = vmatpush1.msra.mxu0 %v1858
    %2491 = vmatprep.subr.mxu0 0.0
    %2492 = vmatpush1.msra.mxu0 %v1865
    %2493 = vmatprep.subr.mxu0 0.0
    %2494 = vmatpush1.msra.mxu0 %v1872
    %2495 = vmatprep.subr.mxu0 0.0
    %2496 = vmatpush1.msra.mxu0 %v1879
    %2497 = vmatprep.subr.mxu0 0.0
    %2498 = vmatpush1.msra.mxu0 %v1886
    %2499 = vmatprep.subr.mxu0 0.0
    %2500 = vmatpush1.msra.mxu0 %v1893
    %2501 = vmatprep.subr.mxu0 0.0
    %2502 = vmatpush1.msra.mxu0 %v1900
    %2503 = vmatprep.subr.mxu0 0.0
    %2504 = vmatpush1.msra.mxu0 %v1907
    %2505 = vmatprep.mubr.f32.mxu0 %v1459
    %2506 = vmatmul.mubr.f32.gmra.mrb[0].mxu0 %v1458
    %v2507 = vpop.f32.mrb[0].mxu0
    %v2508 = vadd.f32 %v2438, %v2507
    %v2509 = vpop.f32.mrb[0].mxu0
    %2510 = vdwg.mxu0
    %v2511 = vxor.u32 %v2083, 2147483648
    %v2512 = vxor.u32 %v2085, 2147483648
    %v2513 = vxor.u32 %v2225, 2147483648
    %v2514 = vxor.u32 %v2227, 2147483648
    %v2515 = vxor.u32 %v2367, 2147483648
    %v2516 = vxor.u32 %v2369, 2147483648
    %v2517 = vxor.u32 %v2508, 2147483648
    %v2518 = vmul.f32 %v2511, 1.442695
    %v2519 = vpow.pop %v2518
    %v2520 = vmul.f32 %v2512, 1.442695
    %v2521 = vpow.pop %v2520
    %v2522 = vmul.f32 %v2513, 1.442695
    %v2523 = vpow.pop %v2522
    %v2524 = vmul.f32 %v2514, 1.442695
    %v2525 = vpow.pop %v2524
    %v2526 = vmul.f32 %v2515, 1.442695
    %v2527 = vpow.pop %v2526
    %v2528 = vmul.f32 %v2516, 1.442695
    %v2529 = vpow.pop %v2528
    %v2530 = vmul.f32 %v2517, 1.442695
    %v2531 = vpow.pop %v2530
    %v2532 = vadd.f32 %v2519, 1.0
    %v2533 = vadd.f32 %v2521, 1.0
    %v2534 = vadd.f32 %v2523, 1.0
    %v2535 = vadd.f32 %v2525, 1.0
    %v2536 = vadd.f32 %v2527, 1.0
    %v2537 = vadd.f32 %v2529, 1.0
    %v2538 = vadd.f32 %v2531, 1.0
    %v2539 = vrcp.pop %v2532
    %v2540 = vmul.f32 1.0, %v2539
    %v2541 = vrcp.pop %v2533
    %v2542 = vmul.f32 1.0, %v2541
    %v2543 = vrcp.pop %v2534
    %v2544 = vmul.f32 1.0, %v2543
    %v2545 = vrcp.pop %v2535
    %v2546 = vmul.f32 1.0, %v2545
    %v2547 = vrcp.pop %v2536
    %v2548 = vmul.f32 1.0, %v2547
    %v2549 = vrcp.pop %v2537
    %v2550 = vmul.f32 1.0, %v2549
    %v2551 = vrcp.pop %v2538
    %v2552 = vmul.f32 1.0, %v2551
    %2553 = vst [vmem:[#allocation2] sm:$0xff] %v2540
    %2554 = vst [vmem:[#allocation2 + $0x8] sm:$0xff] %v2542
    %2555 = vst [vmem:[#allocation2 + $0x10] sm:$0xff] %v2544
    %2556 = vst [vmem:[#allocation2 + $0x18] sm:$0xff] %v2546
    %2557 = vst [vmem:[#allocation2 + $0x20] sm:$0xff] %v2548
    %2558 = vst [vmem:[#allocation2 + $0x28] sm:$0xff] %v2550
    %2559 = vst.msk [vmem:[#allocation2 + $0x30] sm:$0xff] %vm459, %v2552
    %2560 = vst [vmem:[%s11] sm:$0xff] %v1243
    // Predicated region
    $region42: #{vae_forward.1} parent=1 // pred_check
      _
    $region43: #{vae_forward.1} parent=1 // pred_check_branch
      %2562 = sbr.rel (0) target = $region45
    $region44: #{vae_forward.1} parent=1 // pred_region
      %s2564 = ssub.s32 896, 896
      %2565 = vsyncadd [#allocation3], %s2564
      %s2567 = sshll.u32 [#allocation2], 4
      %s2568 = int_to_ptr.vmem [resolvable:$true] %s2567
      %2570 = dma.vmem_to_hbm [thread:$0]  %s2568, 896, %s10, [#allocation3]
    $region45: #{vae_forward.1} parent=1 // pred_fallthru
      _
    // Predicated region
    $region46: #{vae_forward.1} parent=1 // pred_check
      _
    $region47: #{vae_forward.1} parent=1 // pred_check_branch
      %2572 = sbr.rel (0) target = $region49
    $region48: #{vae_forward.1} parent=1 // pred_region
      _
    $region49: #{vae_forward.1} parent=1 // pred_fallthru
      _
    // Predicated region
    $region50: #{vae_forward.1} parent=1 // pred_check
      _
    $region51: #{vae_forward.1} parent=1 // pred_check_branch
      %2574 = sbr.rel (0) target = $region53
    $region52: #{vae_forward.1} parent=1 // pred_region
      %2575 = dma.done [#allocation3], 896
    $region53: #{vae_forward.1} parent=1 // pred_fallthru
      _
    // Predicated region
    $region54: #{vae_forward.1} parent=1 // pred_check
      _
    $region55: #{vae_forward.1} parent=1 // pred_check_branch
      %2577 = sbr.rel (0) target = $region57
    $region56: #{vae_forward.1} parent=1 // pred_region
      _
    $region57: #{vae_forward.1} parent=1 // pred_fallthru
      _
    %2578 = vsyncpa [#allocation3], 1

</llo_original>
